<compile_context>
chip_gen: v5e
topology: v5e:2x2
jax: 0.10.0
libtpu: 0.0.40
codegen_flags: <defaults>
</compile_context>

<pallas_src>
import functools

import numpy as np
import jax
import jax.numpy as jnp
from jax.experimental import pallas as pl
from jax.experimental.pallas import tpu as pltpu


def relative_position_index(window_size):
    """Numpy replication of the PyTorch buffer `relative_position_index`."""
    wd, wh, ww = window_size
    coords = np.stack(
        np.meshgrid(np.arange(wd), np.arange(wh), np.arange(ww), indexing="ij")
    )  # (3, wd, wh, ww)   (torch.meshgrid default is "ij")
    coords_flatten = coords.reshape(3, -1)                                  # (3, N)
    rel = coords_flatten[:, :, None] - coords_flatten[:, None, :]           # (3, N, N)
    rel = rel.transpose(1, 2, 0).copy()                                     # (N, N, 3)
    rel[:, :, 0] += wd - 1
    rel[:, :, 1] += wh - 1
    rel[:, :, 2] += ww - 1
    rel[:, :, 0] *= (2 * wh - 1) * (2 * ww - 1)
    rel[:, :, 1] *= 2 * ww - 1
    return rel.sum(-1)                                                      # (N, N)


def _space_attn_kernel(x_ref, wq_ref, wk_ref, wv_ref, wproj_ref, bproj_ref,
                       bias_ref, mask_hc_ref, mask_jc_ref, o_ref,
                       *, num_heads, matmul_dtype, approx_recip):
    # x_ref block: (WB, N, C); weights / bias / masks are whole-array blocks
    # resident in VMEM (constant index maps).
    WB, N, C = x_ref.shape
    H = num_heads
    J = H * N                      # folded (head, key) axis -> lane-dense scores
    rows = WB * N

    x = x_ref[...].reshape(rows, C).astype(matmul_dtype)

    # ---- q/k/v projections: three separate lane-aligned (C, C) weights ----
    # (softmax scale is pre-folded into w_q; no unaligned qkv column slices).
    q = jnp.dot(x, wq_ref[...], preferred_element_type=jnp.float32)
    k = jnp.dot(x, wk_ref[...], preferred_element_type=jnp.float32)
    v = jnp.dot(x, wv_ref[...], preferred_element_type=jnp.float32)

    qb = q.astype(matmul_dtype).reshape(WB, N, C)
    kb = k.astype(matmul_dtype).reshape(WB, 1, N, C)
    vb = v.astype(matmul_dtype).reshape(WB, 1, N, C)

    # Block-diagonal head expansion via ONE broadcasted multiply with the
    # host-precomputed 0/1 mask (no iota, //, where or broadcast_to; only two
    # matmul-dtype intermediates instead of four f32 ones).
    mask_hc = mask_hc_ref[...][None, :, None, :]           # (1, H, 1, C)
    k_bd = (kb * mask_hc).reshape(WB, J, C)                # (WB, J, C)
    v_bd = (vb * mask_hc).reshape(WB, J, C)

    # scores[w, q, h*N + kk] = <q_h, k_h>; masked terms contribute exact 0, so
    # each (N, H*N) tile is lane-dense and one batched matmul covers all heads.
    s = jnp.einsum("bqc,bjc->bqj", qb, k_bd,
                   preferred_element_type=jnp.float32)     # (WB, N, J) f32
    s = s + bias_ref[...][None]                            # folded rel-pos bias

    # Softmax per (query, head) segment.  Softmax is shift-invariant, so the
    # global row max is a valid stabilizer; per-head exp underflow (possible
    # only with ~80+ logit spread between heads) is caught by the denom clamp.
    m = jnp.max(s, axis=-1, keepdims=True)
    p = jnp.exp((s - m).astype(matmul_dtype))              # bf16 EUP on v6e/v7x

    # Unnormalized PV; each output channel only picks up its own head's keys.
    o = jnp.einsum("bqj,bjc->bqc", p, v_bd,
                   preferred_element_type=jnp.float32)     # (WB, N, C) f32

    # Per-head softmax sums broadcast to their hd channels via one masked
    # matmul; normalize after PV (smaller tensor) with the EUP reciprocal.
    denom = jnp.dot(p.reshape(rows, J), mask_jc_ref[...],
                    preferred_element_type=jnp.float32)    # (rows, C) f32
    denom = jnp.maximum(denom, 1e-30)                      # Inf/NaN guard
    o = o.reshape(rows, C) * pl.reciprocal(denom, approx=approx_recip)

    # ---- output projection (already in (rows, C) head-interleaved layout) ----
    y = jnp.dot(o.astype(matmul_dtype), wproj_ref[...],
                preferred_element_type=jnp.float32)        # (rows, C)
    y = y + bproj_ref[0]
    # TODO(synk): for C < 128 evaluate a lane-dense packed output store
    # (current store uses C of 128 lanes -> masked vst); gate on measurement.
    o_ref[...] = y.reshape(WB, N, C).astype(o_ref.dtype)


def prepare_space_attention_params(w_qkv, w_proj, b_proj, rel_bias, *,
                                   num_heads, scale, matmul_dtype=jnp.bfloat16):
    """Host-side parameter prep.

    w_qkv: (C, 3C) (x @ w_qkv convention, i.e. torch weight transposed),
    w_proj: (C, C), b_proj: (1, C), rel_bias: (H, N, N).
    Folds `scale` into w_q, splits qkv into three lane-aligned (C, C) weights,
    folds the relative-position bias to (N, H*N) and builds the 0/1 head
    masks used for the block-diagonal expansion and the denominator matmul.
    """
    C = w_qkv.shape[0]
    H = num_heads
    hd = C // H
    N = rel_bias.shape[-1]

    w_q = (w_qkv[:, 0 * C:1 * C] * scale).astype(matmul_dtype)
    w_k = w_qkv[:, 1 * C:2 * C].astype(matmul_dtype)
    w_v = w_qkv[:, 2 * C:3 * C].astype(matmul_dtype)

    # bias_folded[q, h*N + k] == rel_bias[h, q, k]   (added to f32 scores)
    bias_folded = jnp.transpose(rel_bias, (1, 0, 2)).reshape(N, H * N)
    bias_folded = bias_folded.astype(jnp.float32)

    # 0/1 masks: mask_hc[h, c] = (head(c) == h);  mask_jc[h*N + n, c] = mask_hc[h, c]
    chead = np.arange(C) // hd
    mask_hc = (np.arange(H)[:, None] == chead[None, :]).astype(np.float32)   # (H, C)
    mask_jc = np.repeat(mask_hc, N, axis=0)                                  # (J, C)

    return dict(
        w_q=w_q, w_k=w_k, w_v=w_v,
        w_proj=jnp.asarray(w_proj, matmul_dtype),
        b_proj=jnp.asarray(b_proj, jnp.float32),
        bias=bias_folded,
        mask_hc=jnp.asarray(mask_hc, matmul_dtype),
        mask_jc=jnp.asarray(mask_jc, matmul_dtype),
    )


def space_attention(x, params, *, num_heads, window_batch=16,
                    matmul_dtype=jnp.bfloat16):
    """x: (B_, N, C) plus params from prepare_space_attention_params.
    Returns (B_, N, C).  Equivalent to SpaceAttention.forward(x, mask=None)."""
    B_, N, C = x.shape
    H = num_heads
    J = H * N

    # ---- derive WB from the device VMEM budget (prevents OOM at real shapes) ----
    try:
        vmem_cap = int(pltpu.get_tpu_info().vmem_capacity_bytes)
    except Exception:
        vmem_cap = 64 * 1024 * 1024        # conservative: v7x per-TC VMEM
    vmem_limit = int(vmem_cap * 0.85)      # scoped-VMEM limit passed to Mosaic
    budget = int(vmem_limit * 0.85)        # headroom for the compiler

    mm = jnp.dtype(matmul_dtype).itemsize
    itemsize = jnp.dtype(x.dtype).itemsize
    per_window = (
        4 * N * C * itemsize               # double-buffered x / out blocks
        + 3 * N * C * (4 + mm)             # q/k/v f32 accum + matmul-dtype copies
        + 2 * J * C * mm                   # block-diagonal k_bd / v_bd
        + N * J * (4 + mm)                 # scores (f32) + exp(p) (matmul dtype)
        + 3 * N * C * 4                    # PV out, denom, normalized o (f32)
    )
    resident = 4 * C * C * mm + (N * J + 2 * C) * 4 + (H + J) * C * mm
    wb_cap = max(1, (budget - resident) // max(per_window, 1))
    WB = int(max(1, min(window_batch, wb_cap, B_)))
    # TODO(synk): for real Video-Swin windows (N ~ 98-392) add a key-axis tile
    # with online-softmax accumulation so WB can stay large within VMEM.

    # ---- balance the grid over 2 TensorCores (v7x megacore; no-op on 1-TC chips) ----
    grid_b = pl.cdiv(B_, WB)
    if grid_b > 1:
        grid_b = 2 * pl.cdiv(grid_b, 2)
        WB = pl.cdiv(B_, grid_b)
        grid_b = pl.cdiv(B_, WB)
    Bp = grid_b * WB
    if Bp != B_:
        # Pad with zero windows; they produce finite values that are sliced off.
        x = jnp.pad(x, ((0, Bp - B_), (0, 0), (0, 0)))

    kernel = functools.partial(
        _space_attn_kernel, num_heads=H, matmul_dtype=matmul_dtype,
        approx_recip=bool(jnp.dtype(matmul_dtype) != jnp.dtype(jnp.float32)))

    out = pl.pallas_call(
        kernel,
        out_shape=jax.ShapeDtypeStruct((Bp, N, C), x.dtype),
        grid_spec=pltpu.PrefetchScalarGridSpec(
            num_scalar_prefetch=0,
            grid=(grid_b,),
            in_specs=[
                pl.BlockSpec((WB, N, C), lambda b: (b, 0, 0)),   # x window batch
                pl.BlockSpec((C, C), lambda b: (0, 0)),          # w_q (scale folded)
                pl.BlockSpec((C, C), lambda b: (0, 0)),          # w_k
                pl.BlockSpec((C, C), lambda b: (0, 0)),          # w_v
                pl.BlockSpec((C, C), lambda b: (0, 0)),          # w_proj
                pl.BlockSpec((1, C), lambda b: (0, 0)),          # b_proj
                pl.BlockSpec((N, J), lambda b: (0, 0)),          # folded rel bias
                pl.BlockSpec((H, C), lambda b: (0, 0)),          # head mask (H, C)
                pl.BlockSpec((J, C), lambda b: (0, 0)),          # head mask (J, C)
            ],
            out_specs=pl.BlockSpec((WB, N, C), lambda b: (b, 0, 0)),
        ),
        compiler_params=pltpu.CompilerParams(
            dimension_semantics=("parallel",),
            vmem_limit_bytes=vmem_limit),
    )(x, params["w_q"], params["w_k"], params["w_v"], params["w_proj"],
      params["b_proj"], params["bias"], params["mask_hc"], params["mask_jc"])
    return out[:B_]


def _reference(x, w_qkv, w_proj, b_proj, rel_bias, *, num_heads, scale):
    """Pure-JAX replica of the PyTorch forward (mask=None)."""
    B_, N, C = x.shape
    hd = C // num_heads
    qkv = x @ w_qkv                                                    # (B_, N, 3C)
    qkv = qkv.reshape(B_, N, 3, num_heads, hd).transpose(2, 0, 3, 1, 4)
    q, k, v = qkv[0], qkv[1], qkv[2]                                   # (B_, H, N, hd)
    attn = (q * scale) @ jnp.swapaxes(k, -2, -1)                       # (B_, H, N, N)
    attn = attn + rel_bias[None]
    attn = jax.nn.softmax(attn, axis=-1)
    out = (attn @ v).transpose(0, 2, 1, 3).reshape(B_, N, C)
    return out @ w_proj + b_proj[0]


if __name__ == "__main__":
    # Small shapes consistent with the module.
    window_size = (2, 4, 4)            # (wd, wh, ww) -> N = 32
    dim = 32
    num_heads = 4
    head_dim = dim // num_heads
    scale = head_dim ** (-0.5)
    B_ = 48                            # number of windows
    N = window_size[0] * window_size[1] * window_size[2]

    key = jax.random.PRNGKey(0)
    k_x, k_tab, k_qkv, k_proj, k_bp = jax.random.split(key, 5)

    x = jax.random.normal(k_x, (B_, N, dim), dtype=jnp.float32)

    # Deterministic parameter init (shapes from __init__).  qkv_bias=False.
    table_len = ((2 * window_size[0] - 1) * (2 * window_size[1] - 1)
                 * (2 * window_size[2] - 1))
    rel_table = 0.02 * jax.random.normal(k_tab, (table_len, num_heads), jnp.float32)
    w_qkv = 0.02 * jax.random.normal(k_qkv, (dim, 3 * dim), jnp.float32)
    w_proj = 0.02 * jax.random.normal(k_proj, (dim, dim), jnp.float32)
    b_proj = 0.02 * jax.random.normal(k_bp, (1, dim), jnp.float32)

    # relative_position_bias: table[index[:N,:N].reshape(-1)] -> (N,N,H) -> (H,N,N)
    rel_idx = relative_position_index(window_size)                     # (N, N) int
    rel_bias = rel_table[jnp.asarray(rel_idx.reshape(-1))]             # (N*N, H)
    rel_bias = rel_bias.reshape(N, N, num_heads).transpose(2, 0, 1)    # (H, N, N)

    ref = _reference(x, w_qkv, w_proj, b_proj, rel_bias,
                     num_heads=num_heads, scale=scale)

    # Exact f32 MXU-operand path (exact reciprocal, f32 exp).
    params32 = prepare_space_attention_params(
        w_qkv, w_proj, b_proj, rel_bias,
        num_heads=num_heads, scale=scale, matmul_dtype=jnp.float32)
    out = space_attention(x, params32, num_heads=num_heads,
                          window_batch=16, matmul_dtype=jnp.float32)
    out = jax.block_until_ready(out)
    np.testing.assert_allclose(np.asarray(out), np.asarray(ref),
                               rtol=2e-4, atol=2e-5)

    # bf16 fast path (default): bf16 operands on ALL matmuls + bf16 exp,
    # f32 accumulation and f32 softmax statistics.
    params16 = prepare_space_attention_params(
        w_qkv, w_proj, b_proj, rel_bias,
        num_heads=num_heads, scale=scale, matmul_dtype=jnp.bfloat16)
    out_bf16 = space_attention(x, params16, num_heads=num_heads,
                               window_batch=16, matmul_dtype=jnp.bfloat16)
    out_bf16 = jax.block_until_ready(out_bf16)
    np.testing.assert_allclose(np.asarray(out_bf16), np.asarray(ref),
                               rtol=5e-2, atol=5e-3)

    print("KERNEL_OK")
</pallas_src>

<mosaic_0001>
module attributes {stable_mosaic.version = 11 : i64} {
  func.func @_space_attn_kernel(%arg0: i32, %arg1: memref<12x32x32xf32, #tpu.memory_space<vmem>>, %arg2: memref<32x32xf32, #tpu.memory_space<vmem>>, %arg3: memref<32x32xf32, #tpu.memory_space<vmem>>, %arg4: memref<32x32xf32, #tpu.memory_space<vmem>>, %arg5: memref<32x32xf32, #tpu.memory_space<vmem>>, %arg6: memref<1x32xf32, #tpu.memory_space<vmem>>, %arg7: memref<32x128xf32, #tpu.memory_space<vmem>>, %arg8: memref<4x32xf32, #tpu.memory_space<vmem>>, %arg9: memref<128x32xf32, #tpu.memory_space<vmem>>, %arg10: memref<12x32x32xf32, #tpu.memory_space<vmem>>) attributes {dimension_semantics = [#tpu.dimension_semantics<parallel>], iteration_bounds = array<i64: 4>, scalar_prefetch = 0 : i64, scratch_operands = 0 : i64, tpu.core_type = #tpu.core_type<tc>, window_params = [{transform_indices = @transform_0, window_bounds = array<i64: 12, 32, 32>}, {pipeline_mode = #tpu.pipeline_mode<synchronous>, transform_indices = @transform_1, window_bounds = array<i64: 32, 32>}, {pipeline_mode = #tpu.pipeline_mode<synchronous>, transform_indices = @transform_2, window_bounds = array<i64: 32, 32>}, {pipeline_mode = #tpu.pipeline_mode<synchronous>, transform_indices = @transform_3, window_bounds = array<i64: 32, 32>}, {pipeline_mode = #tpu.pipeline_mode<synchronous>, transform_indices = @transform_4, window_bounds = array<i64: 32, 32>}, {pipeline_mode = #tpu.pipeline_mode<synchronous>, transform_indices = @transform_5, window_bounds = array<i64: 1, 32>}, {pipeline_mode = #tpu.pipeline_mode<synchronous>, transform_indices = @transform_6, window_bounds = array<i64: 32, 128>}, {pipeline_mode = #tpu.pipeline_mode<synchronous>, transform_indices = @transform_7, window_bounds = array<i64: 4, 32>}, {pipeline_mode = #tpu.pipeline_mode<synchronous>, transform_indices = @transform_8, window_bounds = array<i64: 128, 32>}, {transform_indices = @transform_9, window_bounds = array<i64: 12, 32, 32>}]} {
    %c0 = arith.constant 0 : index
    %c0_0 = arith.constant 0 : index
    %c0_1 = arith.constant 0 : index
    %0 = vector.load %arg1[%c0, %c0_0, %c0_1] : memref<12x32x32xf32, #tpu.memory_space<vmem>>, vector<12x32x32xf32>
    %1 = vector.shape_cast %0 : vector<12x32x32xf32> to vector<384x32xf32>
    %c0_2 = arith.constant 0 : index
    %c0_3 = arith.constant 0 : index
    %2 = vector.load %arg2[%c0_2, %c0_3] : memref<32x32xf32, #tpu.memory_space<vmem>>, vector<32x32xf32>
    %cst = arith.constant dense<0.000000e+00> : vector<384x32xf32>
    %3 = tpu.matmul %1, %2, %cst {dimension_numbers = #tpu.dot_dimension_numbers<[1], [0], [0], [1], [0, 0, 1, 1], [], []>} : vector<384x32xf32>, vector<32x32xf32>, vector<384x32xf32> -> vector<384x32xf32>
    %c0_4 = arith.constant 0 : index
    %c0_5 = arith.constant 0 : index
    %4 = vector.load %arg3[%c0_4, %c0_5] : memref<32x32xf32, #tpu.memory_space<vmem>>, vector<32x32xf32>
    %cst_6 = arith.constant dense<0.000000e+00> : vector<384x32xf32>
    %5 = tpu.matmul %1, %4, %cst_6 {dimension_numbers = #tpu.dot_dimension_numbers<[1], [0], [0], [1], [0, 0, 1, 1], [], []>} : vector<384x32xf32>, vector<32x32xf32>, vector<384x32xf32> -> vector<384x32xf32>
    %c0_7 = arith.constant 0 : index
    %c0_8 = arith.constant 0 : index
    %6 = vector.load %arg4[%c0_7, %c0_8] : memref<32x32xf32, #tpu.memory_space<vmem>>, vector<32x32xf32>
    %cst_9 = arith.constant dense<0.000000e+00> : vector<384x32xf32>
    %7 = tpu.matmul %1, %6, %cst_9 {dimension_numbers = #tpu.dot_dimension_numbers<[1], [0], [0], [1], [0, 0, 1, 1], [], []>} : vector<384x32xf32>, vector<32x32xf32>, vector<384x32xf32> -> vector<384x32xf32>
    %8 = vector.shape_cast %3 : vector<384x32xf32> to vector<12x32x32xf32>
    %9 = vector.shape_cast %5 : vector<384x32xf32> to vector<12x1x32x32xf32>
    %10 = vector.shape_cast %7 : vector<384x32xf32> to vector<12x1x32x32xf32>
    %c0_10 = arith.constant 0 : index
    %c0_11 = arith.constant 0 : index
    %11 = vector.load %arg8[%c0_10, %c0_11] : memref<4x32xf32, #tpu.memory_space<vmem>>, vector<4x32xf32>
    %12 = vector.shape_cast %11 : vector<4x32xf32> to vector<1x4x1x32xf32>
    %13 = vector.broadcast %9 : vector<12x1x32x32xf32> to vector<12x4x32x32xf32>
    %14 = vector.broadcast %12 : vector<1x4x1x32xf32> to vector<12x4x32x32xf32>
    %15 = arith.mulf %13, %14 : vector<12x4x32x32xf32>
    %16 = vector.shape_cast %15 : vector<12x4x32x32xf32> to vector<12x128x32xf32>
    %17 = vector.broadcast %10 : vector<12x1x32x32xf32> to vector<12x4x32x32xf32>
    %18 = vector.broadcast %12 : vector<1x4x1x32xf32> to vector<12x4x32x32xf32>
    %19 = arith.mulf %17, %18 : vector<12x4x32x32xf32>
    %20 = vector.shape_cast %19 : vector<12x4x32x32xf32> to vector<12x128x32xf32>
    "tpu.trace_start"() <{level = 10 : i32, message = "bqc,bjc->bqj"}> : () -> ()
    %cst_12 = arith.constant dense<0.000000e+00> : vector<12x32x128xf32>
    %21 = tpu.matmul %8, %16, %cst_12 {dimension_numbers = #tpu.dot_dimension_numbers<[2], [2], [1], [1], [0, 0, 0, 1, 1, 1], [0], [0]>} : vector<12x32x32xf32>, vector<12x128x32xf32>, vector<12x32x128xf32> -> vector<12x32x128xf32>
    "tpu.trace_stop"() : () -> ()
    %c0_13 = arith.constant 0 : index
    %c0_14 = arith.constant 0 : index
    %22 = vector.load %arg7[%c0_13, %c0_14] : memref<32x128xf32, #tpu.memory_space<vmem>>, vector<32x128xf32>
    %23 = vector.shape_cast %22 : vector<32x128xf32> to vector<1x32x128xf32>
    %24 = vector.broadcast %23 : vector<1x32x128xf32> to vector<12x32x128xf32>
    %25 = arith.addf %21, %24 : vector<12x32x128xf32>
    %cst_15 = arith.constant dense<0xFF800000> : vector<12x32xf32>
    %26 = vector.multi_reduction <maximumf>, %25, %cst_15 [2] : vector<12x32x128xf32> to vector<12x32xf32>
    %27 = vector.shape_cast %26 : vector<12x32xf32> to vector<12x32x1xf32>
    %28 = vector.broadcast %27 : vector<12x32x1xf32> to vector<12x32x128xf32>
    %29 = arith.subf %25, %28 : vector<12x32x128xf32>
    %30 = math.exp %29 : vector<12x32x128xf32>
    "tpu.trace_start"() <{level = 10 : i32, message = "bqj,bjc->bqc"}> : () -> ()
    %cst_16 = arith.constant dense<0.000000e+00> : vector<12x32x32xf32>
    %31 = tpu.matmul %30, %20, %cst_16 {dimension_numbers = #tpu.dot_dimension_numbers<[2], [1], [1], [2], [0, 0, 0, 1, 1, 2], [0], [0]>} : vector<12x32x128xf32>, vector<12x128x32xf32>, vector<12x32x32xf32> -> vector<12x32x32xf32>
    "tpu.trace_stop"() : () -> ()
    %32 = vector.shape_cast %30 : vector<12x32x128xf32> to vector<384x128xf32>
    %c0_17 = arith.constant 0 : index
    %c0_18 = arith.constant 0 : index
    %33 = vector.load %arg9[%c0_17, %c0_18] : memref<128x32xf32, #tpu.memory_space<vmem>>, vector<128x32xf32>
    %cst_19 = arith.constant dense<0.000000e+00> : vector<384x32xf32>
    %34 = tpu.matmul %32, %33, %cst_19 {dimension_numbers = #tpu.dot_dimension_numbers<[1], [0], [0], [1], [0, 0, 1, 1], [], []>} : vector<384x128xf32>, vector<128x32xf32>, vector<384x32xf32> -> vector<384x32xf32>
    %cst_20 = arith.constant 1.000000e-30 : f32
    %35 = vector.broadcast %cst_20 : f32 to vector<384x32xf32>
    %36 = arith.maximumf %34, %35 : vector<384x32xf32>
    %37 = vector.shape_cast %31 : vector<12x32x32xf32> to vector<384x32xf32>
    %38 = tpu.reciprocal %36 : vector<384x32xf32> -> vector<384x32xf32>
    %39 = arith.mulf %37, %38 : vector<384x32xf32>
    %c0_21 = arith.constant 0 : index
    %c0_22 = arith.constant 0 : index
    %40 = vector.load %arg5[%c0_21, %c0_22] : memref<32x32xf32, #tpu.memory_space<vmem>>, vector<32x32xf32>
    %cst_23 = arith.constant dense<0.000000e+00> : vector<384x32xf32>
    %41 = tpu.matmul %39, %40, %cst_23 {dimension_numbers = #tpu.dot_dimension_numbers<[1], [0], [0], [1], [0, 0, 1, 1], [], []>} : vector<384x32xf32>, vector<32x32xf32>, vector<384x32xf32> -> vector<384x32xf32>
    %c0_24 = arith.constant 0 : index
    %c0_25 = arith.constant 0 : index
    %42 = vector.load %arg6[%c0_24, %c0_25] : memref<1x32xf32, #tpu.memory_space<vmem>>, vector<1x32xf32>
    %43 = vector.shape_cast %42 : vector<1x32xf32> to vector<32xf32>
    %44 = vector.shape_cast %43 : vector<32xf32> to vector<1x32xf32>
    %45 = vector.broadcast %44 : vector<1x32xf32> to vector<384x32xf32>
    %46 = arith.addf %41, %45 : vector<384x32xf32>
    %47 = vector.shape_cast %46 : vector<384x32xf32> to vector<12x32x32xf32>
    %c0_26 = arith.constant 0 : index
    %c0_27 = arith.constant 0 : index
    %c0_28 = arith.constant 0 : index
    %48 = vector.load %arg10[%c0_26, %c0_27, %c0_28] : memref<12x32x32xf32, #tpu.memory_space<vmem>>, vector<12x32x32xf32>
    tpu.vector_store %arg10[%c0_26, %c0_27, %c0_28], %47 {strides = array<i32>} : memref<12x32x32xf32, #tpu.memory_space<vmem>>, vector<12x32x32xf32>,
    return
  }
  func.func @transform_0(%arg0: i32) -> (i32, i32, i32) {
    %c0_i32 = arith.constant 0 : i32
    %c0_i32_0 = arith.constant 0 : i32
    %c0_i32_1 = arith.constant 0 : i32
    return %arg0, %c0_i32, %c0_i32_0 : i32, i32, i32
  }
  func.func @transform_1(%arg0: i32) -> (i32, i32) {
    %c0_i32 = arith.constant 0 : i32
    %c0_i32_0 = arith.constant 0 : i32
    %c0_i32_1 = arith.constant 0 : i32
    return %c0_i32, %c0_i32_0 : i32, i32
  }
  func.func @transform_2(%arg0: i32) -> (i32, i32) {
    %c0_i32 = arith.constant 0 : i32
    %c0_i32_0 = arith.constant 0 : i32
    %c0_i32_1 = arith.constant 0 : i32
    return %c0_i32, %c0_i32_0 : i32, i32
  }
  func.func @transform_3(%arg0: i32) -> (i32, i32) {
    %c0_i32 = arith.constant 0 : i32
    %c0_i32_0 = arith.constant 0 : i32
    %c0_i32_1 = arith.constant 0 : i32
    return %c0_i32, %c0_i32_0 : i32, i32
  }
  func.func @transform_4(%arg0: i32) -> (i32, i32) {
    %c0_i32 = arith.constant 0 : i32
    %c0_i32_0 = arith.constant 0 : i32
    %c0_i32_1 = arith.constant 0 : i32
    return %c0_i32, %c0_i32_0 : i32, i32
  }
  func.func @transform_5(%arg0: i32) -> (i32, i32) {
    %c0_i32 = arith.constant 0 : i32
    %c0_i32_0 = arith.constant 0 : i32
    %c0_i32_1 = arith.constant 0 : i32
    return %c0_i32, %c0_i32_0 : i32, i32
  }
  func.func @transform_6(%arg0: i32) -> (i32, i32) {
    %c0_i32 = arith.constant 0 : i32
    %c0_i32_0 = arith.constant 0 : i32
    %c0_i32_1 = arith.constant 0 : i32
    return %c0_i32, %c0_i32_0 : i32, i32
  }
  func.func @transform_7(%arg0: i32) -> (i32, i32) {
    %c0_i32 = arith.constant 0 : i32
    %c0_i32_0 = arith.constant 0 : i32
    %c0_i32_1 = arith.constant 0 : i32
    return %c0_i32, %c0_i32_0 : i32, i32
  }
  func.func @transform_8(%arg0: i32) -> (i32, i32) {
    %c0_i32 = arith.constant 0 : i32
    %c0_i32_0 = arith.constant 0 : i32
    %c0_i32_1 = arith.constant 0 : i32
    return %c0_i32, %c0_i32_0 : i32, i32
  }
  func.func @transform_9(%arg0: i32) -> (i32, i32, i32) {
    %c0_i32 = arith.constant 0 : i32
    %c0_i32_0 = arith.constant 0 : i32
    %c0_i32_1 = arith.constant 0 : i32
    return %arg0, %c0_i32, %c0_i32_0 : i32, i32, i32
  }
}

</mosaic_0001>

<llo_original>
// kernel: tpu_custom_call.1
$region0: #{tpu_custom_call.1}
  #allocation0 [shape = 'u32[]', space=smem, size = 0x4, offset = 0x4, fixed_abs, tag = 'smem constant byte address 0x4 - core index']
  #allocation1 [shape = 'u32[72,128]{1,0:T(1,128)}', space=vmem, size = 0x9000, scoped, tag = 'internal scratch']
  %s0 = inlined_call_operand.vmem [shape: f32[48,32,32], index: 0, kind: input, shape index: {}]
  %s1 = inlined_call_operand.vmem [shape: f32[32,32], index: 1, kind: input, shape index: {}]
  %s2 = inlined_call_operand.vmem [shape: f32[32,32], index: 2, kind: input, shape index: {}]
  %s3 = inlined_call_operand.vmem [shape: f32[32,32], index: 3, kind: input, shape index: {}]
  %s4 = inlined_call_operand.vmem [shape: f32[32,32], index: 4, kind: input, shape index: {}]
  %s5 = inlined_call_operand.vmem [shape: f32[1,32], index: 5, kind: input, shape index: {}]
  %s6 = inlined_call_operand.vmem [shape: f32[32,128], index: 6, kind: input, shape index: {}]
  %s7 = inlined_call_operand.vmem [shape: f32[4,32], index: 7, kind: input, shape index: {}]
  %s8 = inlined_call_operand.vmem [shape: f32[128,32], index: 8, kind: input, shape index: {}]
  %s9 = inlined_call_operand.vmem [shape: f32[48,32,32], index: 9, kind: output, shape index: {}]
  %s10 = sld [smem:[#allocation0]]
  $region69: #{tpu_custom_call.1} parent=0
    _
  %s12 = ssub.s32 1, %s10
  %s13 = scalar_select 0, %s12, %s10
  loop: start=0, step=1, limit=6
  $region2: #{tpu_custom_call.1} parent=0 // loop_pre_header
    _
  $region3: #{tpu_custom_call.1} parent=0 // loop_header
    %s15 = sphi 0, %s19
    %p16 = scmp.ge.s32.totalorder %s15, 6
    %s25 = sphi 0, %s27
    %s28 = sphi 0, %s25
    %s29 = sphi 0, %s28
    %s45 = sphi 0, %s29
    %s49 = sphi 0, %s49
    %s51 = sphi 0, %s49
    %s52 = sphi 0, %s51
    %s66 = sphi 0, %s52
    %s70 = sphi 0, %s70
    %s72 = sphi 0, %s70
    %s73 = sphi 0, %s72
    %s87 = sphi 0, %s73
    %s91 = sphi 0, %s91
    %s93 = sphi 0, %s91
    %s94 = sphi 0, %s93
    %s108 = sphi 0, %s94
    %s112 = sphi 0, %s112
    %s114 = sphi 0, %s112
    %s115 = sphi 0, %s114
    %s129 = sphi 0, %s115
    %s133 = sphi 0, %s133
    %s135 = sphi 0, %s133
    %s136 = sphi 0, %s135
    %s150 = sphi 0, %s136
    %s154 = sphi 0, %s154
    %s156 = sphi 0, %s154
    %s157 = sphi 0, %s156
    %s171 = sphi 0, %s157
    %s175 = sphi 0, %s175
    %s177 = sphi 0, %s175
    %s178 = sphi 0, %s177
    %s192 = sphi 0, %s178
    %s196 = sphi 0, %s196
    %s198 = sphi 0, %s196
    %s199 = sphi 0, %s198
    %s213 = sphi 0, %s199
    %s219 = sphi 0, %s221
    %s222 = sphi 0, %s219
    %s223 = sphi 0, %s222
    %s239 = sphi 0, %s223
  $region4: #{tpu_custom_call.1} parent=0 // loop_header_branch
    %18 = sbr.rel (%p16) target = $region8
  $region5: #{tpu_custom_call.1} parent=0 // loop_body
    %s20 = ssub.s32 %s15, 1
    %s21 = ssub.s32 %s15, 2
    %s22 = sadd.s32 %s15, 1
    %s23 = ssub.s32 %s15, %s22
    %p24 = scmp.eq.s32.totalorder %s23, 0
    %s26 = sadd.s32 %s25, 1
    %s27 = scalar_select %p24, %s25, %s26
    %p30 = pneg %p24
    %p31 = scmp.eq.s32.totalorder %s15, 3
    %p32 = por %p30, %p31
    %p33 = scmp.ne.s32.totalorder %s25, %s28
    %p34 = scmp.eq.s32.totalorder %s15, 0
    %p35 = por %p33, %p34
    %p36 = scmp.ne.s32.totalorder %s25, %s28
    %p37 = scmp.eq.s32.totalorder %s20, 3
    %p38 = por %p36, %p37
    %p39 = scmp.ne.s32.totalorder %s28, %s29
    %p40 = scmp.eq.s32.totalorder %s20, 0
    %p41 = por %p39, %p40
    %p42 = scmp.ne.s32.totalorder %s28, %s29
    %p43 = scmp.eq.s32.totalorder %s21, 3
    %p44 = por %p42, %p43
    %p46 = scmp.ne.s32.totalorder %s29, %s45
    %p47 = scmp.eq.s32.totalorder %s21, 0
    %p48 = por %p46, %p47
    %s50 = sadd.s32 %s49, 1
    %p53 = scmp.eq.s32.totalorder %s15, 3
    %p54 = scmp.ne.s32.totalorder %s49, %s51
    %p55 = scmp.eq.s32.totalorder %s15, 0
    %p56 = por %p54, %p55
    %p57 = scmp.ne.s32.totalorder %s49, %s51
    %p58 = scmp.eq.s32.totalorder %s20, 3
    %p59 = por %p57, %p58
    %p60 = scmp.ne.s32.totalorder %s51, %s52
    %p61 = scmp.eq.s32.totalorder %s20, 0
    %p62 = por %p60, %p61
    %p63 = scmp.ne.s32.totalorder %s51, %s52
    %p64 = scmp.eq.s32.totalorder %s21, 3
    %p65 = por %p63, %p64
    %p67 = scmp.ne.s32.totalorder %s52, %s66
    %p68 = scmp.eq.s32.totalorder %s21, 0
    %p69 = por %p67, %p68
    %s71 = sadd.s32 %s70, 1
    %p74 = scmp.eq.s32.totalorder %s15, 3
    %p75 = scmp.ne.s32.totalorder %s70, %s72
    %p76 = scmp.eq.s32.totalorder %s15, 0
    %p77 = por %p75, %p76
    %p78 = scmp.ne.s32.totalorder %s70, %s72
    %p79 = scmp.eq.s32.totalorder %s20, 3
    %p80 = por %p78, %p79
    %p81 = scmp.ne.s32.totalorder %s72, %s73
    %p82 = scmp.eq.s32.totalorder %s20, 0
    %p83 = por %p81, %p82
    %p84 = scmp.ne.s32.totalorder %s72, %s73
    %p85 = scmp.eq.s32.totalorder %s21, 3
    %p86 = por %p84, %p85
    %p88 = scmp.ne.s32.totalorder %s73, %s87
    %p89 = scmp.eq.s32.totalorder %s21, 0
    %p90 = por %p88, %p89
    %s92 = sadd.s32 %s91, 1
    %p95 = scmp.eq.s32.totalorder %s15, 3
    %p96 = scmp.ne.s32.totalorder %s91, %s93
    %p97 = scmp.eq.s32.totalorder %s15, 0
    %p98 = por %p96, %p97
    %p99 = scmp.ne.s32.totalorder %s91, %s93
    %p100 = scmp.eq.s32.totalorder %s20, 3
    %p101 = por %p99, %p100
    %p102 = scmp.ne.s32.totalorder %s93, %s94
    %p103 = scmp.eq.s32.totalorder %s20, 0
    %p104 = por %p102, %p103
    %p105 = scmp.ne.s32.totalorder %s93, %s94
    %p106 = scmp.eq.s32.totalorder %s21, 3
    %p107 = por %p105, %p106
    %p109 = scmp.ne.s32.totalorder %s94, %s108
    %p110 = scmp.eq.s32.totalorder %s21, 0
    %p111 = por %p109, %p110
    %s113 = sadd.s32 %s112, 1
    %p116 = scmp.eq.s32.totalorder %s15, 3
    %p117 = scmp.ne.s32.totalorder %s112, %s114
    %p118 = scmp.eq.s32.totalorder %s15, 0
    %p119 = por %p117, %p118
    %p120 = scmp.ne.s32.totalorder %s112, %s114
    %p121 = scmp.eq.s32.totalorder %s20, 3
    %p122 = por %p120, %p121
    %p123 = scmp.ne.s32.totalorder %s114, %s115
    %p124 = scmp.eq.s32.totalorder %s20, 0
    %p125 = por %p123, %p124
    %p126 = scmp.ne.s32.totalorder %s114, %s115
    %p127 = scmp.eq.s32.totalorder %s21, 3
    %p128 = por %p126, %p127
    %p130 = scmp.ne.s32.totalorder %s115, %s129
    %p131 = scmp.eq.s32.totalorder %s21, 0
    %p132 = por %p130, %p131
    %s134 = sadd.s32 %s133, 1
    %p137 = scmp.eq.s32.totalorder %s15, 3
    %p138 = scmp.ne.s32.totalorder %s133, %s135
    %p139 = scmp.eq.s32.totalorder %s15, 0
    %p140 = por %p138, %p139
    %p141 = scmp.ne.s32.totalorder %s133, %s135
    %p142 = scmp.eq.s32.totalorder %s20, 3
    %p143 = por %p141, %p142
    %p144 = scmp.ne.s32.totalorder %s135, %s136
    %p145 = scmp.eq.s32.totalorder %s20, 0
    %p146 = por %p144, %p145
    %p147 = scmp.ne.s32.totalorder %s135, %s136
    %p148 = scmp.eq.s32.totalorder %s21, 3
    %p149 = por %p147, %p148
    %p151 = scmp.ne.s32.totalorder %s136, %s150
    %p152 = scmp.eq.s32.totalorder %s21, 0
    %p153 = por %p151, %p152
    %s155 = sadd.s32 %s154, 1
    %p158 = scmp.eq.s32.totalorder %s15, 3
    %p159 = scmp.ne.s32.totalorder %s154, %s156
    %p160 = scmp.eq.s32.totalorder %s15, 0
    %p161 = por %p159, %p160
    %p162 = scmp.ne.s32.totalorder %s154, %s156
    %p163 = scmp.eq.s32.totalorder %s20, 3
    %p164 = por %p162, %p163
    %p165 = scmp.ne.s32.totalorder %s156, %s157
    %p166 = scmp.eq.s32.totalorder %s20, 0
    %p167 = por %p165, %p166
    %p168 = scmp.ne.s32.totalorder %s156, %s157
    %p169 = scmp.eq.s32.totalorder %s21, 3
    %p170 = por %p168, %p169
    %p172 = scmp.ne.s32.totalorder %s157, %s171
    %p173 = scmp.eq.s32.totalorder %s21, 0
    %p174 = por %p172, %p173
    %s176 = sadd.s32 %s175, 1
    %p179 = scmp.eq.s32.totalorder %s15, 3
    %p180 = scmp.ne.s32.totalorder %s175, %s177
    %p181 = scmp.eq.s32.totalorder %s15, 0
    %p182 = por %p180, %p181
    %p183 = scmp.ne.s32.totalorder %s175, %s177
    %p184 = scmp.eq.s32.totalorder %s20, 3
    %p185 = por %p183, %p184
    %p186 = scmp.ne.s32.totalorder %s177, %s178
    %p187 = scmp.eq.s32.totalorder %s20, 0
    %p188 = por %p186, %p187
    %p189 = scmp.ne.s32.totalorder %s177, %s178
    %p190 = scmp.eq.s32.totalorder %s21, 3
    %p191 = por %p189, %p190
    %p193 = scmp.ne.s32.totalorder %s178, %s192
    %p194 = scmp.eq.s32.totalorder %s21, 0
    %p195 = por %p193, %p194
    %s197 = sadd.s32 %s196, 1
    %p200 = scmp.eq.s32.totalorder %s15, 3
    %p201 = scmp.ne.s32.totalorder %s196, %s198
    %p202 = scmp.eq.s32.totalorder %s15, 0
    %p203 = por %p201, %p202
    %p204 = scmp.ne.s32.totalorder %s196, %s198
    %p205 = scmp.eq.s32.totalorder %s20, 3
    %p206 = por %p204, %p205
    %p207 = scmp.ne.s32.totalorder %s198, %s199
    %p208 = scmp.eq.s32.totalorder %s20, 0
    %p209 = por %p207, %p208
    %p210 = scmp.ne.s32.totalorder %s198, %s199
    %p211 = scmp.eq.s32.totalorder %s21, 3
    %p212 = por %p210, %p211
    %p214 = scmp.ne.s32.totalorder %s199, %s213
    %p215 = scmp.eq.s32.totalorder %s21, 0
    %p216 = por %p214, %p215
    %s217 = ssub.s32 %s15, %s22
    %p218 = scmp.eq.s32.totalorder %s217, 0
    %s220 = sadd.s32 %s219, 1
    %s221 = scalar_select %p218, %s219, %s220
    %p224 = pneg %p218
    %p225 = scmp.eq.s32.totalorder %s15, 3
    %p226 = por %p224, %p225
    %p227 = scmp.ne.s32.totalorder %s219, %s222
    %p228 = scmp.eq.s32.totalorder %s15, 0
    %p229 = por %p227, %p228
    %p230 = scmp.ne.s32.totalorder %s219, %s222
    %p231 = scmp.eq.s32.totalorder %s20, 3
    %p232 = por %p230, %p231
    %p233 = scmp.ne.s32.totalorder %s222, %s223
    %p234 = scmp.eq.s32.totalorder %s20, 0
    %p235 = por %p233, %p234
    %p236 = scmp.ne.s32.totalorder %s222, %s223
    %p237 = scmp.eq.s32.totalorder %s21, 3
    %p238 = por %p236, %p237
    %p240 = scmp.ne.s32.totalorder %s223, %s239
    %p241 = scmp.eq.s32.totalorder %s21, 0
    %p242 = por %p240, %p241
    %p243 = scmp.le.s32.totalorder 1, %s15
    %p244 = scmp.lt.s32.totalorder %s15, 5
    %p245 = pnand %p243, %p244
    %p246 = pneg %p245
    // Predicated region
    $region9: #{tpu_custom_call.1} parent=5 // pred_check
      _
    $region10: #{tpu_custom_call.1} parent=5 // pred_check_branch
      %248 = sbr.rel (%p245) target = $region12
    $region11: #{tpu_custom_call.1} parent=5 // pred_region
      %s249 = ssub.s32 %s15, 1
      // Predicated region
      $region13: #{tpu_custom_call.1} parent=11 // pred_check
        %p250 = pneg %p62
      $region14: #{tpu_custom_call.1} parent=11 // pred_check_branch
        %252 = sbr.rel (%p250) target = $region16
      $region15: #{tpu_custom_call.1} parent=11 // pred_region
        _
      $region16: #{tpu_custom_call.1} parent=11 // pred_fallthru
        _
      // Predicated region
      $region17: #{tpu_custom_call.1} parent=11 // pred_check
        %p253 = pneg %p83
      $region18: #{tpu_custom_call.1} parent=11 // pred_check_branch
        %255 = sbr.rel (%p253) target = $region20
      $region19: #{tpu_custom_call.1} parent=11 // pred_region
        _
      $region20: #{tpu_custom_call.1} parent=11 // pred_fallthru
        _
      // Predicated region
      $region21: #{tpu_custom_call.1} parent=11 // pred_check
        %p256 = pneg %p104
      $region22: #{tpu_custom_call.1} parent=11 // pred_check_branch
        %258 = sbr.rel (%p256) target = $region24
      $region23: #{tpu_custom_call.1} parent=11 // pred_region
        _
      $region24: #{tpu_custom_call.1} parent=11 // pred_fallthru
        _
      // Predicated region
      $region25: #{tpu_custom_call.1} parent=11 // pred_check
        %p259 = pneg %p125
      $region26: #{tpu_custom_call.1} parent=11 // pred_check_branch
        %261 = sbr.rel (%p259) target = $region28
      $region27: #{tpu_custom_call.1} parent=11 // pred_region
        _
      $region28: #{tpu_custom_call.1} parent=11 // pred_fallthru
        _
      // Predicated region
      $region29: #{tpu_custom_call.1} parent=11 // pred_check
        %p262 = pneg %p146
      $region30: #{tpu_custom_call.1} parent=11 // pred_check_branch
        %264 = sbr.rel (%p262) target = $region32
      $region31: #{tpu_custom_call.1} parent=11 // pred_region
        _
      $region32: #{tpu_custom_call.1} parent=11 // pred_fallthru
        _
      // Predicated region
      $region33: #{tpu_custom_call.1} parent=11 // pred_check
        %p265 = pneg %p167
      $region34: #{tpu_custom_call.1} parent=11 // pred_check_branch
        %267 = sbr.rel (%p265) target = $region36
      $region35: #{tpu_custom_call.1} parent=11 // pred_region
        _
      $region36: #{tpu_custom_call.1} parent=11 // pred_fallthru
        _
      // Predicated region
      $region37: #{tpu_custom_call.1} parent=11 // pred_check
        %p268 = pneg %p188
      $region38: #{tpu_custom_call.1} parent=11 // pred_check_branch
        %270 = sbr.rel (%p268) target = $region40
      $region39: #{tpu_custom_call.1} parent=11 // pred_region
        _
      $region40: #{tpu_custom_call.1} parent=11 // pred_fallthru
        _
      // Predicated region
      $region41: #{tpu_custom_call.1} parent=11 // pred_check
        %p271 = pneg %p209
      $region42: #{tpu_custom_call.1} parent=11 // pred_check_branch
        %273 = sbr.rel (%p271) target = $region44
      $region43: #{tpu_custom_call.1} parent=11 // pred_region
        _
      $region44: #{tpu_custom_call.1} parent=11 // pred_fallthru
        _
    $region12: #{tpu_custom_call.1} parent=5 // pred_fallthru
      _
    %p274 = scmp.lt.s32.totalorder %s15, 4
    // Predicated region
    $region45: #{tpu_custom_call.1} parent=5 // pred_check
      %p275 = pneg %p274
    $region46: #{tpu_custom_call.1} parent=5 // pred_check_branch
      %277 = sbr.rel (%p275) target = $region48
    $region47: #{tpu_custom_call.1} parent=5 // pred_region
      // Predicated region
      $region49: #{tpu_custom_call.1} parent=47 // pred_check
        %p278 = pneg %p35
      $region50: #{tpu_custom_call.1} parent=47 // pred_check_branch
        %280 = sbr.rel (%p278) target = $region52
      $region51: #{tpu_custom_call.1} parent=47 // pred_region
        %s281 = smul.u32 12, %s15
        %p282 = scmp.lt.s32.totalorder %s281, 47
        %s283 = scalar_select %p282, %s281, 47
        %s284 = smul.addr %s283, 4
        %s285 = smul.addr %s284, 8
        %s286 = scalar_lea.vmem %s0, %s285
        %s287 = smul.u32 12, %s15
      $region52: #{tpu_custom_call.1} parent=47 // pred_fallthru
        _
    $region48: #{tpu_custom_call.1} parent=5 // pred_fallthru
      _
    %p288 = scmp.le.s32.totalorder 1, %s15
    %p289 = scmp.lt.s32.totalorder %s15, 5
    %p290 = pnand %p288, %p289
    %p291 = pneg %p290
    // Predicated region
    $region53: #{tpu_custom_call.1} parent=5 // pred_check
      _
    $region54: #{tpu_custom_call.1} parent=5 // pred_check_branch
      %293 = sbr.rel (%p290) target = $region56
    $region55: #{tpu_custom_call.1} parent=5 // pred_region
      %s294 = ssub.s32 %s15, 1
      %s295 = smul.u32 12, %s20
      %p296 = scmp.lt.s32.totalorder %s295, 47
      %s297 = scalar_select %p296, %s295, 47
      %s298 = smul.addr %s297, 4
      %s299 = smul.addr %s298, 8
      %s300 = scalar_lea.vmem %s0, %s299
      %p301 = pneg %p41
      %p302 = pneg %p38
      %p303 = pneg %p62
      %p304 = pneg %p59
      %p305 = pneg %p83
      %p306 = pneg %p80
      %p307 = pneg %p104
      %p308 = pneg %p101
      %p309 = pneg %p125
      %p310 = pneg %p122
      %p311 = pneg %p146
      %p312 = pneg %p143
      %p313 = pneg %p167
      %p314 = pneg %p164
      %p315 = pneg %p188
      %p316 = pneg %p185
      %p317 = pneg %p209
      %p318 = pneg %p206
      %p319 = pneg %p235
      %p320 = pneg %p232
      %s321 = smul.u32 12, %s20
      %p322 = scmp.lt.s32.totalorder %s321, 47
      %s323 = scalar_select %p322, %s321, 47
      %s324 = smul.addr %s323, 4
      %s325 = smul.addr %s324, 8
      %s326 = scalar_lea.vmem %s9, %s325
      %s327 = smul.u32 12, %s20
      %p328 = scmp.lt.s32.totalorder %s327, 47
      %s329 = scalar_select %p328, %s327, 47
      %s330 = smul.addr %s329, 4
      %s331 = smul.addr %s330, 8
      %s332 = scalar_lea.vmem %s0, %s331
      %s333 = smul.u32 12, %s20
      %s334 = smul.u32 12, %s20
      %p335 = scmp.lt.s32.totalorder %s334, 47
      %s336 = scalar_select %p335, %s334, 47
      %s337 = smul.addr %s336, 4
      %s338 = smul.addr %s337, 8
      %s339 = scalar_lea.vmem %s9, %s338
      %s340 = smul.u32 12, %s20
      %v341 = vld [vmem:[%s332] sm:$0xff]
      %v342 = vld [vmem:[%s332 + $0x8] sm:$0xff]
      %v343 = vld [vmem:[%s332 + $0x10] sm:$0xff]
      %v344 = vld [vmem:[%s332 + $0x18] sm:$0xff]
      %v345 = vld [vmem:[%s332 + $0x20] sm:$0xff]
      %v346 = vld [vmem:[%s332 + $0x28] sm:$0xff]
      %v347 = vld [vmem:[%s332 + $0x30] sm:$0xff]
      %v348 = vld [vmem:[%s332 + $0x38] sm:$0xff]
      %v349 = vld [vmem:[%s332 + $0x40] sm:$0xff]
      %v350 = vld [vmem:[%s332 + $0x48] sm:$0xff]
      %v351 = vld [vmem:[%s332 + $0x50] sm:$0xff]
      %v352 = vld [vmem:[%s332 + $0x58] sm:$0xff]
      %v353 = vld [vmem:[%s332 + $0x60] sm:$0xff]
      %v354 = vld [vmem:[%s332 + $0x68] sm:$0xff]
      %v355 = vld [vmem:[%s332 + $0x70] sm:$0xff]
      %v356 = vld [vmem:[%s332 + $0x78] sm:$0xff]
      %v357 = vld [vmem:[%s332 + $0x80] sm:$0xff]
      %v358 = vld [vmem:[%s332 + $0x88] sm:$0xff]
      %v359 = vld [vmem:[%s332 + $0x90] sm:$0xff]
      %v360 = vld [vmem:[%s332 + $0x98] sm:$0xff]
      %v361 = vld [vmem:[%s332 + $0xa0] sm:$0xff]
      %v362 = vld [vmem:[%s332 + $0xa8] sm:$0xff]
      %v363 = vld [vmem:[%s332 + $0xb0] sm:$0xff]
      %v364 = vld [vmem:[%s332 + $0xb8] sm:$0xff]
      %v365 = vld [vmem:[%s332 + $0xc0] sm:$0xff]
      %v366 = vld [vmem:[%s332 + $0xc8] sm:$0xff]
      %v367 = vld [vmem:[%s332 + $0xd0] sm:$0xff]
      %v368 = vld [vmem:[%s332 + $0xd8] sm:$0xff]
      %v369 = vld [vmem:[%s332 + $0xe0] sm:$0xff]
      %v370 = vld [vmem:[%s332 + $0xe8] sm:$0xff]
      %v371 = vld [vmem:[%s332 + $0xf0] sm:$0xff]
      %v372 = vld [vmem:[%s332 + $0xf8] sm:$0xff]
      %v373 = vld [vmem:[%s332 + $0x100] sm:$0xff]
      %v374 = vld [vmem:[%s332 + $0x108] sm:$0xff]
      %v375 = vld [vmem:[%s332 + $0x110] sm:$0xff]
      %v376 = vld [vmem:[%s332 + $0x118] sm:$0xff]
      %v377 = vld [vmem:[%s332 + $0x120] sm:$0xff]
      %v378 = vld [vmem:[%s332 + $0x128] sm:$0xff]
      %v379 = vld [vmem:[%s332 + $0x130] sm:$0xff]
      %v380 = vld [vmem:[%s332 + $0x138] sm:$0xff]
      %v381 = vld [vmem:[%s332 + $0x140] sm:$0xff]
      %v382 = vld [vmem:[%s332 + $0x148] sm:$0xff]
      %v383 = vld [vmem:[%s332 + $0x150] sm:$0xff]
      %v384 = vld [vmem:[%s332 + $0x158] sm:$0xff]
      %v385 = vld [vmem:[%s332 + $0x160] sm:$0xff]
      %v386 = vld [vmem:[%s332 + $0x168] sm:$0xff]
      %v387 = vld [vmem:[%s332 + $0x170] sm:$0xff]
      %v388 = vld [vmem:[%s332 + $0x178] sm:$0xff]
      %v389 = vld [vmem:[%s1] sm:$0xff]
      %v390 = vld [vmem:[%s1 + $0x8] sm:$0xff]
      %v391 = vld [vmem:[%s1 + $0x10] sm:$0xff]
      %v392 = vld [vmem:[%s1 + $0x18] sm:$0xff]
      %vm393 = vcmask 261120
      %v395 = vsel %vm393, %v341, 0
      %v398 = vsel %vm393, %v342, 0
      %v401 = vsel %vm393, %v343, 0
      %v404 = vsel %vm393, %v344, 0
      %v407 = vsel %vm393, %v345, 0
      %v410 = vsel %vm393, %v346, 0
      %v413 = vsel %vm393, %v347, 0
      %v416 = vsel %vm393, %v348, 0
      %v419 = vsel %vm393, %v349, 0
      %v422 = vsel %vm393, %v350, 0
      %v425 = vsel %vm393, %v351, 0
      %v428 = vsel %vm393, %v352, 0
      %v431 = vsel %vm393, %v353, 0
      %v434 = vsel %vm393, %v354, 0
      %v437 = vsel %vm393, %v355, 0
      %v440 = vsel %vm393, %v356, 0
      %v443 = vsel %vm393, %v357, 0
      %v446 = vsel %vm393, %v358, 0
      %v449 = vsel %vm393, %v359, 0
      %v452 = vsel %vm393, %v360, 0
      %v455 = vsel %vm393, %v361, 0
      %v458 = vsel %vm393, %v362, 0
      %v461 = vsel %vm393, %v363, 0
      %v464 = vsel %vm393, %v364, 0
      %v467 = vsel %vm393, %v365, 0
      %v470 = vsel %vm393, %v366, 0
      %v473 = vsel %vm393, %v367, 0
      %v476 = vsel %vm393, %v368, 0
      %v479 = vsel %vm393, %v369, 0
      %v482 = vsel %vm393, %v370, 0
      %v485 = vsel %vm393, %v371, 0
      %v488 = vsel %vm393, %v372, 0
      %v491 = vsel %vm393, %v373, 0
      %v494 = vsel %vm393, %v374, 0
      %v497 = vsel %vm393, %v375, 0
      %v500 = vsel %vm393, %v376, 0
      %v503 = vsel %vm393, %v377, 0
      %v506 = vsel %vm393, %v378, 0
      %v509 = vsel %vm393, %v379, 0
      %v512 = vsel %vm393, %v380, 0
      %v515 = vsel %vm393, %v381, 0
      %v518 = vsel %vm393, %v382, 0
      %v521 = vsel %vm393, %v383, 0
      %v524 = vsel %vm393, %v384, 0
      %v527 = vsel %vm393, %v385, 0
      %v530 = vsel %vm393, %v386, 0
      %v533 = vsel %vm393, %v387, 0
      %v536 = vsel %vm393, %v388, 0
      %538 = vmatpush.msra.mxu0 0.0
      %539 = vmatpush.msra.mxu0 0.0
      %540 = vmatpush.msra.mxu0 0.0
      %541 = vmatpush.msra.mxu0 0.0
      %542 = vmatpush.msra.mxu0 0.0
      %543 = vmatpush.msra.mxu0 0.0
      %544 = vmatpush.msra.mxu0 0.0
      %545 = vmatpush.msra.mxu0 0.0
      %546 = vmatpush.msra.mxu0 0.0
      %547 = vmatpush.msra.mxu0 0.0
      %548 = vmatpush.msra.mxu0 0.0
      %549 = vmatpush.msra.mxu0 0.0
      %550 = vmatpush.msra.mxu0 %v392
      %551 = vmatpush.msra.mxu0 %v391
      %552 = vmatpush.msra.mxu0 %v390
      %553 = vmatpush.msra.mxu0 %v389
      %554 = vmatmul.f32.gmra.mxu0 %v395
      %v555 = vpop.f32.mrf.mxu0
      %v556 = vadd.f32 0.0, %v555
      %557 = vmatmul.f32.gmra.mxu0 %v398
      %v558 = vpop.f32.mrf.mxu0
      %v559 = vadd.f32 0.0, %v558
      %560 = vmatmul.f32.gmra.mxu0 %v401
      %v561 = vpop.f32.mrf.mxu0
      %v562 = vadd.f32 0.0, %v561
      %563 = vmatmul.f32.gmra.mxu0 %v404
      %v564 = vpop.f32.mrf.mxu0
      %v565 = vadd.f32 0.0, %v564
      %566 = vmatmul.f32.gmra.mxu0 %v407
      %v567 = vpop.f32.mrf.mxu0
      %v568 = vadd.f32 0.0, %v567
      %569 = vmatmul.f32.gmra.mxu0 %v410
      %v570 = vpop.f32.mrf.mxu0
      %v571 = vadd.f32 0.0, %v570
      %572 = vmatmul.f32.gmra.mxu0 %v413
      %v573 = vpop.f32.mrf.mxu0
      %v574 = vadd.f32 0.0, %v573
      %575 = vmatmul.f32.gmra.mxu0 %v416
      %v576 = vpop.f32.mrf.mxu0
      %v577 = vadd.f32 0.0, %v576
      %578 = vmatmul.f32.gmra.mxu0 %v419
      %v579 = vpop.f32.mrf.mxu0
      %v580 = vadd.f32 0.0, %v579
      %581 = vmatmul.f32.gmra.mxu0 %v422
      %v582 = vpop.f32.mrf.mxu0
      %v583 = vadd.f32 0.0, %v582
      %584 = vmatmul.f32.gmra.mxu0 %v425
      %v585 = vpop.f32.mrf.mxu0
      %v586 = vadd.f32 0.0, %v585
      %587 = vmatmul.f32.gmra.mxu0 %v428
      %v588 = vpop.f32.mrf.mxu0
      %v589 = vadd.f32 0.0, %v588
      %590 = vmatmul.f32.gmra.mxu0 %v431
      %v591 = vpop.f32.mrf.mxu0
      %v592 = vadd.f32 0.0, %v591
      %593 = vmatmul.f32.gmra.mxu0 %v434
      %v594 = vpop.f32.mrf.mxu0
      %v595 = vadd.f32 0.0, %v594
      %596 = vmatmul.f32.gmra.mxu0 %v437
      %v597 = vpop.f32.mrf.mxu0
      %v598 = vadd.f32 0.0, %v597
      %599 = vmatmul.f32.gmra.mxu0 %v440
      %v600 = vpop.f32.mrf.mxu0
      %v601 = vadd.f32 0.0, %v600
      %602 = vmatmul.f32.gmra.mxu0 %v443
      %v603 = vpop.f32.mrf.mxu0
      %v604 = vadd.f32 0.0, %v603
      %605 = vmatmul.f32.gmra.mxu0 %v446
      %v606 = vpop.f32.mrf.mxu0
      %v607 = vadd.f32 0.0, %v606
      %608 = vmatmul.f32.gmra.mxu0 %v449
      %v609 = vpop.f32.mrf.mxu0
      %v610 = vadd.f32 0.0, %v609
      %611 = vmatmul.f32.gmra.mxu0 %v452
      %v612 = vpop.f32.mrf.mxu0
      %v613 = vadd.f32 0.0, %v612
      %614 = vmatmul.f32.gmra.mxu0 %v455
      %v615 = vpop.f32.mrf.mxu0
      %v616 = vadd.f32 0.0, %v615
      %617 = vmatmul.f32.gmra.mxu0 %v458
      %v618 = vpop.f32.mrf.mxu0
      %v619 = vadd.f32 0.0, %v618
      %620 = vmatmul.f32.gmra.mxu0 %v461
      %v621 = vpop.f32.mrf.mxu0
      %v622 = vadd.f32 0.0, %v621
      %623 = vmatmul.f32.gmra.mxu0 %v464
      %v624 = vpop.f32.mrf.mxu0
      %v625 = vadd.f32 0.0, %v624
      %626 = vmatmul.f32.gmra.mxu0 %v467
      %v627 = vpop.f32.mrf.mxu0
      %v628 = vadd.f32 0.0, %v627
      %629 = vmatmul.f32.gmra.mxu0 %v470
      %v630 = vpop.f32.mrf.mxu0
      %v631 = vadd.f32 0.0, %v630
      %632 = vmatmul.f32.gmra.mxu0 %v473
      %v633 = vpop.f32.mrf.mxu0
      %v634 = vadd.f32 0.0, %v633
      %635 = vmatmul.f32.gmra.mxu0 %v476
      %v636 = vpop.f32.mrf.mxu0
      %v637 = vadd.f32 0.0, %v636
      %638 = vmatmul.f32.gmra.mxu0 %v479
      %v639 = vpop.f32.mrf.mxu0
      %v640 = vadd.f32 0.0, %v639
      %641 = vmatmul.f32.gmra.mxu0 %v482
      %v642 = vpop.f32.mrf.mxu0
      %v643 = vadd.f32 0.0, %v642
      %644 = vmatmul.f32.gmra.mxu0 %v485
      %v645 = vpop.f32.mrf.mxu0
      %v646 = vadd.f32 0.0, %v645
      %647 = vmatmul.f32.gmra.mxu0 %v488
      %v648 = vpop.f32.mrf.mxu0
      %v649 = vadd.f32 0.0, %v648
      %650 = vmatmul.f32.gmra.mxu0 %v491
      %v651 = vpop.f32.mrf.mxu0
      %v652 = vadd.f32 0.0, %v651
      %653 = vmatmul.f32.gmra.mxu0 %v494
      %v654 = vpop.f32.mrf.mxu0
      %v655 = vadd.f32 0.0, %v654
      %656 = vmatmul.f32.gmra.mxu0 %v497
      %v657 = vpop.f32.mrf.mxu0
      %v658 = vadd.f32 0.0, %v657
      %659 = vmatmul.f32.gmra.mxu0 %v500
      %v660 = vpop.f32.mrf.mxu0
      %v661 = vadd.f32 0.0, %v660
      %662 = vmatmul.f32.gmra.mxu0 %v503
      %v663 = vpop.f32.mrf.mxu0
      %v664 = vadd.f32 0.0, %v663
      %665 = vmatmul.f32.gmra.mxu0 %v506
      %v666 = vpop.f32.mrf.mxu0
      %v667 = vadd.f32 0.0, %v666
      %668 = vmatmul.f32.gmra.mxu0 %v509
      %v669 = vpop.f32.mrf.mxu0
      %v670 = vadd.f32 0.0, %v669
      %671 = vmatmul.f32.gmra.mxu0 %v512
      %v672 = vpop.f32.mrf.mxu0
      %v673 = vadd.f32 0.0, %v672
      %674 = vmatmul.f32.gmra.mxu0 %v515
      %v675 = vpop.f32.mrf.mxu0
      %v676 = vadd.f32 0.0, %v675
      %677 = vmatmul.f32.gmra.mxu0 %v518
      %v678 = vpop.f32.mrf.mxu0
      %v679 = vadd.f32 0.0, %v678
      %680 = vmatmul.f32.gmra.mxu0 %v521
      %v681 = vpop.f32.mrf.mxu0
      %v682 = vadd.f32 0.0, %v681
      %683 = vmatmul.f32.gmra.mxu0 %v524
      %v684 = vpop.f32.mrf.mxu0
      %v685 = vadd.f32 0.0, %v684
      %686 = vmatmul.f32.gmra.mxu0 %v527
      %v687 = vpop.f32.mrf.mxu0
      %v688 = vadd.f32 0.0, %v687
      %689 = vmatmul.f32.gmra.mxu0 %v530
      %v690 = vpop.f32.mrf.mxu0
      %v691 = vadd.f32 0.0, %v690
      %692 = vmatmul.f32.gmra.mxu0 %v533
      %v693 = vpop.f32.mrf.mxu0
      %v694 = vadd.f32 0.0, %v693
      %695 = vmatmul.f32.gmra.mxu0 %v536
      %v696 = vpop.f32.mrf.mxu0
      %v697 = vadd.f32 0.0, %v696
      %698 = vdwg.mxu0
      %v699 = vld [vmem:[%s2] sm:$0xff]
      %v700 = vld [vmem:[%s2 + $0x8] sm:$0xff]
      %v701 = vld [vmem:[%s2 + $0x10] sm:$0xff]
      %v702 = vld [vmem:[%s2 + $0x18] sm:$0xff]
      %703 = vmatpush.msra.mxu0 0.0
      %704 = vmatpush.msra.mxu0 0.0
      %705 = vmatpush.msra.mxu0 0.0
      %706 = vmatpush.msra.mxu0 0.0
      %707 = vmatpush.msra.mxu0 0.0
      %708 = vmatpush.msra.mxu0 0.0
      %709 = vmatpush.msra.mxu0 0.0
      %710 = vmatpush.msra.mxu0 0.0
      %711 = vmatpush.msra.mxu0 0.0
      %712 = vmatpush.msra.mxu0 0.0
      %713 = vmatpush.msra.mxu0 0.0
      %714 = vmatpush.msra.mxu0 0.0
      %715 = vmatpush.msra.mxu0 %v702
      %716 = vmatpush.msra.mxu0 %v701
      %717 = vmatpush.msra.mxu0 %v700
      %718 = vmatpush.msra.mxu0 %v699
      %719 = vmatmul.f32.gmra.mxu0 %v395
      %v720 = vpop.f32.mrf.mxu0
      %v721 = vadd.f32 0.0, %v720
      %722 = vmatmul.f32.gmra.mxu0 %v398
      %v723 = vpop.f32.mrf.mxu0
      %v724 = vadd.f32 0.0, %v723
      %725 = vmatmul.f32.gmra.mxu0 %v401
      %v726 = vpop.f32.mrf.mxu0
      %v727 = vadd.f32 0.0, %v726
      %728 = vmatmul.f32.gmra.mxu0 %v404
      %v729 = vpop.f32.mrf.mxu0
      %v730 = vadd.f32 0.0, %v729
      %731 = vmatmul.f32.gmra.mxu0 %v407
      %v732 = vpop.f32.mrf.mxu0
      %v733 = vadd.f32 0.0, %v732
      %734 = vmatmul.f32.gmra.mxu0 %v410
      %v735 = vpop.f32.mrf.mxu0
      %v736 = vadd.f32 0.0, %v735
      %737 = vmatmul.f32.gmra.mxu0 %v413
      %v738 = vpop.f32.mrf.mxu0
      %v739 = vadd.f32 0.0, %v738
      %740 = vmatmul.f32.gmra.mxu0 %v416
      %v741 = vpop.f32.mrf.mxu0
      %v742 = vadd.f32 0.0, %v741
      %743 = vmatmul.f32.gmra.mxu0 %v419
      %v744 = vpop.f32.mrf.mxu0
      %v745 = vadd.f32 0.0, %v744
      %746 = vmatmul.f32.gmra.mxu0 %v422
      %v747 = vpop.f32.mrf.mxu0
      %v748 = vadd.f32 0.0, %v747
      %749 = vmatmul.f32.gmra.mxu0 %v425
      %v750 = vpop.f32.mrf.mxu0
      %v751 = vadd.f32 0.0, %v750
      %752 = vmatmul.f32.gmra.mxu0 %v428
      %v753 = vpop.f32.mrf.mxu0
      %v754 = vadd.f32 0.0, %v753
      %755 = vmatmul.f32.gmra.mxu0 %v431
      %v756 = vpop.f32.mrf.mxu0
      %v757 = vadd.f32 0.0, %v756
      %758 = vmatmul.f32.gmra.mxu0 %v434
      %v759 = vpop.f32.mrf.mxu0
      %v760 = vadd.f32 0.0, %v759
      %761 = vmatmul.f32.gmra.mxu0 %v437
      %v762 = vpop.f32.mrf.mxu0
      %v763 = vadd.f32 0.0, %v762
      %764 = vmatmul.f32.gmra.mxu0 %v440
      %v765 = vpop.f32.mrf.mxu0
      %v766 = vadd.f32 0.0, %v765
      %767 = vmatmul.f32.gmra.mxu0 %v443
      %v768 = vpop.f32.mrf.mxu0
      %v769 = vadd.f32 0.0, %v768
      %770 = vmatmul.f32.gmra.mxu0 %v446
      %v771 = vpop.f32.mrf.mxu0
      %v772 = vadd.f32 0.0, %v771
      %773 = vmatmul.f32.gmra.mxu0 %v449
      %v774 = vpop.f32.mrf.mxu0
      %v775 = vadd.f32 0.0, %v774
      %776 = vmatmul.f32.gmra.mxu0 %v452
      %v777 = vpop.f32.mrf.mxu0
      %v778 = vadd.f32 0.0, %v777
      %779 = vmatmul.f32.gmra.mxu0 %v455
      %v780 = vpop.f32.mrf.mxu0
      %v781 = vadd.f32 0.0, %v780
      %782 = vmatmul.f32.gmra.mxu0 %v458
      %v783 = vpop.f32.mrf.mxu0
      %v784 = vadd.f32 0.0, %v783
      %785 = vmatmul.f32.gmra.mxu0 %v461
      %v786 = vpop.f32.mrf.mxu0
      %v787 = vadd.f32 0.0, %v786
      %788 = vmatmul.f32.gmra.mxu0 %v464
      %v789 = vpop.f32.mrf.mxu0
      %v790 = vadd.f32 0.0, %v789
      %791 = vmatmul.f32.gmra.mxu0 %v467
      %v792 = vpop.f32.mrf.mxu0
      %v793 = vadd.f32 0.0, %v792
      %794 = vmatmul.f32.gmra.mxu0 %v470
      %v795 = vpop.f32.mrf.mxu0
      %v796 = vadd.f32 0.0, %v795
      %797 = vmatmul.f32.gmra.mxu0 %v473
      %v798 = vpop.f32.mrf.mxu0
      %v799 = vadd.f32 0.0, %v798
      %800 = vmatmul.f32.gmra.mxu0 %v476
      %v801 = vpop.f32.mrf.mxu0
      %v802 = vadd.f32 0.0, %v801
      %803 = vmatmul.f32.gmra.mxu0 %v479
      %v804 = vpop.f32.mrf.mxu0
      %v805 = vadd.f32 0.0, %v804
      %806 = vmatmul.f32.gmra.mxu0 %v482
      %v807 = vpop.f32.mrf.mxu0
      %v808 = vadd.f32 0.0, %v807
      %809 = vmatmul.f32.gmra.mxu0 %v485
      %v810 = vpop.f32.mrf.mxu0
      %v811 = vadd.f32 0.0, %v810
      %812 = vmatmul.f32.gmra.mxu0 %v488
      %v813 = vpop.f32.mrf.mxu0
      %v814 = vadd.f32 0.0, %v813
      %815 = vmatmul.f32.gmra.mxu0 %v491
      %v816 = vpop.f32.mrf.mxu0
      %v817 = vadd.f32 0.0, %v816
      %818 = vmatmul.f32.gmra.mxu0 %v494
      %v819 = vpop.f32.mrf.mxu0
      %v820 = vadd.f32 0.0, %v819
      %821 = vmatmul.f32.gmra.mxu0 %v497
      %v822 = vpop.f32.mrf.mxu0
      %v823 = vadd.f32 0.0, %v822
      %824 = vmatmul.f32.gmra.mxu0 %v500
      %v825 = vpop.f32.mrf.mxu0
      %v826 = vadd.f32 0.0, %v825
      %827 = vmatmul.f32.gmra.mxu0 %v503
      %v828 = vpop.f32.mrf.mxu0
      %v829 = vadd.f32 0.0, %v828
      %830 = vmatmul.f32.gmra.mxu0 %v506
      %v831 = vpop.f32.mrf.mxu0
      %v832 = vadd.f32 0.0, %v831
      %833 = vmatmul.f32.gmra.mxu0 %v509
      %v834 = vpop.f32.mrf.mxu0
      %v835 = vadd.f32 0.0, %v834
      %836 = vmatmul.f32.gmra.mxu0 %v512
      %v837 = vpop.f32.mrf.mxu0
      %v838 = vadd.f32 0.0, %v837
      %839 = vmatmul.f32.gmra.mxu0 %v515
      %v840 = vpop.f32.mrf.mxu0
      %v841 = vadd.f32 0.0, %v840
      %842 = vmatmul.f32.gmra.mxu0 %v518
      %v843 = vpop.f32.mrf.mxu0
      %v844 = vadd.f32 0.0, %v843
      %845 = vmatmul.f32.gmra.mxu0 %v521
      %v846 = vpop.f32.mrf.mxu0
      %v847 = vadd.f32 0.0, %v846
      %848 = vmatmul.f32.gmra.mxu0 %v524
      %v849 = vpop.f32.mrf.mxu0
      %v850 = vadd.f32 0.0, %v849
      %851 = vmatmul.f32.gmra.mxu0 %v527
      %v852 = vpop.f32.mrf.mxu0
      %v853 = vadd.f32 0.0, %v852
      %854 = vmatmul.f32.gmra.mxu0 %v530
      %v855 = vpop.f32.mrf.mxu0
      %v856 = vadd.f32 0.0, %v855
      %857 = vmatmul.f32.gmra.mxu0 %v533
      %v858 = vpop.f32.mrf.mxu0
      %v859 = vadd.f32 0.0, %v858
      %860 = vmatmul.f32.gmra.mxu0 %v536
      %v861 = vpop.f32.mrf.mxu0
      %v862 = vadd.f32 0.0, %v861
      %863 = vdwg.mxu0
      %v864 = vld [vmem:[%s3] sm:$0xff]
      %v865 = vld [vmem:[%s3 + $0x8] sm:$0xff]
      %v866 = vld [vmem:[%s3 + $0x10] sm:$0xff]
      %v867 = vld [vmem:[%s3 + $0x18] sm:$0xff]
      %868 = vmatpush.msra.mxu0 0.0
      %869 = vmatpush.msra.mxu0 0.0
      %870 = vmatpush.msra.mxu0 0.0
      %871 = vmatpush.msra.mxu0 0.0
      %872 = vmatpush.msra.mxu0 0.0
      %873 = vmatpush.msra.mxu0 0.0
      %874 = vmatpush.msra.mxu0 0.0
      %875 = vmatpush.msra.mxu0 0.0
      %876 = vmatpush.msra.mxu0 0.0
      %877 = vmatpush.msra.mxu0 0.0
      %878 = vmatpush.msra.mxu0 0.0
      %879 = vmatpush.msra.mxu0 0.0
      %880 = vmatpush.msra.mxu0 %v867
      %881 = vmatpush.msra.mxu0 %v866
      %882 = vmatpush.msra.mxu0 %v865
      %883 = vmatpush.msra.mxu0 %v864
      %884 = vmatmul.f32.gmra.mxu0 %v395
      %v885 = vpop.f32.mrf.mxu0
      %v886 = vadd.f32 0.0, %v885
      %887 = vmatmul.f32.gmra.mxu0 %v398
      %v888 = vpop.f32.mrf.mxu0
      %v889 = vadd.f32 0.0, %v888
      %890 = vmatmul.f32.gmra.mxu0 %v401
      %v891 = vpop.f32.mrf.mxu0
      %v892 = vadd.f32 0.0, %v891
      %893 = vmatmul.f32.gmra.mxu0 %v404
      %v894 = vpop.f32.mrf.mxu0
      %v895 = vadd.f32 0.0, %v894
      %896 = vmatmul.f32.gmra.mxu0 %v407
      %v897 = vpop.f32.mrf.mxu0
      %v898 = vadd.f32 0.0, %v897
      %899 = vmatmul.f32.gmra.mxu0 %v410
      %v900 = vpop.f32.mrf.mxu0
      %v901 = vadd.f32 0.0, %v900
      %902 = vmatmul.f32.gmra.mxu0 %v413
      %v903 = vpop.f32.mrf.mxu0
      %v904 = vadd.f32 0.0, %v903
      %905 = vmatmul.f32.gmra.mxu0 %v416
      %v906 = vpop.f32.mrf.mxu0
      %v907 = vadd.f32 0.0, %v906
      %908 = vmatmul.f32.gmra.mxu0 %v419
      %v909 = vpop.f32.mrf.mxu0
      %v910 = vadd.f32 0.0, %v909
      %911 = vmatmul.f32.gmra.mxu0 %v422
      %v912 = vpop.f32.mrf.mxu0
      %v913 = vadd.f32 0.0, %v912
      %914 = vmatmul.f32.gmra.mxu0 %v425
      %v915 = vpop.f32.mrf.mxu0
      %v916 = vadd.f32 0.0, %v915
      %917 = vmatmul.f32.gmra.mxu0 %v428
      %v918 = vpop.f32.mrf.mxu0
      %v919 = vadd.f32 0.0, %v918
      %920 = vmatmul.f32.gmra.mxu0 %v431
      %v921 = vpop.f32.mrf.mxu0
      %v922 = vadd.f32 0.0, %v921
      %923 = vmatmul.f32.gmra.mxu0 %v434
      %v924 = vpop.f32.mrf.mxu0
      %v925 = vadd.f32 0.0, %v924
      %926 = vmatmul.f32.gmra.mxu0 %v437
      %v927 = vpop.f32.mrf.mxu0
      %v928 = vadd.f32 0.0, %v927
      %929 = vmatmul.f32.gmra.mxu0 %v440
      %v930 = vpop.f32.mrf.mxu0
      %v931 = vadd.f32 0.0, %v930
      %932 = vmatmul.f32.gmra.mxu0 %v443
      %v933 = vpop.f32.mrf.mxu0
      %v934 = vadd.f32 0.0, %v933
      %935 = vmatmul.f32.gmra.mxu0 %v446
      %v936 = vpop.f32.mrf.mxu0
      %v937 = vadd.f32 0.0, %v936
      %938 = vmatmul.f32.gmra.mxu0 %v449
      %v939 = vpop.f32.mrf.mxu0
      %v940 = vadd.f32 0.0, %v939
      %941 = vmatmul.f32.gmra.mxu0 %v452
      %v942 = vpop.f32.mrf.mxu0
      %v943 = vadd.f32 0.0, %v942
      %944 = vmatmul.f32.gmra.mxu0 %v455
      %v945 = vpop.f32.mrf.mxu0
      %v946 = vadd.f32 0.0, %v945
      %947 = vmatmul.f32.gmra.mxu0 %v458
      %v948 = vpop.f32.mrf.mxu0
      %v949 = vadd.f32 0.0, %v948
      %950 = vmatmul.f32.gmra.mxu0 %v461
      %v951 = vpop.f32.mrf.mxu0
      %v952 = vadd.f32 0.0, %v951
      %953 = vmatmul.f32.gmra.mxu0 %v464
      %v954 = vpop.f32.mrf.mxu0
      %v955 = vadd.f32 0.0, %v954
      %956 = vmatmul.f32.gmra.mxu0 %v467
      %v957 = vpop.f32.mrf.mxu0
      %v958 = vadd.f32 0.0, %v957
      %959 = vmatmul.f32.gmra.mxu0 %v470
      %v960 = vpop.f32.mrf.mxu0
      %v961 = vadd.f32 0.0, %v960
      %962 = vmatmul.f32.gmra.mxu0 %v473
      %v963 = vpop.f32.mrf.mxu0
      %v964 = vadd.f32 0.0, %v963
      %965 = vmatmul.f32.gmra.mxu0 %v476
      %v966 = vpop.f32.mrf.mxu0
      %v967 = vadd.f32 0.0, %v966
      %968 = vmatmul.f32.gmra.mxu0 %v479
      %v969 = vpop.f32.mrf.mxu0
      %v970 = vadd.f32 0.0, %v969
      %971 = vmatmul.f32.gmra.mxu0 %v482
      %v972 = vpop.f32.mrf.mxu0
      %v973 = vadd.f32 0.0, %v972
      %974 = vmatmul.f32.gmra.mxu0 %v485
      %v975 = vpop.f32.mrf.mxu0
      %v976 = vadd.f32 0.0, %v975
      %977 = vmatmul.f32.gmra.mxu0 %v488
      %v978 = vpop.f32.mrf.mxu0
      %v979 = vadd.f32 0.0, %v978
      %980 = vmatmul.f32.gmra.mxu0 %v491
      %v981 = vpop.f32.mrf.mxu0
      %v982 = vadd.f32 0.0, %v981
      %983 = vmatmul.f32.gmra.mxu0 %v494
      %v984 = vpop.f32.mrf.mxu0
      %v985 = vadd.f32 0.0, %v984
      %986 = vmatmul.f32.gmra.mxu0 %v497
      %v987 = vpop.f32.mrf.mxu0
      %v988 = vadd.f32 0.0, %v987
      %989 = vmatmul.f32.gmra.mxu0 %v500
      %v990 = vpop.f32.mrf.mxu0
      %v991 = vadd.f32 0.0, %v990
      %992 = vmatmul.f32.gmra.mxu0 %v503
      %v993 = vpop.f32.mrf.mxu0
      %v994 = vadd.f32 0.0, %v993
      %995 = vmatmul.f32.gmra.mxu0 %v506
      %v996 = vpop.f32.mrf.mxu0
      %v997 = vadd.f32 0.0, %v996
      %998 = vmatmul.f32.gmra.mxu0 %v509
      %v999 = vpop.f32.mrf.mxu0
      %v1000 = vadd.f32 0.0, %v999
      %1001 = vmatmul.f32.gmra.mxu0 %v512
      %v1002 = vpop.f32.mrf.mxu0
      %v1003 = vadd.f32 0.0, %v1002
      %1004 = vmatmul.f32.gmra.mxu0 %v515
      %v1005 = vpop.f32.mrf.mxu0
      %v1006 = vadd.f32 0.0, %v1005
      %1007 = vmatmul.f32.gmra.mxu0 %v518
      %v1008 = vpop.f32.mrf.mxu0
      %v1009 = vadd.f32 0.0, %v1008
      %1010 = vmatmul.f32.gmra.mxu0 %v521
      %v1011 = vpop.f32.mrf.mxu0
      %v1012 = vadd.f32 0.0, %v1011
      %1013 = vmatmul.f32.gmra.mxu0 %v524
      %v1014 = vpop.f32.mrf.mxu0
      %v1015 = vadd.f32 0.0, %v1014
      %1016 = vmatmul.f32.gmra.mxu0 %v527
      %v1017 = vpop.f32.mrf.mxu0
      %v1018 = vadd.f32 0.0, %v1017
      %1019 = vmatmul.f32.gmra.mxu0 %v530
      %v1020 = vpop.f32.mrf.mxu0
      %v1021 = vadd.f32 0.0, %v1020
      %1022 = vmatmul.f32.gmra.mxu0 %v533
      %v1023 = vpop.f32.mrf.mxu0
      %v1024 = vadd.f32 0.0, %v1023
      %1025 = vmatmul.f32.gmra.mxu0 %v536
      %v1026 = vpop.f32.mrf.mxu0
      %v1027 = vadd.f32 0.0, %v1026
      %1028 = vdwg.mxu0
      %v1029 = vld [vmem:[%s7] sm:$0xf]
      %v1031 = vrot.slane %v1029, 1
      %v1032 = vrot.slane %v1029, 2
      %v1033 = vrot.slane %v1029, 3
      %v1034 = vperm.slane %v1029, 0
      %v1035 = vperm.slane %v1031, 0
      %v1036 = vperm.slane %v1032, 0
      %v1037 = vperm.slane %v1033, 0
      %v1042 = vmul.f32 %v721, %v1034
      %v1043 = vmul.f32 %v724, %v1034
      %v1044 = vmul.f32 %v727, %v1034
      %v1045 = vmul.f32 %v730, %v1034
      %v1046 = vmul.f32 %v721, %v1035
      %v1047 = vmul.f32 %v724, %v1035
      %v1048 = vmul.f32 %v727, %v1035
      %v1049 = vmul.f32 %v730, %v1035
      %v1050 = vmul.f32 %v721, %v1036
      %v1051 = vmul.f32 %v724, %v1036
      %v1052 = vmul.f32 %v727, %v1036
      %v1053 = vmul.f32 %v730, %v1036
      %v1054 = vmul.f32 %v721, %v1037
      %v1055 = vmul.f32 %v724, %v1037
      %v1056 = vmul.f32 %v727, %v1037
      %v1057 = vmul.f32 %v730, %v1037
      %v1058 = vmul.f32 %v733, %v1034
      %v1059 = vmul.f32 %v736, %v1034
      %v1060 = vmul.f32 %v739, %v1034
      %v1061 = vmul.f32 %v742, %v1034
      %v1062 = vmul.f32 %v733, %v1035
      %v1063 = vmul.f32 %v736, %v1035
      %v1064 = vmul.f32 %v739, %v1035
      %v1065 = vmul.f32 %v742, %v1035
      %v1066 = vmul.f32 %v733, %v1036
      %v1067 = vmul.f32 %v736, %v1036
      %v1068 = vmul.f32 %v739, %v1036
      %v1069 = vmul.f32 %v742, %v1036
      %v1070 = vmul.f32 %v733, %v1037
      %v1071 = vmul.f32 %v736, %v1037
      %v1072 = vmul.f32 %v739, %v1037
      %v1073 = vmul.f32 %v742, %v1037
      %v1074 = vmul.f32 %v745, %v1034
      %v1075 = vmul.f32 %v748, %v1034
      %v1076 = vmul.f32 %v751, %v1034
      %v1077 = vmul.f32 %v754, %v1034
      %v1078 = vmul.f32 %v745, %v1035
      %v1079 = vmul.f32 %v748, %v1035
      %v1080 = vmul.f32 %v751, %v1035
      %v1081 = vmul.f32 %v754, %v1035
      %v1082 = vmul.f32 %v745, %v1036
      %v1083 = vmul.f32 %v748, %v1036
      %v1084 = vmul.f32 %v751, %v1036
      %v1085 = vmul.f32 %v754, %v1036
      %v1086 = vmul.f32 %v745, %v1037
      %v1087 = vmul.f32 %v748, %v1037
      %v1088 = vmul.f32 %v751, %v1037
      %v1089 = vmul.f32 %v754, %v1037
      %v1090 = vmul.f32 %v757, %v1034
      %v1091 = vmul.f32 %v760, %v1034
      %v1092 = vmul.f32 %v763, %v1034
      %v1093 = vmul.f32 %v766, %v1034
      %v1094 = vmul.f32 %v757, %v1035
      %v1095 = vmul.f32 %v760, %v1035
      %v1096 = vmul.f32 %v763, %v1035
      %v1097 = vmul.f32 %v766, %v1035
      %v1098 = vmul.f32 %v757, %v1036
      %v1099 = vmul.f32 %v760, %v1036
      %v1100 = vmul.f32 %v763, %v1036
      %v1101 = vmul.f32 %v766, %v1036
      %v1102 = vmul.f32 %v757, %v1037
      %v1103 = vmul.f32 %v760, %v1037
      %v1104 = vmul.f32 %v763, %v1037
      %v1105 = vmul.f32 %v766, %v1037
      %v1106 = vmul.f32 %v769, %v1034
      %v1107 = vmul.f32 %v772, %v1034
      %v1108 = vmul.f32 %v775, %v1034
      %v1109 = vmul.f32 %v778, %v1034
      %v1110 = vmul.f32 %v769, %v1035
      %v1111 = vmul.f32 %v772, %v1035
      %v1112 = vmul.f32 %v775, %v1035
      %v1113 = vmul.f32 %v778, %v1035
      %v1114 = vmul.f32 %v769, %v1036
      %v1115 = vmul.f32 %v772, %v1036
      %v1116 = vmul.f32 %v775, %v1036
      %v1117 = vmul.f32 %v778, %v1036
      %v1118 = vmul.f32 %v769, %v1037
      %v1119 = vmul.f32 %v772, %v1037
      %v1120 = vmul.f32 %v775, %v1037
      %v1121 = vmul.f32 %v778, %v1037
      %v1122 = vmul.f32 %v781, %v1034
      %v1123 = vmul.f32 %v784, %v1034
      %v1124 = vmul.f32 %v787, %v1034
      %v1125 = vmul.f32 %v790, %v1034
      %v1126 = vmul.f32 %v781, %v1035
      %v1127 = vmul.f32 %v784, %v1035
      %v1128 = vmul.f32 %v787, %v1035
      %v1129 = vmul.f32 %v790, %v1035
      %v1130 = vmul.f32 %v781, %v1036
      %v1131 = vmul.f32 %v784, %v1036
      %v1132 = vmul.f32 %v787, %v1036
      %v1133 = vmul.f32 %v790, %v1036
      %v1134 = vmul.f32 %v781, %v1037
      %v1135 = vmul.f32 %v784, %v1037
      %v1136 = vmul.f32 %v787, %v1037
      %v1137 = vmul.f32 %v790, %v1037
      %v1138 = vmul.f32 %v793, %v1034
      %v1139 = vmul.f32 %v796, %v1034
      %v1140 = vmul.f32 %v799, %v1034
      %v1141 = vmul.f32 %v802, %v1034
      %v1142 = vmul.f32 %v793, %v1035
      %v1143 = vmul.f32 %v796, %v1035
      %v1144 = vmul.f32 %v799, %v1035
      %v1145 = vmul.f32 %v802, %v1035
      %v1146 = vmul.f32 %v793, %v1036
      %v1147 = vmul.f32 %v796, %v1036
      %v1148 = vmul.f32 %v799, %v1036
      %v1149 = vmul.f32 %v802, %v1036
      %v1150 = vmul.f32 %v793, %v1037
      %v1151 = vmul.f32 %v796, %v1037
      %v1152 = vmul.f32 %v799, %v1037
      %v1153 = vmul.f32 %v802, %v1037
      %v1154 = vmul.f32 %v805, %v1034
      %v1155 = vmul.f32 %v808, %v1034
      %v1156 = vmul.f32 %v811, %v1034
      %v1157 = vmul.f32 %v814, %v1034
      %v1158 = vmul.f32 %v805, %v1035
      %v1159 = vmul.f32 %v808, %v1035
      %v1160 = vmul.f32 %v811, %v1035
      %v1161 = vmul.f32 %v814, %v1035
      %v1162 = vmul.f32 %v805, %v1036
      %v1163 = vmul.f32 %v808, %v1036
      %v1164 = vmul.f32 %v811, %v1036
      %v1165 = vmul.f32 %v814, %v1036
      %v1166 = vmul.f32 %v805, %v1037
      %v1167 = vmul.f32 %v808, %v1037
      %v1168 = vmul.f32 %v811, %v1037
      %v1169 = vmul.f32 %v814, %v1037
      %v1170 = vmul.f32 %v817, %v1034
      %v1171 = vmul.f32 %v820, %v1034
      %v1172 = vmul.f32 %v823, %v1034
      %v1173 = vmul.f32 %v826, %v1034
      %v1174 = vmul.f32 %v817, %v1035
      %v1175 = vmul.f32 %v820, %v1035
      %v1176 = vmul.f32 %v823, %v1035
      %v1177 = vmul.f32 %v826, %v1035
      %v1178 = vmul.f32 %v817, %v1036
      %v1179 = vmul.f32 %v820, %v1036
      %v1180 = vmul.f32 %v823, %v1036
      %v1181 = vmul.f32 %v826, %v1036
      %v1182 = vmul.f32 %v817, %v1037
      %v1183 = vmul.f32 %v820, %v1037
      %v1184 = vmul.f32 %v823, %v1037
      %v1185 = vmul.f32 %v826, %v1037
      %v1186 = vmul.f32 %v829, %v1034
      %v1187 = vmul.f32 %v832, %v1034
      %v1188 = vmul.f32 %v835, %v1034
      %v1189 = vmul.f32 %v838, %v1034
      %v1190 = vmul.f32 %v829, %v1035
      %v1191 = vmul.f32 %v832, %v1035
      %v1192 = vmul.f32 %v835, %v1035
      %v1193 = vmul.f32 %v838, %v1035
      %v1194 = vmul.f32 %v829, %v1036
      %v1195 = vmul.f32 %v832, %v1036
      %v1196 = vmul.f32 %v835, %v1036
      %v1197 = vmul.f32 %v838, %v1036
      %v1198 = vmul.f32 %v829, %v1037
      %v1199 = vmul.f32 %v832, %v1037
      %v1200 = vmul.f32 %v835, %v1037
      %v1201 = vmul.f32 %v838, %v1037
      %v1202 = vmul.f32 %v841, %v1034
      %v1203 = vmul.f32 %v844, %v1034
      %v1204 = vmul.f32 %v847, %v1034
      %v1205 = vmul.f32 %v850, %v1034
      %v1206 = vmul.f32 %v841, %v1035
      %v1207 = vmul.f32 %v844, %v1035
      %v1208 = vmul.f32 %v847, %v1035
      %v1209 = vmul.f32 %v850, %v1035
      %v1210 = vmul.f32 %v841, %v1036
      %v1211 = vmul.f32 %v844, %v1036
      %v1212 = vmul.f32 %v847, %v1036
      %v1213 = vmul.f32 %v850, %v1036
      %v1214 = vmul.f32 %v841, %v1037
      %v1215 = vmul.f32 %v844, %v1037
      %v1216 = vmul.f32 %v847, %v1037
      %v1217 = vmul.f32 %v850, %v1037
      %v1218 = vmul.f32 %v853, %v1034
      %v1219 = vmul.f32 %v856, %v1034
      %v1220 = vmul.f32 %v859, %v1034
      %v1221 = vmul.f32 %v862, %v1034
      %v1222 = vmul.f32 %v853, %v1035
      %v1223 = vmul.f32 %v856, %v1035
      %v1224 = vmul.f32 %v859, %v1035
      %v1225 = vmul.f32 %v862, %v1035
      %v1226 = vmul.f32 %v853, %v1036
      %v1227 = vmul.f32 %v856, %v1036
      %v1228 = vmul.f32 %v859, %v1036
      %v1229 = vmul.f32 %v862, %v1036
      %v1230 = vmul.f32 %v853, %v1037
      %v1231 = vmul.f32 %v856, %v1037
      %v1232 = vmul.f32 %v859, %v1037
      %v1233 = vmul.f32 %v862, %v1037
      %v1234 = vmul.f32 %v886, %v1034
      %v1235 = vmul.f32 %v889, %v1034
      %v1236 = vmul.f32 %v892, %v1034
      %v1237 = vmul.f32 %v895, %v1034
      %v1238 = vmul.f32 %v886, %v1035
      %v1239 = vmul.f32 %v889, %v1035
      %v1240 = vmul.f32 %v892, %v1035
      %v1241 = vmul.f32 %v895, %v1035
      %v1242 = vmul.f32 %v886, %v1036
      %v1243 = vmul.f32 %v889, %v1036
      %v1244 = vmul.f32 %v892, %v1036
      %v1245 = vmul.f32 %v895, %v1036
      %v1246 = vmul.f32 %v886, %v1037
      %v1247 = vmul.f32 %v889, %v1037
      %v1248 = vmul.f32 %v892, %v1037
      %v1249 = vmul.f32 %v895, %v1037
      %v1250 = vmul.f32 %v898, %v1034
      %v1251 = vmul.f32 %v901, %v1034
      %v1252 = vmul.f32 %v904, %v1034
      %v1253 = vmul.f32 %v907, %v1034
      %v1254 = vmul.f32 %v898, %v1035
      %v1255 = vmul.f32 %v901, %v1035
      %v1256 = vmul.f32 %v904, %v1035
      %v1257 = vmul.f32 %v907, %v1035
      %v1258 = vmul.f32 %v898, %v1036
      %v1259 = vmul.f32 %v901, %v1036
      %v1260 = vmul.f32 %v904, %v1036
      %v1261 = vmul.f32 %v907, %v1036
      %v1262 = vmul.f32 %v898, %v1037
      %v1263 = vmul.f32 %v901, %v1037
      %v1264 = vmul.f32 %v904, %v1037
      %v1265 = vmul.f32 %v907, %v1037
      %v1266 = vmul.f32 %v910, %v1034
      %v1267 = vmul.f32 %v913, %v1034
      %v1268 = vmul.f32 %v916, %v1034
      %v1269 = vmul.f32 %v919, %v1034
      %v1270 = vmul.f32 %v910, %v1035
      %v1271 = vmul.f32 %v913, %v1035
      %v1272 = vmul.f32 %v916, %v1035
      %v1273 = vmul.f32 %v919, %v1035
      %v1274 = vmul.f32 %v910, %v1036
      %v1275 = vmul.f32 %v913, %v1036
      %v1276 = vmul.f32 %v916, %v1036
      %v1277 = vmul.f32 %v919, %v1036
      %v1278 = vmul.f32 %v910, %v1037
      %v1279 = vmul.f32 %v913, %v1037
      %v1280 = vmul.f32 %v916, %v1037
      %v1281 = vmul.f32 %v919, %v1037
      %v1282 = vmul.f32 %v922, %v1034
      %v1283 = vmul.f32 %v925, %v1034
      %v1284 = vmul.f32 %v928, %v1034
      %v1285 = vmul.f32 %v931, %v1034
      %v1286 = vmul.f32 %v922, %v1035
      %v1287 = vmul.f32 %v925, %v1035
      %v1288 = vmul.f32 %v928, %v1035
      %v1289 = vmul.f32 %v931, %v1035
      %v1290 = vmul.f32 %v922, %v1036
      %v1291 = vmul.f32 %v925, %v1036
      %v1292 = vmul.f32 %v928, %v1036
      %v1293 = vmul.f32 %v931, %v1036
      %v1294 = vmul.f32 %v922, %v1037
      %v1295 = vmul.f32 %v925, %v1037
      %v1296 = vmul.f32 %v928, %v1037
      %v1297 = vmul.f32 %v931, %v1037
      %v1298 = vmul.f32 %v934, %v1034
      %v1299 = vmul.f32 %v937, %v1034
      %v1300 = vmul.f32 %v940, %v1034
      %v1301 = vmul.f32 %v943, %v1034
      %v1302 = vmul.f32 %v934, %v1035
      %v1303 = vmul.f32 %v937, %v1035
      %v1304 = vmul.f32 %v940, %v1035
      %v1305 = vmul.f32 %v943, %v1035
      %v1306 = vmul.f32 %v934, %v1036
      %v1307 = vmul.f32 %v937, %v1036
      %v1308 = vmul.f32 %v940, %v1036
      %v1309 = vmul.f32 %v943, %v1036
      %v1310 = vmul.f32 %v934, %v1037
      %v1311 = vmul.f32 %v937, %v1037
      %v1312 = vmul.f32 %v940, %v1037
      %v1313 = vmul.f32 %v943, %v1037
      %v1314 = vmul.f32 %v946, %v1034
      %v1315 = vmul.f32 %v949, %v1034
      %v1316 = vmul.f32 %v952, %v1034
      %v1317 = vmul.f32 %v955, %v1034
      %v1318 = vmul.f32 %v946, %v1035
      %v1319 = vmul.f32 %v949, %v1035
      %v1320 = vmul.f32 %v952, %v1035
      %v1321 = vmul.f32 %v955, %v1035
      %v1322 = vmul.f32 %v946, %v1036
      %v1323 = vmul.f32 %v949, %v1036
      %v1324 = vmul.f32 %v952, %v1036
      %v1325 = vmul.f32 %v955, %v1036
      %v1326 = vmul.f32 %v946, %v1037
      %v1327 = vmul.f32 %v949, %v1037
      %v1328 = vmul.f32 %v952, %v1037
      %v1329 = vmul.f32 %v955, %v1037
      %v1330 = vmul.f32 %v958, %v1034
      %v1331 = vmul.f32 %v961, %v1034
      %v1332 = vmul.f32 %v964, %v1034
      %v1333 = vmul.f32 %v967, %v1034
      %v1334 = vmul.f32 %v958, %v1035
      %v1335 = vmul.f32 %v961, %v1035
      %v1336 = vmul.f32 %v964, %v1035
      %v1337 = vmul.f32 %v967, %v1035
      %v1338 = vmul.f32 %v958, %v1036
      %v1339 = vmul.f32 %v961, %v1036
      %v1340 = vmul.f32 %v964, %v1036
      %v1341 = vmul.f32 %v967, %v1036
      %v1342 = vmul.f32 %v958, %v1037
      %v1343 = vmul.f32 %v961, %v1037
      %v1344 = vmul.f32 %v964, %v1037
      %v1345 = vmul.f32 %v967, %v1037
      %v1346 = vmul.f32 %v970, %v1034
      %v1347 = vmul.f32 %v973, %v1034
      %v1348 = vmul.f32 %v976, %v1034
      %v1349 = vmul.f32 %v979, %v1034
      %v1350 = vmul.f32 %v970, %v1035
      %v1351 = vmul.f32 %v973, %v1035
      %v1352 = vmul.f32 %v976, %v1035
      %v1353 = vmul.f32 %v979, %v1035
      %v1354 = vmul.f32 %v970, %v1036
      %v1355 = vmul.f32 %v973, %v1036
      %v1356 = vmul.f32 %v976, %v1036
      %v1357 = vmul.f32 %v979, %v1036
      %v1358 = vmul.f32 %v970, %v1037
      %v1359 = vmul.f32 %v973, %v1037
      %v1360 = vmul.f32 %v976, %v1037
      %v1361 = vmul.f32 %v979, %v1037
      %v1362 = vmul.f32 %v982, %v1034
      %v1363 = vmul.f32 %v985, %v1034
      %v1364 = vmul.f32 %v988, %v1034
      %v1365 = vmul.f32 %v991, %v1034
      %v1366 = vmul.f32 %v982, %v1035
      %v1367 = vmul.f32 %v985, %v1035
      %v1368 = vmul.f32 %v988, %v1035
      %v1369 = vmul.f32 %v991, %v1035
      %v1370 = vmul.f32 %v982, %v1036
      %v1371 = vmul.f32 %v985, %v1036
      %v1372 = vmul.f32 %v988, %v1036
      %v1373 = vmul.f32 %v991, %v1036
      %v1374 = vmul.f32 %v982, %v1037
      %v1375 = vmul.f32 %v985, %v1037
      %v1376 = vmul.f32 %v988, %v1037
      %v1377 = vmul.f32 %v991, %v1037
      %v1378 = vmul.f32 %v994, %v1034
      %v1379 = vmul.f32 %v997, %v1034
      %v1380 = vmul.f32 %v1000, %v1034
      %v1381 = vmul.f32 %v1003, %v1034
      %v1382 = vmul.f32 %v994, %v1035
      %v1383 = vmul.f32 %v997, %v1035
      %v1384 = vmul.f32 %v1000, %v1035
      %v1385 = vmul.f32 %v1003, %v1035
      %v1386 = vmul.f32 %v994, %v1036
      %v1387 = vmul.f32 %v997, %v1036
      %v1388 = vmul.f32 %v1000, %v1036
      %v1389 = vmul.f32 %v1003, %v1036
      %v1390 = vmul.f32 %v994, %v1037
      %v1391 = vmul.f32 %v997, %v1037
      %v1392 = vmul.f32 %v1000, %v1037
      %v1393 = vmul.f32 %v1003, %v1037
      %v1394 = vmul.f32 %v1006, %v1034
      %v1395 = vmul.f32 %v1009, %v1034
      %v1396 = vmul.f32 %v1012, %v1034
      %v1397 = vmul.f32 %v1015, %v1034
      %v1398 = vmul.f32 %v1006, %v1035
      %v1399 = vmul.f32 %v1009, %v1035
      %v1400 = vmul.f32 %v1012, %v1035
      %v1401 = vmul.f32 %v1015, %v1035
      %v1402 = vmul.f32 %v1006, %v1036
      %v1403 = vmul.f32 %v1009, %v1036
      %v1404 = vmul.f32 %v1012, %v1036
      %v1405 = vmul.f32 %v1015, %v1036
      %v1406 = vmul.f32 %v1006, %v1037
      %v1407 = vmul.f32 %v1009, %v1037
      %v1408 = vmul.f32 %v1012, %v1037
      %v1409 = vmul.f32 %v1015, %v1037
      %v1410 = vmul.f32 %v1018, %v1034
      %v1411 = vmul.f32 %v1021, %v1034
      %v1412 = vmul.f32 %v1024, %v1034
      %v1413 = vmul.f32 %v1027, %v1034
      %v1414 = vmul.f32 %v1018, %v1035
      %v1415 = vmul.f32 %v1021, %v1035
      %v1416 = vmul.f32 %v1024, %v1035
      %v1417 = vmul.f32 %v1027, %v1035
      %v1418 = vmul.f32 %v1018, %v1036
      %v1419 = vmul.f32 %v1021, %v1036
      %v1420 = vmul.f32 %v1024, %v1036
      %v1421 = vmul.f32 %v1027, %v1036
      %v1422 = vmul.f32 %v1018, %v1037
      %v1423 = vmul.f32 %v1021, %v1037
      %v1424 = vmul.f32 %v1024, %v1037
      %v1425 = vmul.f32 %v1027, %v1037
      %v1426 = vld [vmem:[%s6] sm:$0xff]
      %v1427 = vld [vmem:[%s6 + $0x8] sm:$0xff]
      %v1428 = vld [vmem:[%s6 + $0x10] sm:$0xff]
      %v1429 = vld [vmem:[%s6 + $0x18] sm:$0xff]
      %v1431 = vsel %vm393, %v556, 0
      %v1434 = vsel %vm393, %v559, 0
      %v1437 = vsel %vm393, %v562, 0
      %v1440 = vsel %vm393, %v565, 0
      %v1443 = vsel %vm393, %v1042, 0
      %v1446 = vsel %vm393, %v1043, 0
      %v1449 = vsel %vm393, %v1044, 0
      %v1452 = vsel %vm393, %v1045, 0
      %v1455 = vsel %vm393, %v1046, 0
      %v1458 = vsel %vm393, %v1047, 0
      %v1461 = vsel %vm393, %v1048, 0
      %v1464 = vsel %vm393, %v1049, 0
      %v1467 = vsel %vm393, %v1050, 0
      %v1470 = vsel %vm393, %v1051, 0
      %v1473 = vsel %vm393, %v1052, 0
      %v1476 = vsel %vm393, %v1053, 0
      %v1479 = vsel %vm393, %v1054, 0
      %v1482 = vsel %vm393, %v1055, 0
      %v1485 = vsel %vm393, %v1056, 0
      %v1488 = vsel %vm393, %v1057, 0
      %1490 = vmatpush.xpose.msra.mxu0 %v1488
      %1491 = vmatpush.xpose.msra.mxu0 %v1485
      %1492 = vmatpush.xpose.msra.mxu0 %v1482
      %1493 = vmatpush.xpose.msra.mxu0 %v1479
      %1494 = vmatpush.xpose.msra.mxu0 %v1476
      %1495 = vmatpush.xpose.msra.mxu0 %v1473
      %1496 = vmatpush.xpose.msra.mxu0 %v1470
      %1497 = vmatpush.xpose.msra.mxu0 %v1467
      %1498 = vmatpush.xpose.msra.mxu0 %v1464
      %1499 = vmatpush.xpose.msra.mxu0 %v1461
      %1500 = vmatpush.xpose.msra.mxu0 %v1458
      %1501 = vmatpush.xpose.msra.mxu0 %v1455
      %1502 = vmatpush.xpose.msra.mxu0 %v1452
      %1503 = vmatpush.xpose.msra.mxu0 %v1449
      %1504 = vmatpush.xpose.msra.mxu0 %v1446
      %1505 = vmatpush.xpose.msra.mxu0 %v1443
      %1506 = vmatmul.f32.gmra.mxu0 %v1431
      %v1507 = vpop.f32.mrf.mxu0
      %v1508 = vadd.f32 %v1426, %v1507
      %1509 = vmatmul.f32.gmra.mxu0 %v1434
      %v1510 = vpop.f32.mrf.mxu0
      %v1511 = vadd.f32 %v1427, %v1510
      %1512 = vmatmul.f32.gmra.mxu0 %v1437
      %v1513 = vpop.f32.mrf.mxu0
      %v1514 = vadd.f32 %v1428, %v1513
      %1515 = vmatmul.f32.gmra.mxu0 %v1440
      %v1516 = vpop.f32.mrf.mxu0
      %v1517 = vadd.f32 %v1429, %v1516
      %1518 = vdwg.mxu0
      %v1520 = vsel %vm393, %v568, 0
      %v1523 = vsel %vm393, %v571, 0
      %v1526 = vsel %vm393, %v574, 0
      %v1529 = vsel %vm393, %v577, 0
      %v1532 = vsel %vm393, %v1058, 0
      %v1535 = vsel %vm393, %v1059, 0
      %v1538 = vsel %vm393, %v1060, 0
      %v1541 = vsel %vm393, %v1061, 0
      %v1544 = vsel %vm393, %v1062, 0
      %v1547 = vsel %vm393, %v1063, 0
      %v1550 = vsel %vm393, %v1064, 0
      %v1553 = vsel %vm393, %v1065, 0
      %v1556 = vsel %vm393, %v1066, 0
      %v1559 = vsel %vm393, %v1067, 0
      %v1562 = vsel %vm393, %v1068, 0
      %v1565 = vsel %vm393, %v1069, 0
      %v1568 = vsel %vm393, %v1070, 0
      %v1571 = vsel %vm393, %v1071, 0
      %v1574 = vsel %vm393, %v1072, 0
      %v1577 = vsel %vm393, %v1073, 0
      %1579 = vmatpush.xpose.msra.mxu0 %v1577
      %1580 = vmatpush.xpose.msra.mxu0 %v1574
      %1581 = vmatpush.xpose.msra.mxu0 %v1571
      %1582 = vmatpush.xpose.msra.mxu0 %v1568
      %1583 = vmatpush.xpose.msra.mxu0 %v1565
      %1584 = vmatpush.xpose.msra.mxu0 %v1562
      %1585 = vmatpush.xpose.msra.mxu0 %v1559
      %1586 = vmatpush.xpose.msra.mxu0 %v1556
      %1587 = vmatpush.xpose.msra.mxu0 %v1553
      %1588 = vmatpush.xpose.msra.mxu0 %v1550
      %1589 = vmatpush.xpose.msra.mxu0 %v1547
      %1590 = vmatpush.xpose.msra.mxu0 %v1544
      %1591 = vmatpush.xpose.msra.mxu0 %v1541
      %1592 = vmatpush.xpose.msra.mxu0 %v1538
      %1593 = vmatpush.xpose.msra.mxu0 %v1535
      %1594 = vmatpush.xpose.msra.mxu0 %v1532
      %1595 = vmatmul.f32.gmra.mxu0 %v1520
      %v1596 = vpop.f32.mrf.mxu0
      %v1597 = vadd.f32 %v1426, %v1596
      %1598 = vmatmul.f32.gmra.mxu0 %v1523
      %v1599 = vpop.f32.mrf.mxu0
      %v1600 = vadd.f32 %v1427, %v1599
      %1601 = vmatmul.f32.gmra.mxu0 %v1526
      %v1602 = vpop.f32.mrf.mxu0
      %v1603 = vadd.f32 %v1428, %v1602
      %1604 = vmatmul.f32.gmra.mxu0 %v1529
      %v1605 = vpop.f32.mrf.mxu0
      %v1606 = vadd.f32 %v1429, %v1605
      %1607 = vdwg.mxu0
      %v1609 = vsel %vm393, %v580, 0
      %v1612 = vsel %vm393, %v583, 0
      %v1615 = vsel %vm393, %v586, 0
      %v1618 = vsel %vm393, %v589, 0
      %v1621 = vsel %vm393, %v1074, 0
      %v1624 = vsel %vm393, %v1075, 0
      %v1627 = vsel %vm393, %v1076, 0
      %v1630 = vsel %vm393, %v1077, 0
      %v1633 = vsel %vm393, %v1078, 0
      %v1636 = vsel %vm393, %v1079, 0
      %v1639 = vsel %vm393, %v1080, 0
      %v1642 = vsel %vm393, %v1081, 0
      %v1645 = vsel %vm393, %v1082, 0
      %v1648 = vsel %vm393, %v1083, 0
      %v1651 = vsel %vm393, %v1084, 0
      %v1654 = vsel %vm393, %v1085, 0
      %v1657 = vsel %vm393, %v1086, 0
      %v1660 = vsel %vm393, %v1087, 0
      %v1663 = vsel %vm393, %v1088, 0
      %v1666 = vsel %vm393, %v1089, 0
      %1668 = vmatpush.xpose.msra.mxu0 %v1666
      %1669 = vmatpush.xpose.msra.mxu0 %v1663
      %1670 = vmatpush.xpose.msra.mxu0 %v1660
      %1671 = vmatpush.xpose.msra.mxu0 %v1657
      %1672 = vmatpush.xpose.msra.mxu0 %v1654
      %1673 = vmatpush.xpose.msra.mxu0 %v1651
      %1674 = vmatpush.xpose.msra.mxu0 %v1648
      %1675 = vmatpush.xpose.msra.mxu0 %v1645
      %1676 = vmatpush.xpose.msra.mxu0 %v1642
      %1677 = vmatpush.xpose.msra.mxu0 %v1639
      %1678 = vmatpush.xpose.msra.mxu0 %v1636
      %1679 = vmatpush.xpose.msra.mxu0 %v1633
      %1680 = vmatpush.xpose.msra.mxu0 %v1630
      %1681 = vmatpush.xpose.msra.mxu0 %v1627
      %1682 = vmatpush.xpose.msra.mxu0 %v1624
      %1683 = vmatpush.xpose.msra.mxu0 %v1621
      %1684 = vmatmul.f32.gmra.mxu0 %v1609
      %v1685 = vpop.f32.mrf.mxu0
      %v1686 = vadd.f32 %v1426, %v1685
      %1687 = vmatmul.f32.gmra.mxu0 %v1612
      %v1688 = vpop.f32.mrf.mxu0
      %v1689 = vadd.f32 %v1427, %v1688
      %1690 = vmatmul.f32.gmra.mxu0 %v1615
      %v1691 = vpop.f32.mrf.mxu0
      %v1692 = vadd.f32 %v1428, %v1691
      %1693 = vmatmul.f32.gmra.mxu0 %v1618
      %v1694 = vpop.f32.mrf.mxu0
      %v1695 = vadd.f32 %v1429, %v1694
      %1696 = vdwg.mxu0
      %v1698 = vsel %vm393, %v592, 0
      %v1701 = vsel %vm393, %v595, 0
      %v1704 = vsel %vm393, %v598, 0
      %v1707 = vsel %vm393, %v601, 0
      %v1710 = vsel %vm393, %v1090, 0
      %v1713 = vsel %vm393, %v1091, 0
      %v1716 = vsel %vm393, %v1092, 0
      %v1719 = vsel %vm393, %v1093, 0
      %v1722 = vsel %vm393, %v1094, 0
      %v1725 = vsel %vm393, %v1095, 0
      %v1728 = vsel %vm393, %v1096, 0
      %v1731 = vsel %vm393, %v1097, 0
      %v1734 = vsel %vm393, %v1098, 0
      %v1737 = vsel %vm393, %v1099, 0
      %v1740 = vsel %vm393, %v1100, 0
      %v1743 = vsel %vm393, %v1101, 0
      %v1746 = vsel %vm393, %v1102, 0
      %v1749 = vsel %vm393, %v1103, 0
      %v1752 = vsel %vm393, %v1104, 0
      %v1755 = vsel %vm393, %v1105, 0
      %1757 = vmatpush.xpose.msra.mxu0 %v1755
      %1758 = vmatpush.xpose.msra.mxu0 %v1752
      %1759 = vmatpush.xpose.msra.mxu0 %v1749
      %1760 = vmatpush.xpose.msra.mxu0 %v1746
      %1761 = vmatpush.xpose.msra.mxu0 %v1743
      %1762 = vmatpush.xpose.msra.mxu0 %v1740
      %1763 = vmatpush.xpose.msra.mxu0 %v1737
      %1764 = vmatpush.xpose.msra.mxu0 %v1734
      %1765 = vmatpush.xpose.msra.mxu0 %v1731
      %1766 = vmatpush.xpose.msra.mxu0 %v1728
      %1767 = vmatpush.xpose.msra.mxu0 %v1725
      %1768 = vmatpush.xpose.msra.mxu0 %v1722
      %1769 = vmatpush.xpose.msra.mxu0 %v1719
      %1770 = vmatpush.xpose.msra.mxu0 %v1716
      %1771 = vmatpush.xpose.msra.mxu0 %v1713
      %1772 = vmatpush.xpose.msra.mxu0 %v1710
      %1773 = vmatmul.f32.gmra.mxu0 %v1698
      %v1774 = vpop.f32.mrf.mxu0
      %v1775 = vadd.f32 %v1426, %v1774
      %1776 = vmatmul.f32.gmra.mxu0 %v1701
      %v1777 = vpop.f32.mrf.mxu0
      %v1778 = vadd.f32 %v1427, %v1777
      %1779 = vmatmul.f32.gmra.mxu0 %v1704
      %v1780 = vpop.f32.mrf.mxu0
      %v1781 = vadd.f32 %v1428, %v1780
      %1782 = vmatmul.f32.gmra.mxu0 %v1707
      %v1783 = vpop.f32.mrf.mxu0
      %v1784 = vadd.f32 %v1429, %v1783
      %1785 = vdwg.mxu0
      %v1787 = vsel %vm393, %v604, 0
      %v1790 = vsel %vm393, %v607, 0
      %v1793 = vsel %vm393, %v610, 0
      %v1796 = vsel %vm393, %v613, 0
      %v1799 = vsel %vm393, %v1106, 0
      %v1802 = vsel %vm393, %v1107, 0
      %v1805 = vsel %vm393, %v1108, 0
      %v1808 = vsel %vm393, %v1109, 0
      %v1811 = vsel %vm393, %v1110, 0
      %v1814 = vsel %vm393, %v1111, 0
      %v1817 = vsel %vm393, %v1112, 0
      %v1820 = vsel %vm393, %v1113, 0
      %v1823 = vsel %vm393, %v1114, 0
      %v1826 = vsel %vm393, %v1115, 0
      %v1829 = vsel %vm393, %v1116, 0
      %v1832 = vsel %vm393, %v1117, 0
      %v1835 = vsel %vm393, %v1118, 0
      %v1838 = vsel %vm393, %v1119, 0
      %v1841 = vsel %vm393, %v1120, 0
      %v1844 = vsel %vm393, %v1121, 0
      %1846 = vmatpush.xpose.msra.mxu0 %v1844
      %1847 = vmatpush.xpose.msra.mxu0 %v1841
      %1848 = vmatpush.xpose.msra.mxu0 %v1838
      %1849 = vmatpush.xpose.msra.mxu0 %v1835
      %1850 = vmatpush.xpose.msra.mxu0 %v1832
      %1851 = vmatpush.xpose.msra.mxu0 %v1829
      %1852 = vmatpush.xpose.msra.mxu0 %v1826
      %1853 = vmatpush.xpose.msra.mxu0 %v1823
      %1854 = vmatpush.xpose.msra.mxu0 %v1820
      %1855 = vmatpush.xpose.msra.mxu0 %v1817
      %1856 = vmatpush.xpose.msra.mxu0 %v1814
      %1857 = vmatpush.xpose.msra.mxu0 %v1811
      %1858 = vmatpush.xpose.msra.mxu0 %v1808
      %1859 = vmatpush.xpose.msra.mxu0 %v1805
      %1860 = vmatpush.xpose.msra.mxu0 %v1802
      %1861 = vmatpush.xpose.msra.mxu0 %v1799
      %1862 = vmatmul.f32.gmra.mxu0 %v1787
      %v1863 = vpop.f32.mrf.mxu0
      %v1864 = vadd.f32 %v1426, %v1863
      %1865 = vmatmul.f32.gmra.mxu0 %v1790
      %v1866 = vpop.f32.mrf.mxu0
      %v1867 = vadd.f32 %v1427, %v1866
      %1868 = vmatmul.f32.gmra.mxu0 %v1793
      %v1869 = vpop.f32.mrf.mxu0
      %v1870 = vadd.f32 %v1428, %v1869
      %1871 = vmatmul.f32.gmra.mxu0 %v1796
      %v1872 = vpop.f32.mrf.mxu0
      %v1873 = vadd.f32 %v1429, %v1872
      %1874 = vdwg.mxu0
      %v1876 = vsel %vm393, %v616, 0
      %v1879 = vsel %vm393, %v619, 0
      %v1882 = vsel %vm393, %v622, 0
      %v1885 = vsel %vm393, %v625, 0
      %v1888 = vsel %vm393, %v1122, 0
      %v1891 = vsel %vm393, %v1123, 0
      %v1894 = vsel %vm393, %v1124, 0
      %v1897 = vsel %vm393, %v1125, 0
      %v1900 = vsel %vm393, %v1126, 0
      %v1903 = vsel %vm393, %v1127, 0
      %v1906 = vsel %vm393, %v1128, 0
      %v1909 = vsel %vm393, %v1129, 0
      %v1912 = vsel %vm393, %v1130, 0
      %v1915 = vsel %vm393, %v1131, 0
      %v1918 = vsel %vm393, %v1132, 0
      %v1921 = vsel %vm393, %v1133, 0
      %v1924 = vsel %vm393, %v1134, 0
      %v1927 = vsel %vm393, %v1135, 0
      %v1930 = vsel %vm393, %v1136, 0
      %v1933 = vsel %vm393, %v1137, 0
      %1935 = vmatpush.xpose.msra.mxu0 %v1933
      %1936 = vmatpush.xpose.msra.mxu0 %v1930
      %1937 = vmatpush.xpose.msra.mxu0 %v1927
      %1938 = vmatpush.xpose.msra.mxu0 %v1924
      %1939 = vmatpush.xpose.msra.mxu0 %v1921
      %1940 = vmatpush.xpose.msra.mxu0 %v1918
      %1941 = vmatpush.xpose.msra.mxu0 %v1915
      %1942 = vmatpush.xpose.msra.mxu0 %v1912
      %1943 = vmatpush.xpose.msra.mxu0 %v1909
      %1944 = vmatpush.xpose.msra.mxu0 %v1906
      %1945 = vmatpush.xpose.msra.mxu0 %v1903
      %1946 = vmatpush.xpose.msra.mxu0 %v1900
      %1947 = vmatpush.xpose.msra.mxu0 %v1897
      %1948 = vmatpush.xpose.msra.mxu0 %v1894
      %1949 = vmatpush.xpose.msra.mxu0 %v1891
      %1950 = vmatpush.xpose.msra.mxu0 %v1888
      %1951 = vmatmul.f32.gmra.mxu0 %v1876
      %v1952 = vpop.f32.mrf.mxu0
      %v1953 = vadd.f32 %v1426, %v1952
      %1954 = vmatmul.f32.gmra.mxu0 %v1879
      %v1955 = vpop.f32.mrf.mxu0
      %v1956 = vadd.f32 %v1427, %v1955
      %1957 = vmatmul.f32.gmra.mxu0 %v1882
      %v1958 = vpop.f32.mrf.mxu0
      %v1959 = vadd.f32 %v1428, %v1958
      %1960 = vmatmul.f32.gmra.mxu0 %v1885
      %v1961 = vpop.f32.mrf.mxu0
      %v1962 = vadd.f32 %v1429, %v1961
      %1963 = vdwg.mxu0
      %v1965 = vsel %vm393, %v628, 0
      %v1968 = vsel %vm393, %v631, 0
      %v1971 = vsel %vm393, %v634, 0
      %v1974 = vsel %vm393, %v637, 0
      %v1977 = vsel %vm393, %v1138, 0
      %v1980 = vsel %vm393, %v1139, 0
      %v1983 = vsel %vm393, %v1140, 0
      %v1986 = vsel %vm393, %v1141, 0
      %v1989 = vsel %vm393, %v1142, 0
      %v1992 = vsel %vm393, %v1143, 0
      %v1995 = vsel %vm393, %v1144, 0
      %v1998 = vsel %vm393, %v1145, 0
      %v2001 = vsel %vm393, %v1146, 0
      %v2004 = vsel %vm393, %v1147, 0
      %v2007 = vsel %vm393, %v1148, 0
      %v2010 = vsel %vm393, %v1149, 0
      %v2013 = vsel %vm393, %v1150, 0
      %v2016 = vsel %vm393, %v1151, 0
      %v2019 = vsel %vm393, %v1152, 0
      %v2022 = vsel %vm393, %v1153, 0
      %2024 = vmatpush.xpose.msra.mxu0 %v2022
      %2025 = vmatpush.xpose.msra.mxu0 %v2019
      %2026 = vmatpush.xpose.msra.mxu0 %v2016
      %2027 = vmatpush.xpose.msra.mxu0 %v2013
      %2028 = vmatpush.xpose.msra.mxu0 %v2010
      %2029 = vmatpush.xpose.msra.mxu0 %v2007
      %2030 = vmatpush.xpose.msra.mxu0 %v2004
      %2031 = vmatpush.xpose.msra.mxu0 %v2001
      %2032 = vmatpush.xpose.msra.mxu0 %v1998
      %2033 = vmatpush.xpose.msra.mxu0 %v1995
      %2034 = vmatpush.xpose.msra.mxu0 %v1992
      %2035 = vmatpush.xpose.msra.mxu0 %v1989
      %2036 = vmatpush.xpose.msra.mxu0 %v1986
      %2037 = vmatpush.xpose.msra.mxu0 %v1983
      %2038 = vmatpush.xpose.msra.mxu0 %v1980
      %2039 = vmatpush.xpose.msra.mxu0 %v1977
      %2040 = vmatmul.f32.gmra.mxu0 %v1965
      %v2041 = vpop.f32.mrf.mxu0
      %v2042 = vadd.f32 %v1426, %v2041
      %2043 = vmatmul.f32.gmra.mxu0 %v1968
      %v2044 = vpop.f32.mrf.mxu0
      %v2045 = vadd.f32 %v1427, %v2044
      %2046 = vmatmul.f32.gmra.mxu0 %v1971
      %v2047 = vpop.f32.mrf.mxu0
      %v2048 = vadd.f32 %v1428, %v2047
      %2049 = vmatmul.f32.gmra.mxu0 %v1974
      %v2050 = vpop.f32.mrf.mxu0
      %v2051 = vadd.f32 %v1429, %v2050
      %2052 = vdwg.mxu0
      %v2054 = vsel %vm393, %v640, 0
      %v2057 = vsel %vm393, %v643, 0
      %v2060 = vsel %vm393, %v646, 0
      %v2063 = vsel %vm393, %v649, 0
      %v2066 = vsel %vm393, %v1154, 0
      %v2069 = vsel %vm393, %v1155, 0
      %v2072 = vsel %vm393, %v1156, 0
      %v2075 = vsel %vm393, %v1157, 0
      %v2078 = vsel %vm393, %v1158, 0
      %v2081 = vsel %vm393, %v1159, 0
      %v2084 = vsel %vm393, %v1160, 0
      %v2087 = vsel %vm393, %v1161, 0
      %v2090 = vsel %vm393, %v1162, 0
      %v2093 = vsel %vm393, %v1163, 0
      %v2096 = vsel %vm393, %v1164, 0
      %v2099 = vsel %vm393, %v1165, 0
      %v2102 = vsel %vm393, %v1166, 0
      %v2105 = vsel %vm393, %v1167, 0
      %v2108 = vsel %vm393, %v1168, 0
      %v2111 = vsel %vm393, %v1169, 0
      %2113 = vmatpush.xpose.msra.mxu0 %v2111
      %2114 = vmatpush.xpose.msra.mxu0 %v2108
      %2115 = vmatpush.xpose.msra.mxu0 %v2105
      %2116 = vmatpush.xpose.msra.mxu0 %v2102
      %2117 = vmatpush.xpose.msra.mxu0 %v2099
      %2118 = vmatpush.xpose.msra.mxu0 %v2096
      %2119 = vmatpush.xpose.msra.mxu0 %v2093
      %2120 = vmatpush.xpose.msra.mxu0 %v2090
      %2121 = vmatpush.xpose.msra.mxu0 %v2087
      %2122 = vmatpush.xpose.msra.mxu0 %v2084
      %2123 = vmatpush.xpose.msra.mxu0 %v2081
      %2124 = vmatpush.xpose.msra.mxu0 %v2078
      %2125 = vmatpush.xpose.msra.mxu0 %v2075
      %2126 = vmatpush.xpose.msra.mxu0 %v2072
      %2127 = vmatpush.xpose.msra.mxu0 %v2069
      %2128 = vmatpush.xpose.msra.mxu0 %v2066
      %2129 = vmatmul.f32.gmra.mxu0 %v2054
      %v2130 = vpop.f32.mrf.mxu0
      %v2131 = vadd.f32 %v1426, %v2130
      %2132 = vmatmul.f32.gmra.mxu0 %v2057
      %v2133 = vpop.f32.mrf.mxu0
      %v2134 = vadd.f32 %v1427, %v2133
      %2135 = vmatmul.f32.gmra.mxu0 %v2060
      %v2136 = vpop.f32.mrf.mxu0
      %v2137 = vadd.f32 %v1428, %v2136
      %2138 = vmatmul.f32.gmra.mxu0 %v2063
      %v2139 = vpop.f32.mrf.mxu0
      %v2140 = vadd.f32 %v1429, %v2139
      %2141 = vdwg.mxu0
      %v2143 = vsel %vm393, %v652, 0
      %v2146 = vsel %vm393, %v655, 0
      %v2149 = vsel %vm393, %v658, 0
      %v2152 = vsel %vm393, %v661, 0
      %v2155 = vsel %vm393, %v1170, 0
      %v2158 = vsel %vm393, %v1171, 0
      %v2161 = vsel %vm393, %v1172, 0
      %v2164 = vsel %vm393, %v1173, 0
      %v2167 = vsel %vm393, %v1174, 0
      %v2170 = vsel %vm393, %v1175, 0
      %v2173 = vsel %vm393, %v1176, 0
      %v2176 = vsel %vm393, %v1177, 0
      %v2179 = vsel %vm393, %v1178, 0
      %v2182 = vsel %vm393, %v1179, 0
      %v2185 = vsel %vm393, %v1180, 0
      %v2188 = vsel %vm393, %v1181, 0
      %v2191 = vsel %vm393, %v1182, 0
      %v2194 = vsel %vm393, %v1183, 0
      %v2197 = vsel %vm393, %v1184, 0
      %v2200 = vsel %vm393, %v1185, 0
      %2202 = vmatpush.xpose.msra.mxu0 %v2200
      %2203 = vmatpush.xpose.msra.mxu0 %v2197
      %2204 = vmatpush.xpose.msra.mxu0 %v2194
      %2205 = vmatpush.xpose.msra.mxu0 %v2191
      %2206 = vmatpush.xpose.msra.mxu0 %v2188
      %2207 = vmatpush.xpose.msra.mxu0 %v2185
      %2208 = vmatpush.xpose.msra.mxu0 %v2182
      %2209 = vmatpush.xpose.msra.mxu0 %v2179
      %2210 = vmatpush.xpose.msra.mxu0 %v2176
      %2211 = vmatpush.xpose.msra.mxu0 %v2173
      %2212 = vmatpush.xpose.msra.mxu0 %v2170
      %2213 = vmatpush.xpose.msra.mxu0 %v2167
      %2214 = vmatpush.xpose.msra.mxu0 %v2164
      %2215 = vmatpush.xpose.msra.mxu0 %v2161
      %2216 = vmatpush.xpose.msra.mxu0 %v2158
      %2217 = vmatpush.xpose.msra.mxu0 %v2155
      %2218 = vmatmul.f32.gmra.mxu0 %v2143
      %v2219 = vpop.f32.mrf.mxu0
      %v2220 = vadd.f32 %v1426, %v2219
      %2221 = vmatmul.f32.gmra.mxu0 %v2146
      %v2222 = vpop.f32.mrf.mxu0
      %v2223 = vadd.f32 %v1427, %v2222
      %2224 = vmatmul.f32.gmra.mxu0 %v2149
      %v2225 = vpop.f32.mrf.mxu0
      %v2226 = vadd.f32 %v1428, %v2225
      %2227 = vmatmul.f32.gmra.mxu0 %v2152
      %v2228 = vpop.f32.mrf.mxu0
      %v2229 = vadd.f32 %v1429, %v2228
      %2230 = vdwg.mxu0
      %v2232 = vsel %vm393, %v664, 0
      %v2235 = vsel %vm393, %v667, 0
      %v2238 = vsel %vm393, %v670, 0
      %v2241 = vsel %vm393, %v673, 0
      %v2244 = vsel %vm393, %v1186, 0
      %v2247 = vsel %vm393, %v1187, 0
      %v2250 = vsel %vm393, %v1188, 0
      %v2253 = vsel %vm393, %v1189, 0
      %v2256 = vsel %vm393, %v1190, 0
      %v2259 = vsel %vm393, %v1191, 0
      %v2262 = vsel %vm393, %v1192, 0
      %v2265 = vsel %vm393, %v1193, 0
      %v2268 = vsel %vm393, %v1194, 0
      %v2271 = vsel %vm393, %v1195, 0
      %v2274 = vsel %vm393, %v1196, 0
      %v2277 = vsel %vm393, %v1197, 0
      %v2280 = vsel %vm393, %v1198, 0
      %v2283 = vsel %vm393, %v1199, 0
      %v2286 = vsel %vm393, %v1200, 0
      %v2289 = vsel %vm393, %v1201, 0
      %2291 = vmatpush.xpose.msra.mxu0 %v2289
      %2292 = vmatpush.xpose.msra.mxu0 %v2286
      %2293 = vmatpush.xpose.msra.mxu0 %v2283
      %2294 = vmatpush.xpose.msra.mxu0 %v2280
      %2295 = vmatpush.xpose.msra.mxu0 %v2277
      %2296 = vmatpush.xpose.msra.mxu0 %v2274
      %2297 = vmatpush.xpose.msra.mxu0 %v2271
      %2298 = vmatpush.xpose.msra.mxu0 %v2268
      %2299 = vmatpush.xpose.msra.mxu0 %v2265
      %2300 = vmatpush.xpose.msra.mxu0 %v2262
      %2301 = vmatpush.xpose.msra.mxu0 %v2259
      %2302 = vmatpush.xpose.msra.mxu0 %v2256
      %2303 = vmatpush.xpose.msra.mxu0 %v2253
      %2304 = vmatpush.xpose.msra.mxu0 %v2250
      %2305 = vmatpush.xpose.msra.mxu0 %v2247
      %2306 = vmatpush.xpose.msra.mxu0 %v2244
      %2307 = vmatmul.f32.gmra.mxu0 %v2232
      %v2308 = vpop.f32.mrf.mxu0
      %v2309 = vadd.f32 %v1426, %v2308
      %2310 = vmatmul.f32.gmra.mxu0 %v2235
      %v2311 = vpop.f32.mrf.mxu0
      %v2312 = vadd.f32 %v1427, %v2311
      %2313 = vmatmul.f32.gmra.mxu0 %v2238
      %v2314 = vpop.f32.mrf.mxu0
      %v2315 = vadd.f32 %v1428, %v2314
      %2316 = vmatmul.f32.gmra.mxu0 %v2241
      %v2317 = vpop.f32.mrf.mxu0
      %v2318 = vadd.f32 %v1429, %v2317
      %2319 = vdwg.mxu0
      %v2321 = vsel %vm393, %v676, 0
      %v2324 = vsel %vm393, %v679, 0
      %v2327 = vsel %vm393, %v682, 0
      %v2330 = vsel %vm393, %v685, 0
      %v2333 = vsel %vm393, %v1202, 0
      %v2336 = vsel %vm393, %v1203, 0
      %v2339 = vsel %vm393, %v1204, 0
      %v2342 = vsel %vm393, %v1205, 0
      %v2345 = vsel %vm393, %v1206, 0
      %v2348 = vsel %vm393, %v1207, 0
      %v2351 = vsel %vm393, %v1208, 0
      %v2354 = vsel %vm393, %v1209, 0
      %v2357 = vsel %vm393, %v1210, 0
      %v2360 = vsel %vm393, %v1211, 0
      %v2363 = vsel %vm393, %v1212, 0
      %v2366 = vsel %vm393, %v1213, 0
      %v2369 = vsel %vm393, %v1214, 0
      %v2372 = vsel %vm393, %v1215, 0
      %v2375 = vsel %vm393, %v1216, 0
      %v2378 = vsel %vm393, %v1217, 0
      %2380 = vmatpush.xpose.msra.mxu0 %v2378
      %2381 = vmatpush.xpose.msra.mxu0 %v2375
      %2382 = vmatpush.xpose.msra.mxu0 %v2372
      %2383 = vmatpush.xpose.msra.mxu0 %v2369
      %2384 = vmatpush.xpose.msra.mxu0 %v2366
      %2385 = vmatpush.xpose.msra.mxu0 %v2363
      %2386 = vmatpush.xpose.msra.mxu0 %v2360
      %2387 = vmatpush.xpose.msra.mxu0 %v2357
      %2388 = vmatpush.xpose.msra.mxu0 %v2354
      %2389 = vmatpush.xpose.msra.mxu0 %v2351
      %2390 = vmatpush.xpose.msra.mxu0 %v2348
      %2391 = vmatpush.xpose.msra.mxu0 %v2345
      %2392 = vmatpush.xpose.msra.mxu0 %v2342
      %2393 = vmatpush.xpose.msra.mxu0 %v2339
      %2394 = vmatpush.xpose.msra.mxu0 %v2336
      %2395 = vmatpush.xpose.msra.mxu0 %v2333
      %2396 = vmatmul.f32.gmra.mxu0 %v2321
      %v2397 = vpop.f32.mrf.mxu0
      %v2398 = vadd.f32 %v1426, %v2397
      %2399 = vmatmul.f32.gmra.mxu0 %v2324
      %v2400 = vpop.f32.mrf.mxu0
      %v2401 = vadd.f32 %v1427, %v2400
      %2402 = vmatmul.f32.gmra.mxu0 %v2327
      %v2403 = vpop.f32.mrf.mxu0
      %v2404 = vadd.f32 %v1428, %v2403
      %2405 = vmatmul.f32.gmra.mxu0 %v2330
      %v2406 = vpop.f32.mrf.mxu0
      %v2407 = vadd.f32 %v1429, %v2406
      %2408 = vdwg.mxu0
      %v2410 = vsel %vm393, %v688, 0
      %v2413 = vsel %vm393, %v691, 0
      %v2416 = vsel %vm393, %v694, 0
      %v2419 = vsel %vm393, %v697, 0
      %v2422 = vsel %vm393, %v1218, 0
      %v2425 = vsel %vm393, %v1219, 0
      %v2428 = vsel %vm393, %v1220, 0
      %v2431 = vsel %vm393, %v1221, 0
      %v2434 = vsel %vm393, %v1222, 0
      %v2437 = vsel %vm393, %v1223, 0
      %v2440 = vsel %vm393, %v1224, 0
      %v2443 = vsel %vm393, %v1225, 0
      %v2446 = vsel %vm393, %v1226, 0
      %v2449 = vsel %vm393, %v1227, 0
      %v2452 = vsel %vm393, %v1228, 0
      %v2455 = vsel %vm393, %v1229, 0
      %v2458 = vsel %vm393, %v1230, 0
      %v2461 = vsel %vm393, %v1231, 0
      %v2464 = vsel %vm393, %v1232, 0
      %v2467 = vsel %vm393, %v1233, 0
      %2469 = vmatpush.xpose.msra.mxu0 %v2467
      %2470 = vmatpush.xpose.msra.mxu0 %v2464
      %2471 = vmatpush.xpose.msra.mxu0 %v2461
      %2472 = vmatpush.xpose.msra.mxu0 %v2458
      %2473 = vmatpush.xpose.msra.mxu0 %v2455
      %2474 = vmatpush.xpose.msra.mxu0 %v2452
      %2475 = vmatpush.xpose.msra.mxu0 %v2449
      %2476 = vmatpush.xpose.msra.mxu0 %v2446
      %2477 = vmatpush.xpose.msra.mxu0 %v2443
      %2478 = vmatpush.xpose.msra.mxu0 %v2440
      %2479 = vmatpush.xpose.msra.mxu0 %v2437
      %2480 = vmatpush.xpose.msra.mxu0 %v2434
      %2481 = vmatpush.xpose.msra.mxu0 %v2431
      %2482 = vmatpush.xpose.msra.mxu0 %v2428
      %2483 = vmatpush.xpose.msra.mxu0 %v2425
      %2484 = vmatpush.xpose.msra.mxu0 %v2422
      %2485 = vmatmul.f32.gmra.mxu0 %v2410
      %v2486 = vpop.f32.mrf.mxu0
      %v2487 = vadd.f32 %v1426, %v2486
      %2488 = vmatmul.f32.gmra.mxu0 %v2413
      %v2489 = vpop.f32.mrf.mxu0
      %v2490 = vadd.f32 %v1427, %v2489
      %2491 = vmatmul.f32.gmra.mxu0 %v2416
      %v2492 = vpop.f32.mrf.mxu0
      %v2493 = vadd.f32 %v1428, %v2492
      %2494 = vmatmul.f32.gmra.mxu0 %v2419
      %v2495 = vpop.f32.mrf.mxu0
      %v2496 = vadd.f32 %v1429, %v2495
      %2497 = vdwg.mxu0
      %2498 = vmax.xlane.f32.xlu0 %v1508
      %v2499 = vpop.xlane.xlu0 %2498
      %2500 = vmax.xlane.f32.xlu0 %v1511
      %v2501 = vpop.xlane.xlu0 %2500
      %2502 = vmax.xlane.f32.xlu0 %v1514
      %v2503 = vpop.xlane.xlu0 %2502
      %2504 = vmax.xlane.f32.xlu0 %v1517
      %v2505 = vpop.xlane.xlu0 %2504
      %2506 = vmax.xlane.f32.xlu0 %v1597
      %v2507 = vpop.xlane.xlu0 %2506
      %2508 = vmax.xlane.f32.xlu0 %v1600
      %v2509 = vpop.xlane.xlu0 %2508
      %2510 = vmax.xlane.f32.xlu0 %v1603
      %v2511 = vpop.xlane.xlu0 %2510
      %2512 = vmax.xlane.f32.xlu0 %v1606
      %v2513 = vpop.xlane.xlu0 %2512
      %2514 = vmax.xlane.f32.xlu0 %v1686
      %v2515 = vpop.xlane.xlu0 %2514
      %2516 = vmax.xlane.f32.xlu0 %v1689
      %v2517 = vpop.xlane.xlu0 %2516
      %2518 = vmax.xlane.f32.xlu0 %v1692
      %v2519 = vpop.xlane.xlu0 %2518
      %2520 = vmax.xlane.f32.xlu0 %v1695
      %v2521 = vpop.xlane.xlu0 %2520
      %2522 = vmax.xlane.f32.xlu0 %v1775
      %v2523 = vpop.xlane.xlu0 %2522
      %2524 = vmax.xlane.f32.xlu0 %v1778
      %v2525 = vpop.xlane.xlu0 %2524
      %2526 = vmax.xlane.f32.xlu0 %v1781
      %v2527 = vpop.xlane.xlu0 %2526
      %2528 = vmax.xlane.f32.xlu0 %v1784
      %v2529 = vpop.xlane.xlu0 %2528
      %2530 = vmax.xlane.f32.xlu0 %v1864
      %v2531 = vpop.xlane.xlu0 %2530
      %2532 = vmax.xlane.f32.xlu0 %v1867
      %v2533 = vpop.xlane.xlu0 %2532
      %2534 = vmax.xlane.f32.xlu0 %v1870
      %v2535 = vpop.xlane.xlu0 %2534
      %2536 = vmax.xlane.f32.xlu0 %v1873
      %v2537 = vpop.xlane.xlu0 %2536
      %2538 = vmax.xlane.f32.xlu0 %v1953
      %v2539 = vpop.xlane.xlu0 %2538
      %2540 = vmax.xlane.f32.xlu0 %v1956
      %v2541 = vpop.xlane.xlu0 %2540
      %2542 = vmax.xlane.f32.xlu0 %v1959
      %v2543 = vpop.xlane.xlu0 %2542
      %2544 = vmax.xlane.f32.xlu0 %v1962
      %v2545 = vpop.xlane.xlu0 %2544
      %2546 = vmax.xlane.f32.xlu0 %v2042
      %v2547 = vpop.xlane.xlu0 %2546
      %2548 = vmax.xlane.f32.xlu0 %v2045
      %v2549 = vpop.xlane.xlu0 %2548
      %2550 = vmax.xlane.f32.xlu0 %v2048
      %v2551 = vpop.xlane.xlu0 %2550
      %2552 = vmax.xlane.f32.xlu0 %v2051
      %v2553 = vpop.xlane.xlu0 %2552
      %2554 = vmax.xlane.f32.xlu0 %v2131
      %v2555 = vpop.xlane.xlu0 %2554
      %2556 = vmax.xlane.f32.xlu0 %v2134
      %v2557 = vpop.xlane.xlu0 %2556
      %2558 = vmax.xlane.f32.xlu0 %v2137
      %v2559 = vpop.xlane.xlu0 %2558
      %2560 = vmax.xlane.f32.xlu0 %v2140
      %v2561 = vpop.xlane.xlu0 %2560
      %2562 = vmax.xlane.f32.xlu0 %v2220
      %v2563 = vpop.xlane.xlu0 %2562
      %2564 = vmax.xlane.f32.xlu0 %v2223
      %v2565 = vpop.xlane.xlu0 %2564
      %2566 = vmax.xlane.f32.xlu0 %v2226
      %v2567 = vpop.xlane.xlu0 %2566
      %2568 = vmax.xlane.f32.xlu0 %v2229
      %v2569 = vpop.xlane.xlu0 %2568
      %2570 = vmax.xlane.f32.xlu0 %v2309
      %v2571 = vpop.xlane.xlu0 %2570
      %2572 = vmax.xlane.f32.xlu0 %v2312
      %v2573 = vpop.xlane.xlu0 %2572
      %2574 = vmax.xlane.f32.xlu0 %v2315
      %v2575 = vpop.xlane.xlu0 %2574
      %2576 = vmax.xlane.f32.xlu0 %v2318
      %v2577 = vpop.xlane.xlu0 %2576
      %2578 = vmax.xlane.f32.xlu0 %v2398
      %v2579 = vpop.xlane.xlu0 %2578
      %2580 = vmax.xlane.f32.xlu0 %v2401
      %v2581 = vpop.xlane.xlu0 %2580
      %2582 = vmax.xlane.f32.xlu0 %v2404
      %v2583 = vpop.xlane.xlu0 %2582
      %2584 = vmax.xlane.f32.xlu0 %v2407
      %v2585 = vpop.xlane.xlu0 %2584
      %2586 = vmax.xlane.f32.xlu0 %v2487
      %v2587 = vpop.xlane.xlu0 %2586
      %2588 = vmax.xlane.f32.xlu0 %v2490
      %v2589 = vpop.xlane.xlu0 %2588
      %2590 = vmax.xlane.f32.xlu0 %v2493
      %v2591 = vpop.xlane.xlu0 %2590
      %2592 = vmax.xlane.f32.xlu0 %v2496
      %v2593 = vpop.xlane.xlu0 %2592
      %v2594 = vsub.f32 %v1508, %v2499
      %v2595 = vsub.f32 %v1511, %v2501
      %v2596 = vsub.f32 %v1514, %v2503
      %v2597 = vsub.f32 %v1517, %v2505
      %v2598 = vsub.f32 %v1597, %v2507
      %v2599 = vsub.f32 %v1600, %v2509
      %v2600 = vsub.f32 %v1603, %v2511
      %v2601 = vsub.f32 %v1606, %v2513
      %v2602 = vsub.f32 %v1686, %v2515
      %v2603 = vsub.f32 %v1689, %v2517
      %v2604 = vsub.f32 %v1692, %v2519
      %v2605 = vsub.f32 %v1695, %v2521
      %v2606 = vsub.f32 %v1775, %v2523
      %v2607 = vsub.f32 %v1778, %v2525
      %v2608 = vsub.f32 %v1781, %v2527
      %v2609 = vsub.f32 %v1784, %v2529
      %v2610 = vsub.f32 %v1864, %v2531
      %v2611 = vsub.f32 %v1867, %v2533
      %v2612 = vsub.f32 %v1870, %v2535
      %v2613 = vsub.f32 %v1873, %v2537
      %v2614 = vsub.f32 %v1953, %v2539
      %v2615 = vsub.f32 %v1956, %v2541
      %v2616 = vsub.f32 %v1959, %v2543
      %v2617 = vsub.f32 %v1962, %v2545
      %v2618 = vsub.f32 %v2042, %v2547
      %v2619 = vsub.f32 %v2045, %v2549
      %v2620 = vsub.f32 %v2048, %v2551
      %v2621 = vsub.f32 %v2051, %v2553
      %v2622 = vsub.f32 %v2131, %v2555
      %v2623 = vsub.f32 %v2134, %v2557
      %v2624 = vsub.f32 %v2137, %v2559
      %v2625 = vsub.f32 %v2140, %v2561
      %v2626 = vsub.f32 %v2220, %v2563
      %v2627 = vsub.f32 %v2223, %v2565
      %v2628 = vsub.f32 %v2226, %v2567
      %v2629 = vsub.f32 %v2229, %v2569
      %v2630 = vsub.f32 %v2309, %v2571
      %v2631 = vsub.f32 %v2312, %v2573
      %v2632 = vsub.f32 %v2315, %v2575
      %v2633 = vsub.f32 %v2318, %v2577
      %v2634 = vsub.f32 %v2398, %v2579
      %v2635 = vsub.f32 %v2401, %v2581
      %v2636 = vsub.f32 %v2404, %v2583
      %v2637 = vsub.f32 %v2407, %v2585
      %v2638 = vsub.f32 %v2487, %v2587
      %v2639 = vsub.f32 %v2490, %v2589
      %v2640 = vsub.f32 %v2493, %v2591
      %v2641 = vsub.f32 %v2496, %v2593
      %v2642 = vmul.f32 %v2594, 1.442695
      %v2643 = vpow.pop %v2642
      %v2644 = vmul.f32 %v2595, 1.442695
      %v2645 = vpow.pop %v2644
      %v2646 = vmul.f32 %v2596, 1.442695
      %v2647 = vpow.pop %v2646
      %v2648 = vmul.f32 %v2597, 1.442695
      %v2649 = vpow.pop %v2648
      %v2650 = vmul.f32 %v2598, 1.442695
      %v2651 = vpow.pop %v2650
      %v2652 = vmul.f32 %v2599, 1.442695
      %v2653 = vpow.pop %v2652
      %v2654 = vmul.f32 %v2600, 1.442695
      %v2655 = vpow.pop %v2654
      %v2656 = vmul.f32 %v2601, 1.442695
      %v2657 = vpow.pop %v2656
      %v2658 = vmul.f32 %v2602, 1.442695
      %v2659 = vpow.pop %v2658
      %v2660 = vmul.f32 %v2603, 1.442695
      %v2661 = vpow.pop %v2660
      %v2662 = vmul.f32 %v2604, 1.442695
      %v2663 = vpow.pop %v2662
      %v2664 = vmul.f32 %v2605, 1.442695
      %v2665 = vpow.pop %v2664
      %v2666 = vmul.f32 %v2606, 1.442695
      %v2667 = vpow.pop %v2666
      %v2668 = vmul.f32 %v2607, 1.442695
      %v2669 = vpow.pop %v2668
      %v2670 = vmul.f32 %v2608, 1.442695
      %v2671 = vpow.pop %v2670
      %v2672 = vmul.f32 %v2609, 1.442695
      %v2673 = vpow.pop %v2672
      %v2674 = vmul.f32 %v2610, 1.442695
      %v2675 = vpow.pop %v2674
      %v2676 = vmul.f32 %v2611, 1.442695
      %v2677 = vpow.pop %v2676
      %v2678 = vmul.f32 %v2612, 1.442695
      %v2679 = vpow.pop %v2678
      %v2680 = vmul.f32 %v2613, 1.442695
      %v2681 = vpow.pop %v2680
      %v2682 = vmul.f32 %v2614, 1.442695
      %v2683 = vpow.pop %v2682
      %v2684 = vmul.f32 %v2615, 1.442695
      %v2685 = vpow.pop %v2684
      %v2686 = vmul.f32 %v2616, 1.442695
      %v2687 = vpow.pop %v2686
      %v2688 = vmul.f32 %v2617, 1.442695
      %v2689 = vpow.pop %v2688
      %v2690 = vmul.f32 %v2618, 1.442695
      %v2691 = vpow.pop %v2690
      %v2692 = vmul.f32 %v2619, 1.442695
      %v2693 = vpow.pop %v2692
      %v2694 = vmul.f32 %v2620, 1.442695
      %v2695 = vpow.pop %v2694
      %v2696 = vmul.f32 %v2621, 1.442695
      %v2697 = vpow.pop %v2696
      %v2698 = vmul.f32 %v2622, 1.442695
      %v2699 = vpow.pop %v2698
      %v2700 = vmul.f32 %v2623, 1.442695
      %v2701 = vpow.pop %v2700
      %v2702 = vmul.f32 %v2624, 1.442695
      %v2703 = vpow.pop %v2702
      %v2704 = vmul.f32 %v2625, 1.442695
      %v2705 = vpow.pop %v2704
      %v2706 = vmul.f32 %v2626, 1.442695
      %v2707 = vpow.pop %v2706
      %v2708 = vmul.f32 %v2627, 1.442695
      %v2709 = vpow.pop %v2708
      %v2710 = vmul.f32 %v2628, 1.442695
      %v2711 = vpow.pop %v2710
      %v2712 = vmul.f32 %v2629, 1.442695
      %v2713 = vpow.pop %v2712
      %v2714 = vmul.f32 %v2630, 1.442695
      %v2715 = vpow.pop %v2714
      %v2716 = vmul.f32 %v2631, 1.442695
      %v2717 = vpow.pop %v2716
      %v2718 = vmul.f32 %v2632, 1.442695
      %v2719 = vpow.pop %v2718
      %v2720 = vmul.f32 %v2633, 1.442695
      %v2721 = vpow.pop %v2720
      %v2722 = vmul.f32 %v2634, 1.442695
      %v2723 = vpow.pop %v2722
      %v2724 = vmul.f32 %v2635, 1.442695
      %v2725 = vpow.pop %v2724
      %v2726 = vmul.f32 %v2636, 1.442695
      %v2727 = vpow.pop %v2726
      %v2728 = vmul.f32 %v2637, 1.442695
      %v2729 = vpow.pop %v2728
      %v2730 = vmul.f32 %v2638, 1.442695
      %v2731 = vpow.pop %v2730
      %v2732 = vmul.f32 %v2639, 1.442695
      %v2733 = vpow.pop %v2732
      %v2734 = vmul.f32 %v2640, 1.442695
      %v2735 = vpow.pop %v2734
      %v2736 = vmul.f32 %v2641, 1.442695
      %v2737 = vpow.pop %v2736
      %2738 = vmatpush.msra.mxu0 %v1249
      %2739 = vmatpush.msra.mxu0 %v1248
      %2740 = vmatpush.msra.mxu0 %v1247
      %2741 = vmatpush.msra.mxu0 %v1246
      %2742 = vmatpush.msra.mxu0 %v1245
      %2743 = vmatpush.msra.mxu0 %v1244
      %2744 = vmatpush.msra.mxu0 %v1243
      %2745 = vmatpush.msra.mxu0 %v1242
      %2746 = vmatpush.msra.mxu0 %v1241
      %2747 = vmatpush.msra.mxu0 %v1240
      %2748 = vmatpush.msra.mxu0 %v1239
      %2749 = vmatpush.msra.mxu0 %v1238
      %2750 = vmatpush.msra.mxu0 %v1237
      %2751 = vmatpush.msra.mxu0 %v1236
      %2752 = vmatpush.msra.mxu0 %v1235
      %2753 = vmatpush.msra.mxu0 %v1234
      %2754 = vmatmul.f32.gmra.mxu0 %v2643
      %v2755 = vpop.f32.mrf.mxu0
      %v2756 = vadd.f32 0.0, %v2755
      %2757 = vmatmul.f32.gmra.mxu0 %v2645
      %v2758 = vpop.f32.mrf.mxu0
      %v2759 = vadd.f32 0.0, %v2758
      %2760 = vmatmul.f32.gmra.mxu0 %v2647
      %v2761 = vpop.f32.mrf.mxu0
      %v2762 = vadd.f32 0.0, %v2761
      %2763 = vmatmul.f32.gmra.mxu0 %v2649
      %v2764 = vpop.f32.mrf.mxu0
      %v2765 = vadd.f32 0.0, %v2764
      %2766 = vdwg.mxu0
      %2767 = vmatpush.msra.mxu0 %v1265
      %2768 = vmatpush.msra.mxu0 %v1264
      %2769 = vmatpush.msra.mxu0 %v1263
      %2770 = vmatpush.msra.mxu0 %v1262
      %2771 = vmatpush.msra.mxu0 %v1261
      %2772 = vmatpush.msra.mxu0 %v1260
      %2773 = vmatpush.msra.mxu0 %v1259
      %2774 = vmatpush.msra.mxu0 %v1258
      %2775 = vmatpush.msra.mxu0 %v1257
      %2776 = vmatpush.msra.mxu0 %v1256
      %2777 = vmatpush.msra.mxu0 %v1255
      %2778 = vmatpush.msra.mxu0 %v1254
      %2779 = vmatpush.msra.mxu0 %v1253
      %2780 = vmatpush.msra.mxu0 %v1252
      %2781 = vmatpush.msra.mxu0 %v1251
      %2782 = vmatpush.msra.mxu0 %v1250
      %2783 = vmatmul.f32.gmra.mxu0 %v2651
      %v2784 = vpop.f32.mrf.mxu0
      %v2785 = vadd.f32 0.0, %v2784
      %2786 = vmatmul.f32.gmra.mxu0 %v2653
      %v2787 = vpop.f32.mrf.mxu0
      %v2788 = vadd.f32 0.0, %v2787
      %2789 = vmatmul.f32.gmra.mxu0 %v2655
      %v2790 = vpop.f32.mrf.mxu0
      %v2791 = vadd.f32 0.0, %v2790
      %2792 = vmatmul.f32.gmra.mxu0 %v2657
      %v2793 = vpop.f32.mrf.mxu0
      %v2794 = vadd.f32 0.0, %v2793
      %2795 = vdwg.mxu0
      %2796 = vmatpush.msra.mxu0 %v1281
      %2797 = vmatpush.msra.mxu0 %v1280
      %2798 = vmatpush.msra.mxu0 %v1279
      %2799 = vmatpush.msra.mxu0 %v1278
      %2800 = vmatpush.msra.mxu0 %v1277
      %2801 = vmatpush.msra.mxu0 %v1276
      %2802 = vmatpush.msra.mxu0 %v1275
      %2803 = vmatpush.msra.mxu0 %v1274
      %2804 = vmatpush.msra.mxu0 %v1273
      %2805 = vmatpush.msra.mxu0 %v1272
      %2806 = vmatpush.msra.mxu0 %v1271
      %2807 = vmatpush.msra.mxu0 %v1270
      %2808 = vmatpush.msra.mxu0 %v1269
      %2809 = vmatpush.msra.mxu0 %v1268
      %2810 = vmatpush.msra.mxu0 %v1267
      %2811 = vmatpush.msra.mxu0 %v1266
      %2812 = vmatmul.f32.gmra.mxu0 %v2659
      %v2813 = vpop.f32.mrf.mxu0
      %v2814 = vadd.f32 0.0, %v2813
      %2815 = vmatmul.f32.gmra.mxu0 %v2661
      %v2816 = vpop.f32.mrf.mxu0
      %v2817 = vadd.f32 0.0, %v2816
      %2818 = vmatmul.f32.gmra.mxu0 %v2663
      %v2819 = vpop.f32.mrf.mxu0
      %v2820 = vadd.f32 0.0, %v2819
      %2821 = vmatmul.f32.gmra.mxu0 %v2665
      %v2822 = vpop.f32.mrf.mxu0
      %v2823 = vadd.f32 0.0, %v2822
      %2824 = vdwg.mxu0
      %2825 = vmatpush.msra.mxu0 %v1297
      %2826 = vmatpush.msra.mxu0 %v1296
      %2827 = vmatpush.msra.mxu0 %v1295
      %2828 = vmatpush.msra.mxu0 %v1294
      %2829 = vmatpush.msra.mxu0 %v1293
      %2830 = vmatpush.msra.mxu0 %v1292
      %2831 = vmatpush.msra.mxu0 %v1291
      %2832 = vmatpush.msra.mxu0 %v1290
      %2833 = vmatpush.msra.mxu0 %v1289
      %2834 = vmatpush.msra.mxu0 %v1288
      %2835 = vmatpush.msra.mxu0 %v1287
      %2836 = vmatpush.msra.mxu0 %v1286
      %2837 = vmatpush.msra.mxu0 %v1285
      %2838 = vmatpush.msra.mxu0 %v1284
      %2839 = vmatpush.msra.mxu0 %v1283
      %2840 = vmatpush.msra.mxu0 %v1282
      %2841 = vmatmul.f32.gmra.mxu0 %v2667
      %v2842 = vpop.f32.mrf.mxu0
      %v2843 = vadd.f32 0.0, %v2842
      %2844 = vmatmul.f32.gmra.mxu0 %v2669
      %v2845 = vpop.f32.mrf.mxu0
      %v2846 = vadd.f32 0.0, %v2845
      %2847 = vmatmul.f32.gmra.mxu0 %v2671
      %v2848 = vpop.f32.mrf.mxu0
      %v2849 = vadd.f32 0.0, %v2848
      %2850 = vmatmul.f32.gmra.mxu0 %v2673
      %v2851 = vpop.f32.mrf.mxu0
      %v2852 = vadd.f32 0.0, %v2851
      %2853 = vdwg.mxu0
      %2854 = vmatpush.msra.mxu0 %v1313
      %2855 = vmatpush.msra.mxu0 %v1312
      %2856 = vmatpush.msra.mxu0 %v1311
      %2857 = vmatpush.msra.mxu0 %v1310
      %2858 = vmatpush.msra.mxu0 %v1309
      %2859 = vmatpush.msra.mxu0 %v1308
      %2860 = vmatpush.msra.mxu0 %v1307
      %2861 = vmatpush.msra.mxu0 %v1306
      %2862 = vmatpush.msra.mxu0 %v1305
      %2863 = vmatpush.msra.mxu0 %v1304
      %2864 = vmatpush.msra.mxu0 %v1303
      %2865 = vmatpush.msra.mxu0 %v1302
      %2866 = vmatpush.msra.mxu0 %v1301
      %2867 = vmatpush.msra.mxu0 %v1300
      %2868 = vmatpush.msra.mxu0 %v1299
      %2869 = vmatpush.msra.mxu0 %v1298
      %2870 = vmatmul.f32.gmra.mxu0 %v2675
      %v2871 = vpop.f32.mrf.mxu0
      %v2872 = vadd.f32 0.0, %v2871
      %2873 = vmatmul.f32.gmra.mxu0 %v2677
      %v2874 = vpop.f32.mrf.mxu0
      %v2875 = vadd.f32 0.0, %v2874
      %2876 = vmatmul.f32.gmra.mxu0 %v2679
      %v2877 = vpop.f32.mrf.mxu0
      %v2878 = vadd.f32 0.0, %v2877
      %2879 = vmatmul.f32.gmra.mxu0 %v2681
      %v2880 = vpop.f32.mrf.mxu0
      %v2881 = vadd.f32 0.0, %v2880
      %2882 = vdwg.mxu0
      %2883 = vmatpush.msra.mxu0 %v1329
      %2884 = vmatpush.msra.mxu0 %v1328
      %2885 = vmatpush.msra.mxu0 %v1327
      %2886 = vmatpush.msra.mxu0 %v1326
      %2887 = vmatpush.msra.mxu0 %v1325
      %2888 = vmatpush.msra.mxu0 %v1324
      %2889 = vmatpush.msra.mxu0 %v1323
      %2890 = vmatpush.msra.mxu0 %v1322
      %2891 = vmatpush.msra.mxu0 %v1321
      %2892 = vmatpush.msra.mxu0 %v1320
      %2893 = vmatpush.msra.mxu0 %v1319
      %2894 = vmatpush.msra.mxu0 %v1318
      %2895 = vmatpush.msra.mxu0 %v1317
      %2896 = vmatpush.msra.mxu0 %v1316
      %2897 = vmatpush.msra.mxu0 %v1315
      %2898 = vmatpush.msra.mxu0 %v1314
      %2899 = vmatmul.f32.gmra.mxu0 %v2683
      %v2900 = vpop.f32.mrf.mxu0
      %v2901 = vadd.f32 0.0, %v2900
      %2902 = vmatmul.f32.gmra.mxu0 %v2685
      %v2903 = vpop.f32.mrf.mxu0
      %v2904 = vadd.f32 0.0, %v2903
      %2905 = vmatmul.f32.gmra.mxu0 %v2687
      %v2906 = vpop.f32.mrf.mxu0
      %v2907 = vadd.f32 0.0, %v2906
      %2908 = vmatmul.f32.gmra.mxu0 %v2689
      %v2909 = vpop.f32.mrf.mxu0
      %v2910 = vadd.f32 0.0, %v2909
      %2911 = vdwg.mxu0
      %2912 = vmatpush.msra.mxu0 %v1345
      %2913 = vmatpush.msra.mxu0 %v1344
      %2914 = vmatpush.msra.mxu0 %v1343
      %2915 = vmatpush.msra.mxu0 %v1342
      %2916 = vmatpush.msra.mxu0 %v1341
      %2917 = vmatpush.msra.mxu0 %v1340
      %2918 = vmatpush.msra.mxu0 %v1339
      %2919 = vmatpush.msra.mxu0 %v1338
      %2920 = vmatpush.msra.mxu0 %v1337
      %2921 = vmatpush.msra.mxu0 %v1336
      %2922 = vmatpush.msra.mxu0 %v1335
      %2923 = vmatpush.msra.mxu0 %v1334
      %2924 = vmatpush.msra.mxu0 %v1333
      %2925 = vmatpush.msra.mxu0 %v1332
      %2926 = vmatpush.msra.mxu0 %v1331
      %2927 = vmatpush.msra.mxu0 %v1330
      %2928 = vmatmul.f32.gmra.mxu0 %v2691
      %v2929 = vpop.f32.mrf.mxu0
      %v2930 = vadd.f32 0.0, %v2929
      %2931 = vmatmul.f32.gmra.mxu0 %v2693
      %v2932 = vpop.f32.mrf.mxu0
      %v2933 = vadd.f32 0.0, %v2932
      %2934 = vmatmul.f32.gmra.mxu0 %v2695
      %v2935 = vpop.f32.mrf.mxu0
      %v2936 = vadd.f32 0.0, %v2935
      %2937 = vmatmul.f32.gmra.mxu0 %v2697
      %v2938 = vpop.f32.mrf.mxu0
      %v2939 = vadd.f32 0.0, %v2938
      %2940 = vdwg.mxu0
      %2941 = vmatpush.msra.mxu0 %v1361
      %2942 = vmatpush.msra.mxu0 %v1360
      %2943 = vmatpush.msra.mxu0 %v1359
      %2944 = vmatpush.msra.mxu0 %v1358
      %2945 = vmatpush.msra.mxu0 %v1357
      %2946 = vmatpush.msra.mxu0 %v1356
      %2947 = vmatpush.msra.mxu0 %v1355
      %2948 = vmatpush.msra.mxu0 %v1354
      %2949 = vmatpush.msra.mxu0 %v1353
      %2950 = vmatpush.msra.mxu0 %v1352
      %2951 = vmatpush.msra.mxu0 %v1351
      %2952 = vmatpush.msra.mxu0 %v1350
      %2953 = vmatpush.msra.mxu0 %v1349
      %2954 = vmatpush.msra.mxu0 %v1348
      %2955 = vmatpush.msra.mxu0 %v1347
      %2956 = vmatpush.msra.mxu0 %v1346
      %2957 = vmatmul.f32.gmra.mxu0 %v2699
      %v2958 = vpop.f32.mrf.mxu0
      %v2959 = vadd.f32 0.0, %v2958
      %2960 = vmatmul.f32.gmra.mxu0 %v2701
      %v2961 = vpop.f32.mrf.mxu0
      %v2962 = vadd.f32 0.0, %v2961
      %2963 = vmatmul.f32.gmra.mxu0 %v2703
      %v2964 = vpop.f32.mrf.mxu0
      %v2965 = vadd.f32 0.0, %v2964
      %2966 = vmatmul.f32.gmra.mxu0 %v2705
      %v2967 = vpop.f32.mrf.mxu0
      %v2968 = vadd.f32 0.0, %v2967
      %2969 = vdwg.mxu0
      %2970 = vmatpush.msra.mxu0 %v1377
      %2971 = vmatpush.msra.mxu0 %v1376
      %2972 = vmatpush.msra.mxu0 %v1375
      %2973 = vmatpush.msra.mxu0 %v1374
      %2974 = vmatpush.msra.mxu0 %v1373
      %2975 = vmatpush.msra.mxu0 %v1372
      %2976 = vmatpush.msra.mxu0 %v1371
      %2977 = vmatpush.msra.mxu0 %v1370
      %2978 = vmatpush.msra.mxu0 %v1369
      %2979 = vmatpush.msra.mxu0 %v1368
      %2980 = vmatpush.msra.mxu0 %v1367
      %2981 = vmatpush.msra.mxu0 %v1366
      %2982 = vmatpush.msra.mxu0 %v1365
      %2983 = vmatpush.msra.mxu0 %v1364
      %2984 = vmatpush.msra.mxu0 %v1363
      %2985 = vmatpush.msra.mxu0 %v1362
      %2986 = vmatmul.f32.gmra.mxu0 %v2707
      %v2987 = vpop.f32.mrf.mxu0
      %v2988 = vadd.f32 0.0, %v2987
      %2989 = vmatmul.f32.gmra.mxu0 %v2709
      %v2990 = vpop.f32.mrf.mxu0
      %v2991 = vadd.f32 0.0, %v2990
      %2992 = vmatmul.f32.gmra.mxu0 %v2711
      %v2993 = vpop.f32.mrf.mxu0
      %v2994 = vadd.f32 0.0, %v2993
      %2995 = vmatmul.f32.gmra.mxu0 %v2713
      %v2996 = vpop.f32.mrf.mxu0
      %v2997 = vadd.f32 0.0, %v2996
      %2998 = vdwg.mxu0
      %2999 = vmatpush.msra.mxu0 %v1393
      %3000 = vmatpush.msra.mxu0 %v1392
      %3001 = vmatpush.msra.mxu0 %v1391
      %3002 = vmatpush.msra.mxu0 %v1390
      %3003 = vmatpush.msra.mxu0 %v1389
      %3004 = vmatpush.msra.mxu0 %v1388
      %3005 = vmatpush.msra.mxu0 %v1387
      %3006 = vmatpush.msra.mxu0 %v1386
      %3007 = vmatpush.msra.mxu0 %v1385
      %3008 = vmatpush.msra.mxu0 %v1384
      %3009 = vmatpush.msra.mxu0 %v1383
      %3010 = vmatpush.msra.mxu0 %v1382
      %3011 = vmatpush.msra.mxu0 %v1381
      %3012 = vmatpush.msra.mxu0 %v1380
      %3013 = vmatpush.msra.mxu0 %v1379
      %3014 = vmatpush.msra.mxu0 %v1378
      %3015 = vmatmul.f32.gmra.mxu0 %v2715
      %v3016 = vpop.f32.mrf.mxu0
      %v3017 = vadd.f32 0.0, %v3016
      %3018 = vmatmul.f32.gmra.mxu0 %v2717
      %v3019 = vpop.f32.mrf.mxu0
      %v3020 = vadd.f32 0.0, %v3019
      %3021 = vmatmul.f32.gmra.mxu0 %v2719
      %v3022 = vpop.f32.mrf.mxu0
      %v3023 = vadd.f32 0.0, %v3022
      %3024 = vmatmul.f32.gmra.mxu0 %v2721
      %v3025 = vpop.f32.mrf.mxu0
      %v3026 = vadd.f32 0.0, %v3025
      %3027 = vdwg.mxu0
      %3028 = vmatpush.msra.mxu0 %v1409
      %3029 = vmatpush.msra.mxu0 %v1408
      %3030 = vmatpush.msra.mxu0 %v1407
      %3031 = vmatpush.msra.mxu0 %v1406
      %3032 = vmatpush.msra.mxu0 %v1405
      %3033 = vmatpush.msra.mxu0 %v1404
      %3034 = vmatpush.msra.mxu0 %v1403
      %3035 = vmatpush.msra.mxu0 %v1402
      %3036 = vmatpush.msra.mxu0 %v1401
      %3037 = vmatpush.msra.mxu0 %v1400
      %3038 = vmatpush.msra.mxu0 %v1399
      %3039 = vmatpush.msra.mxu0 %v1398
      %3040 = vmatpush.msra.mxu0 %v1397
      %3041 = vmatpush.msra.mxu0 %v1396
      %3042 = vmatpush.msra.mxu0 %v1395
      %3043 = vmatpush.msra.mxu0 %v1394
      %3044 = vmatmul.f32.gmra.mxu0 %v2723
      %v3045 = vpop.f32.mrf.mxu0
      %v3046 = vadd.f32 0.0, %v3045
      %3047 = vmatmul.f32.gmra.mxu0 %v2725
      %v3048 = vpop.f32.mrf.mxu0
      %v3049 = vadd.f32 0.0, %v3048
      %3050 = vmatmul.f32.gmra.mxu0 %v2727
      %v3051 = vpop.f32.mrf.mxu0
      %v3052 = vadd.f32 0.0, %v3051
      %3053 = vmatmul.f32.gmra.mxu0 %v2729
      %v3054 = vpop.f32.mrf.mxu0
      %v3055 = vadd.f32 0.0, %v3054
      %3056 = vdwg.mxu0
      %3057 = vmatpush.msra.mxu0 %v1425
      %3058 = vmatpush.msra.mxu0 %v1424
      %3059 = vmatpush.msra.mxu0 %v1423
      %3060 = vmatpush.msra.mxu0 %v1422
      %3061 = vmatpush.msra.mxu0 %v1421
      %3062 = vmatpush.msra.mxu0 %v1420
      %3063 = vmatpush.msra.mxu0 %v1419
      %3064 = vmatpush.msra.mxu0 %v1418
      %3065 = vmatpush.msra.mxu0 %v1417
      %3066 = vmatpush.msra.mxu0 %v1416
      %3067 = vmatpush.msra.mxu0 %v1415
      %3068 = vmatpush.msra.mxu0 %v1414
      %3069 = vmatpush.msra.mxu0 %v1413
      %3070 = vmatpush.msra.mxu0 %v1412
      %3071 = vmatpush.msra.mxu0 %v1411
      %3072 = vmatpush.msra.mxu0 %v1410
      %3073 = vmatmul.f32.gmra.mxu0 %v2731
      %v3074 = vpop.f32.mrf.mxu0
      %v3075 = vadd.f32 0.0, %v3074
      %3076 = vmatmul.f32.gmra.mxu0 %v2733
      %v3077 = vpop.f32.mrf.mxu0
      %v3078 = vadd.f32 0.0, %v3077
      %3079 = vmatmul.f32.gmra.mxu0 %v2735
      %v3080 = vpop.f32.mrf.mxu0
      %v3081 = vadd.f32 0.0, %v3080
      %3082 = vmatmul.f32.gmra.mxu0 %v2737
      %v3083 = vpop.f32.mrf.mxu0
      %v3084 = vadd.f32 0.0, %v3083
      %3085 = vdwg.mxu0
      %v3086 = vld [vmem:[%s8] sm:$0xff]
      %v3087 = vld [vmem:[%s8 + $0x8] sm:$0xff]
      %v3088 = vld [vmem:[%s8 + $0x10] sm:$0xff]
      %v3089 = vld [vmem:[%s8 + $0x18] sm:$0xff]
      %v3090 = vld [vmem:[%s8 + $0x20] sm:$0xff]
      %v3091 = vld [vmem:[%s8 + $0x28] sm:$0xff]
      %v3092 = vld [vmem:[%s8 + $0x30] sm:$0xff]
      %v3093 = vld [vmem:[%s8 + $0x38] sm:$0xff]
      %v3094 = vld [vmem:[%s8 + $0x40] sm:$0xff]
      %v3095 = vld [vmem:[%s8 + $0x48] sm:$0xff]
      %v3096 = vld [vmem:[%s8 + $0x50] sm:$0xff]
      %v3097 = vld [vmem:[%s8 + $0x58] sm:$0xff]
      %v3098 = vld [vmem:[%s8 + $0x60] sm:$0xff]
      %v3099 = vld [vmem:[%s8 + $0x68] sm:$0xff]
      %v3100 = vld [vmem:[%s8 + $0x70] sm:$0xff]
      %v3101 = vld [vmem:[%s8 + $0x78] sm:$0xff]
      %3102 = vmatpush.msra.mxu0 %v3101
      %3103 = vmatpush.msra.mxu0 %v3100
      %3104 = vmatpush.msra.mxu0 %v3099
      %3105 = vmatpush.msra.mxu0 %v3098
      %3106 = vmatpush.msra.mxu0 %v3097
      %3107 = vmatpush.msra.mxu0 %v3096
      %3108 = vmatpush.msra.mxu0 %v3095
      %3109 = vmatpush.msra.mxu0 %v3094
      %3110 = vmatpush.msra.mxu0 %v3093
      %3111 = vmatpush.msra.mxu0 %v3092
      %3112 = vmatpush.msra.mxu0 %v3091
      %3113 = vmatpush.msra.mxu0 %v3090
      %3114 = vmatpush.msra.mxu0 %v3089
      %3115 = vmatpush.msra.mxu0 %v3088
      %3116 = vmatpush.msra.mxu0 %v3087
      %3117 = vmatpush.msra.mxu0 %v3086
      %3118 = vmatmul.f32.gmra.mxu0 %v2643
      %v3119 = vpop.f32.mrf.mxu0
      %v3120 = vadd.f32 0.0, %v3119
      %3121 = vmatmul.f32.gmra.mxu0 %v2645
      %v3122 = vpop.f32.mrf.mxu0
      %v3123 = vadd.f32 0.0, %v3122
      %3124 = vmatmul.f32.gmra.mxu0 %v2647
      %v3125 = vpop.f32.mrf.mxu0
      %v3126 = vadd.f32 0.0, %v3125
      %3127 = vmatmul.f32.gmra.mxu0 %v2649
      %v3128 = vpop.f32.mrf.mxu0
      %v3129 = vadd.f32 0.0, %v3128
      %3130 = vmatmul.f32.gmra.mxu0 %v2651
      %v3131 = vpop.f32.mrf.mxu0
      %v3132 = vadd.f32 0.0, %v3131
      %3133 = vmatmul.f32.gmra.mxu0 %v2653
      %v3134 = vpop.f32.mrf.mxu0
      %v3135 = vadd.f32 0.0, %v3134
      %3136 = vmatmul.f32.gmra.mxu0 %v2655
      %v3137 = vpop.f32.mrf.mxu0
      %v3138 = vadd.f32 0.0, %v3137
      %3139 = vmatmul.f32.gmra.mxu0 %v2657
      %v3140 = vpop.f32.mrf.mxu0
      %v3141 = vadd.f32 0.0, %v3140
      %3142 = vmatmul.f32.gmra.mxu0 %v2659
      %v3143 = vpop.f32.mrf.mxu0
      %v3144 = vadd.f32 0.0, %v3143
      %3145 = vmatmul.f32.gmra.mxu0 %v2661
      %v3146 = vpop.f32.mrf.mxu0
      %v3147 = vadd.f32 0.0, %v3146
      %3148 = vmatmul.f32.gmra.mxu0 %v2663
      %v3149 = vpop.f32.mrf.mxu0
      %v3150 = vadd.f32 0.0, %v3149
      %3151 = vmatmul.f32.gmra.mxu0 %v2665
      %v3152 = vpop.f32.mrf.mxu0
      %v3153 = vadd.f32 0.0, %v3152
      %3154 = vmatmul.f32.gmra.mxu0 %v2667
      %v3155 = vpop.f32.mrf.mxu0
      %v3156 = vadd.f32 0.0, %v3155
      %3157 = vmatmul.f32.gmra.mxu0 %v2669
      %v3158 = vpop.f32.mrf.mxu0
      %v3159 = vadd.f32 0.0, %v3158
      %3160 = vmatmul.f32.gmra.mxu0 %v2671
      %v3161 = vpop.f32.mrf.mxu0
      %v3162 = vadd.f32 0.0, %v3161
      %3163 = vmatmul.f32.gmra.mxu0 %v2673
      %v3164 = vpop.f32.mrf.mxu0
      %v3165 = vadd.f32 0.0, %v3164
      %3166 = vmatmul.f32.gmra.mxu0 %v2675
      %v3167 = vpop.f32.mrf.mxu0
      %v3168 = vadd.f32 0.0, %v3167
      %3169 = vmatmul.f32.gmra.mxu0 %v2677
      %v3170 = vpop.f32.mrf.mxu0
      %v3171 = vadd.f32 0.0, %v3170
      %3172 = vmatmul.f32.gmra.mxu0 %v2679
      %v3173 = vpop.f32.mrf.mxu0
      %v3174 = vadd.f32 0.0, %v3173
      %3175 = vmatmul.f32.gmra.mxu0 %v2681
      %v3176 = vpop.f32.mrf.mxu0
      %v3177 = vadd.f32 0.0, %v3176
      %3178 = vmatmul.f32.gmra.mxu0 %v2683
      %v3179 = vpop.f32.mrf.mxu0
      %v3180 = vadd.f32 0.0, %v3179
      %3181 = vmatmul.f32.gmra.mxu0 %v2685
      %v3182 = vpop.f32.mrf.mxu0
      %v3183 = vadd.f32 0.0, %v3182
      %3184 = vmatmul.f32.gmra.mxu0 %v2687
      %v3185 = vpop.f32.mrf.mxu0
      %v3186 = vadd.f32 0.0, %v3185
      %3187 = vmatmul.f32.gmra.mxu0 %v2689
      %v3188 = vpop.f32.mrf.mxu0
      %v3189 = vadd.f32 0.0, %v3188
      %3190 = vmatmul.f32.gmra.mxu0 %v2691
      %v3191 = vpop.f32.mrf.mxu0
      %v3192 = vadd.f32 0.0, %v3191
      %3193 = vmatmul.f32.gmra.mxu0 %v2693
      %v3194 = vpop.f32.mrf.mxu0
      %v3195 = vadd.f32 0.0, %v3194
      %3196 = vmatmul.f32.gmra.mxu0 %v2695
      %v3197 = vpop.f32.mrf.mxu0
      %v3198 = vadd.f32 0.0, %v3197
      %3199 = vmatmul.f32.gmra.mxu0 %v2697
      %v3200 = vpop.f32.mrf.mxu0
      %v3201 = vadd.f32 0.0, %v3200
      %3202 = vmatmul.f32.gmra.mxu0 %v2699
      %v3203 = vpop.f32.mrf.mxu0
      %v3204 = vadd.f32 0.0, %v3203
      %3205 = vmatmul.f32.gmra.mxu0 %v2701
      %v3206 = vpop.f32.mrf.mxu0
      %v3207 = vadd.f32 0.0, %v3206
      %3208 = vmatmul.f32.gmra.mxu0 %v2703
      %v3209 = vpop.f32.mrf.mxu0
      %v3210 = vadd.f32 0.0, %v3209
      %3211 = vmatmul.f32.gmra.mxu0 %v2705
      %v3212 = vpop.f32.mrf.mxu0
      %v3213 = vadd.f32 0.0, %v3212
      %3214 = vmatmul.f32.gmra.mxu0 %v2707
      %v3215 = vpop.f32.mrf.mxu0
      %v3216 = vadd.f32 0.0, %v3215
      %3217 = vmatmul.f32.gmra.mxu0 %v2709
      %v3218 = vpop.f32.mrf.mxu0
      %v3219 = vadd.f32 0.0, %v3218
      %3220 = vmatmul.f32.gmra.mxu0 %v2711
      %v3221 = vpop.f32.mrf.mxu0
      %v3222 = vadd.f32 0.0, %v3221
      %3223 = vmatmul.f32.gmra.mxu0 %v2713
      %v3224 = vpop.f32.mrf.mxu0
      %v3225 = vadd.f32 0.0, %v3224
      %3226 = vmatmul.f32.gmra.mxu0 %v2715
      %v3227 = vpop.f32.mrf.mxu0
      %v3228 = vadd.f32 0.0, %v3227
      %3229 = vmatmul.f32.gmra.mxu0 %v2717
      %v3230 = vpop.f32.mrf.mxu0
      %v3231 = vadd.f32 0.0, %v3230
      %3232 = vmatmul.f32.gmra.mxu0 %v2719
      %v3233 = vpop.f32.mrf.mxu0
      %v3234 = vadd.f32 0.0, %v3233
      %3235 = vmatmul.f32.gmra.mxu0 %v2721
      %v3236 = vpop.f32.mrf.mxu0
      %v3237 = vadd.f32 0.0, %v3236
      %3238 = vmatmul.f32.gmra.mxu0 %v2723
      %v3239 = vpop.f32.mrf.mxu0
      %v3240 = vadd.f32 0.0, %v3239
      %3241 = vmatmul.f32.gmra.mxu0 %v2725
      %v3242 = vpop.f32.mrf.mxu0
      %v3243 = vadd.f32 0.0, %v3242
      %3244 = vmatmul.f32.gmra.mxu0 %v2727
      %v3245 = vpop.f32.mrf.mxu0
      %v3246 = vadd.f32 0.0, %v3245
      %3247 = vmatmul.f32.gmra.mxu0 %v2729
      %v3248 = vpop.f32.mrf.mxu0
      %v3249 = vadd.f32 0.0, %v3248
      %3250 = vmatmul.f32.gmra.mxu0 %v2731
      %v3251 = vpop.f32.mrf.mxu0
      %v3252 = vadd.f32 0.0, %v3251
      %3253 = vmatmul.f32.gmra.mxu0 %v2733
      %v3254 = vpop.f32.mrf.mxu0
      %v3255 = vadd.f32 0.0, %v3254
      %3256 = vmatmul.f32.gmra.mxu0 %v2735
      %v3257 = vpop.f32.mrf.mxu0
      %v3258 = vadd.f32 0.0, %v3257
      %3259 = vmatmul.f32.gmra.mxu0 %v2737
      %v3260 = vpop.f32.mrf.mxu0
      %v3261 = vadd.f32 0.0, %v3260
      %3262 = vdwg.mxu0
      %v3263 = vmax.f32 %v3120, 1e-30
      %v3264 = vmax.f32 %v3123, 1e-30
      %v3265 = vmax.f32 %v3126, 1e-30
      %v3266 = vmax.f32 %v3129, 1e-30
      %v3267 = vmax.f32 %v3132, 1e-30
      %v3268 = vmax.f32 %v3135, 1e-30
      %v3269 = vmax.f32 %v3138, 1e-30
      %v3270 = vmax.f32 %v3141, 1e-30
      %v3271 = vmax.f32 %v3144, 1e-30
      %v3272 = vmax.f32 %v3147, 1e-30
      %v3273 = vmax.f32 %v3150, 1e-30
      %v3274 = vmax.f32 %v3153, 1e-30
      %v3275 = vmax.f32 %v3156, 1e-30
      %v3276 = vmax.f32 %v3159, 1e-30
      %v3277 = vmax.f32 %v3162, 1e-30
      %v3278 = vmax.f32 %v3165, 1e-30
      %v3279 = vmax.f32 %v3168, 1e-30
      %v3280 = vmax.f32 %v3171, 1e-30
      %v3281 = vmax.f32 %v3174, 1e-30
      %v3282 = vmax.f32 %v3177, 1e-30
      %v3283 = vmax.f32 %v3180, 1e-30
      %v3284 = vmax.f32 %v3183, 1e-30
      %v3285 = vmax.f32 %v3186, 1e-30
      %v3286 = vmax.f32 %v3189, 1e-30
      %v3287 = vmax.f32 %v3192, 1e-30
      %v3288 = vmax.f32 %v3195, 1e-30
      %v3289 = vmax.f32 %v3198, 1e-30
      %v3290 = vmax.f32 %v3201, 1e-30
      %v3291 = vmax.f32 %v3204, 1e-30
      %v3292 = vmax.f32 %v3207, 1e-30
      %v3293 = vmax.f32 %v3210, 1e-30
      %v3294 = vmax.f32 %v3213, 1e-30
      %v3295 = vmax.f32 %v3216, 1e-30
      %v3296 = vmax.f32 %v3219, 1e-30
      %v3297 = vmax.f32 %v3222, 1e-30
      %v3298 = vmax.f32 %v3225, 1e-30
      %v3299 = vmax.f32 %v3228, 1e-30
      %v3300 = vmax.f32 %v3231, 1e-30
      %v3301 = vmax.f32 %v3234, 1e-30
      %v3302 = vmax.f32 %v3237, 1e-30
      %v3303 = vmax.f32 %v3240, 1e-30
      %v3304 = vmax.f32 %v3243, 1e-30
      %v3305 = vmax.f32 %v3246, 1e-30
      %v3306 = vmax.f32 %v3249, 1e-30
      %v3307 = vmax.f32 %v3252, 1e-30
      %v3308 = vmax.f32 %v3255, 1e-30
      %v3309 = vmax.f32 %v3258, 1e-30
      %v3310 = vmax.f32 %v3261, 1e-30
      %v3311 = vrcp.pop %v3263
      %v3312 = vmul.f32 %v3263, %v3311
      %v3313 = vsub.f32 1.0, %v3312
      %v3314 = vmul.f32 %v3311, %v3313
      %v3315 = vadd.f32 %v3311, %v3314
      %vm3316 = vweird.f32 %v3263
      %vm3317 = vweird.f32 %v3311
      %vm3318 = vmor %vm3316, %vm3317
      %v3319 = vsel %vm3318, %v3311, %v3315
      %v3320 = vand.u32 2147483647, %v3263
      %vm3321 = vcmp.eq.f32.partialorder %v3320, 8.507059e+37
      %v3322 = vand.u32 %v3263, 2147483648
      %v3323 = vor.u32 1.1754944e-38, %v3322
      %v3324 = vsel %vm3321, %v3323, %v3319
      %v3325 = vrcp.pop %v3264
      %v3326 = vmul.f32 %v3264, %v3325
      %v3327 = vsub.f32 1.0, %v3326
      %v3328 = vmul.f32 %v3325, %v3327
      %v3329 = vadd.f32 %v3325, %v3328
      %vm3330 = vweird.f32 %v3264
      %vm3331 = vweird.f32 %v3325
      %vm3332 = vmor %vm3330, %vm3331
      %v3333 = vsel %vm3332, %v3325, %v3329
      %v3334 = vand.u32 2147483647, %v3264
      %vm3335 = vcmp.eq.f32.partialorder %v3334, 8.507059e+37
      %v3336 = vand.u32 %v3264, 2147483648
      %v3337 = vor.u32 1.1754944e-38, %v3336
      %v3338 = vsel %vm3335, %v3337, %v3333
      %v3339 = vrcp.pop %v3265
      %v3340 = vmul.f32 %v3265, %v3339
      %v3341 = vsub.f32 1.0, %v3340
      %v3342 = vmul.f32 %v3339, %v3341
      %v3343 = vadd.f32 %v3339, %v3342
      %vm3344 = vweird.f32 %v3265
      %vm3345 = vweird.f32 %v3339
      %vm3346 = vmor %vm3344, %vm3345
      %v3347 = vsel %vm3346, %v3339, %v3343
      %v3348 = vand.u32 2147483647, %v3265
      %vm3349 = vcmp.eq.f32.partialorder %v3348, 8.507059e+37
      %v3350 = vand.u32 %v3265, 2147483648
      %v3351 = vor.u32 1.1754944e-38, %v3350
      %v3352 = vsel %vm3349, %v3351, %v3347
      %v3353 = vrcp.pop %v3266
      %v3354 = vmul.f32 %v3266, %v3353
      %v3355 = vsub.f32 1.0, %v3354
      %v3356 = vmul.f32 %v3353, %v3355
      %v3357 = vadd.f32 %v3353, %v3356
      %vm3358 = vweird.f32 %v3266
      %vm3359 = vweird.f32 %v3353
      %vm3360 = vmor %vm3358, %vm3359
      %v3361 = vsel %vm3360, %v3353, %v3357
      %v3362 = vand.u32 2147483647, %v3266
      %vm3363 = vcmp.eq.f32.partialorder %v3362, 8.507059e+37
      %v3364 = vand.u32 %v3266, 2147483648
      %v3365 = vor.u32 1.1754944e-38, %v3364
      %v3366 = vsel %vm3363, %v3365, %v3361
      %v3367 = vrcp.pop %v3267
      %v3368 = vmul.f32 %v3267, %v3367
      %v3369 = vsub.f32 1.0, %v3368
      %v3370 = vmul.f32 %v3367, %v3369
      %v3371 = vadd.f32 %v3367, %v3370
      %vm3372 = vweird.f32 %v3267
      %vm3373 = vweird.f32 %v3367
      %vm3374 = vmor %vm3372, %vm3373
      %v3375 = vsel %vm3374, %v3367, %v3371
      %v3376 = vand.u32 2147483647, %v3267
      %vm3377 = vcmp.eq.f32.partialorder %v3376, 8.507059e+37
      %v3378 = vand.u32 %v3267, 2147483648
      %v3379 = vor.u32 1.1754944e-38, %v3378
      %v3380 = vsel %vm3377, %v3379, %v3375
      %v3381 = vrcp.pop %v3268
      %v3382 = vmul.f32 %v3268, %v3381
      %v3383 = vsub.f32 1.0, %v3382
      %v3384 = vmul.f32 %v3381, %v3383
      %v3385 = vadd.f32 %v3381, %v3384
      %vm3386 = vweird.f32 %v3268
      %vm3387 = vweird.f32 %v3381
      %vm3388 = vmor %vm3386, %vm3387
      %v3389 = vsel %vm3388, %v3381, %v3385
      %v3390 = vand.u32 2147483647, %v3268
      %vm3391 = vcmp.eq.f32.partialorder %v3390, 8.507059e+37
      %v3392 = vand.u32 %v3268, 2147483648
      %v3393 = vor.u32 1.1754944e-38, %v3392
      %v3394 = vsel %vm3391, %v3393, %v3389
      %v3395 = vrcp.pop %v3269
      %v3396 = vmul.f32 %v3269, %v3395
      %v3397 = vsub.f32 1.0, %v3396
      %v3398 = vmul.f32 %v3395, %v3397
      %v3399 = vadd.f32 %v3395, %v3398
      %vm3400 = vweird.f32 %v3269
      %vm3401 = vweird.f32 %v3395
      %vm3402 = vmor %vm3400, %vm3401
      %v3403 = vsel %vm3402, %v3395, %v3399
      %v3404 = vand.u32 2147483647, %v3269
      %vm3405 = vcmp.eq.f32.partialorder %v3404, 8.507059e+37
      %v3406 = vand.u32 %v3269, 2147483648
      %v3407 = vor.u32 1.1754944e-38, %v3406
      %v3408 = vsel %vm3405, %v3407, %v3403
      %v3409 = vrcp.pop %v3270
      %v3410 = vmul.f32 %v3270, %v3409
      %v3411 = vsub.f32 1.0, %v3410
      %v3412 = vmul.f32 %v3409, %v3411
      %v3413 = vadd.f32 %v3409, %v3412
      %vm3414 = vweird.f32 %v3270
      %vm3415 = vweird.f32 %v3409
      %vm3416 = vmor %vm3414, %vm3415
      %v3417 = vsel %vm3416, %v3409, %v3413
      %v3418 = vand.u32 2147483647, %v3270
      %vm3419 = vcmp.eq.f32.partialorder %v3418, 8.507059e+37
      %v3420 = vand.u32 %v3270, 2147483648
      %v3421 = vor.u32 1.1754944e-38, %v3420
      %v3422 = vsel %vm3419, %v3421, %v3417
      %v3423 = vrcp.pop %v3271
      %v3424 = vmul.f32 %v3271, %v3423
      %v3425 = vsub.f32 1.0, %v3424
      %v3426 = vmul.f32 %v3423, %v3425
      %v3427 = vadd.f32 %v3423, %v3426
      %vm3428 = vweird.f32 %v3271
      %vm3429 = vweird.f32 %v3423
      %vm3430 = vmor %vm3428, %vm3429
      %v3431 = vsel %vm3430, %v3423, %v3427
      %v3432 = vand.u32 2147483647, %v3271
      %vm3433 = vcmp.eq.f32.partialorder %v3432, 8.507059e+37
      %v3434 = vand.u32 %v3271, 2147483648
      %v3435 = vor.u32 1.1754944e-38, %v3434
      %v3436 = vsel %vm3433, %v3435, %v3431
      %v3437 = vrcp.pop %v3272
      %v3438 = vmul.f32 %v3272, %v3437
      %v3439 = vsub.f32 1.0, %v3438
      %v3440 = vmul.f32 %v3437, %v3439
      %v3441 = vadd.f32 %v3437, %v3440
      %vm3442 = vweird.f32 %v3272
      %vm3443 = vweird.f32 %v3437
      %vm3444 = vmor %vm3442, %vm3443
      %v3445 = vsel %vm3444, %v3437, %v3441
      %v3446 = vand.u32 2147483647, %v3272
      %vm3447 = vcmp.eq.f32.partialorder %v3446, 8.507059e+37
      %v3448 = vand.u32 %v3272, 2147483648
      %v3449 = vor.u32 1.1754944e-38, %v3448
      %v3450 = vsel %vm3447, %v3449, %v3445
      %v3451 = vrcp.pop %v3273
      %v3452 = vmul.f32 %v3273, %v3451
      %v3453 = vsub.f32 1.0, %v3452
      %v3454 = vmul.f32 %v3451, %v3453
      %v3455 = vadd.f32 %v3451, %v3454
      %vm3456 = vweird.f32 %v3273
      %vm3457 = vweird.f32 %v3451
      %vm3458 = vmor %vm3456, %vm3457
      %v3459 = vsel %vm3458, %v3451, %v3455
      %v3460 = vand.u32 2147483647, %v3273
      %vm3461 = vcmp.eq.f32.partialorder %v3460, 8.507059e+37
      %v3462 = vand.u32 %v3273, 2147483648
      %v3463 = vor.u32 1.1754944e-38, %v3462
      %v3464 = vsel %vm3461, %v3463, %v3459
      %v3465 = vrcp.pop %v3274
      %v3466 = vmul.f32 %v3274, %v3465
      %v3467 = vsub.f32 1.0, %v3466
      %v3468 = vmul.f32 %v3465, %v3467
      %v3469 = vadd.f32 %v3465, %v3468
      %vm3470 = vweird.f32 %v3274
      %vm3471 = vweird.f32 %v3465
      %vm3472 = vmor %vm3470, %vm3471
      %v3473 = vsel %vm3472, %v3465, %v3469
      %v3474 = vand.u32 2147483647, %v3274
      %vm3475 = vcmp.eq.f32.partialorder %v3474, 8.507059e+37
      %v3476 = vand.u32 %v3274, 2147483648
      %v3477 = vor.u32 1.1754944e-38, %v3476
      %v3478 = vsel %vm3475, %v3477, %v3473
      %v3479 = vrcp.pop %v3275
      %v3480 = vmul.f32 %v3275, %v3479
      %v3481 = vsub.f32 1.0, %v3480
      %v3482 = vmul.f32 %v3479, %v3481
      %v3483 = vadd.f32 %v3479, %v3482
      %vm3484 = vweird.f32 %v3275
      %vm3485 = vweird.f32 %v3479
      %vm3486 = vmor %vm3484, %vm3485
      %v3487 = vsel %vm3486, %v3479, %v3483
      %v3488 = vand.u32 2147483647, %v3275
      %vm3489 = vcmp.eq.f32.partialorder %v3488, 8.507059e+37
      %v3490 = vand.u32 %v3275, 2147483648
      %v3491 = vor.u32 1.1754944e-38, %v3490
      %v3492 = vsel %vm3489, %v3491, %v3487
      %v3493 = vrcp.pop %v3276
      %v3494 = vmul.f32 %v3276, %v3493
      %v3495 = vsub.f32 1.0, %v3494
      %v3496 = vmul.f32 %v3493, %v3495
      %v3497 = vadd.f32 %v3493, %v3496
      %vm3498 = vweird.f32 %v3276
      %vm3499 = vweird.f32 %v3493
      %vm3500 = vmor %vm3498, %vm3499
      %v3501 = vsel %vm3500, %v3493, %v3497
      %v3502 = vand.u32 2147483647, %v3276
      %vm3503 = vcmp.eq.f32.partialorder %v3502, 8.507059e+37
      %v3504 = vand.u32 %v3276, 2147483648
      %v3505 = vor.u32 1.1754944e-38, %v3504
      %v3506 = vsel %vm3503, %v3505, %v3501
      %v3507 = vrcp.pop %v3277
      %v3508 = vmul.f32 %v3277, %v3507
      %v3509 = vsub.f32 1.0, %v3508
      %v3510 = vmul.f32 %v3507, %v3509
      %v3511 = vadd.f32 %v3507, %v3510
      %vm3512 = vweird.f32 %v3277
      %vm3513 = vweird.f32 %v3507
      %vm3514 = vmor %vm3512, %vm3513
      %v3515 = vsel %vm3514, %v3507, %v3511
      %v3516 = vand.u32 2147483647, %v3277
      %vm3517 = vcmp.eq.f32.partialorder %v3516, 8.507059e+37
      %v3518 = vand.u32 %v3277, 2147483648
      %v3519 = vor.u32 1.1754944e-38, %v3518
      %v3520 = vsel %vm3517, %v3519, %v3515
      %v3521 = vrcp.pop %v3278
      %v3522 = vmul.f32 %v3278, %v3521
      %v3523 = vsub.f32 1.0, %v3522
      %v3524 = vmul.f32 %v3521, %v3523
      %v3525 = vadd.f32 %v3521, %v3524
      %vm3526 = vweird.f32 %v3278
      %vm3527 = vweird.f32 %v3521
      %vm3528 = vmor %vm3526, %vm3527
      %v3529 = vsel %vm3528, %v3521, %v3525
      %v3530 = vand.u32 2147483647, %v3278
      %vm3531 = vcmp.eq.f32.partialorder %v3530, 8.507059e+37
      %v3532 = vand.u32 %v3278, 2147483648
      %v3533 = vor.u32 1.1754944e-38, %v3532
      %v3534 = vsel %vm3531, %v3533, %v3529
      %v3535 = vrcp.pop %v3279
      %v3536 = vmul.f32 %v3279, %v3535
      %v3537 = vsub.f32 1.0, %v3536
      %v3538 = vmul.f32 %v3535, %v3537
      %v3539 = vadd.f32 %v3535, %v3538
      %vm3540 = vweird.f32 %v3279
      %vm3541 = vweird.f32 %v3535
      %vm3542 = vmor %vm3540, %vm3541
      %v3543 = vsel %vm3542, %v3535, %v3539
      %v3544 = vand.u32 2147483647, %v3279
      %vm3545 = vcmp.eq.f32.partialorder %v3544, 8.507059e+37
      %v3546 = vand.u32 %v3279, 2147483648
      %v3547 = vor.u32 1.1754944e-38, %v3546
      %v3548 = vsel %vm3545, %v3547, %v3543
      %v3549 = vrcp.pop %v3280
      %v3550 = vmul.f32 %v3280, %v3549
      %v3551 = vsub.f32 1.0, %v3550
      %v3552 = vmul.f32 %v3549, %v3551
      %v3553 = vadd.f32 %v3549, %v3552
      %vm3554 = vweird.f32 %v3280
      %vm3555 = vweird.f32 %v3549
      %vm3556 = vmor %vm3554, %vm3555
      %v3557 = vsel %vm3556, %v3549, %v3553
      %v3558 = vand.u32 2147483647, %v3280
      %vm3559 = vcmp.eq.f32.partialorder %v3558, 8.507059e+37
      %v3560 = vand.u32 %v3280, 2147483648
      %v3561 = vor.u32 1.1754944e-38, %v3560
      %v3562 = vsel %vm3559, %v3561, %v3557
      %v3563 = vrcp.pop %v3281
      %v3564 = vmul.f32 %v3281, %v3563
      %v3565 = vsub.f32 1.0, %v3564
      %v3566 = vmul.f32 %v3563, %v3565
      %v3567 = vadd.f32 %v3563, %v3566
      %vm3568 = vweird.f32 %v3281
      %vm3569 = vweird.f32 %v3563
      %vm3570 = vmor %vm3568, %vm3569
      %v3571 = vsel %vm3570, %v3563, %v3567
      %v3572 = vand.u32 2147483647, %v3281
      %vm3573 = vcmp.eq.f32.partialorder %v3572, 8.507059e+37
      %v3574 = vand.u32 %v3281, 2147483648
      %v3575 = vor.u32 1.1754944e-38, %v3574
      %v3576 = vsel %vm3573, %v3575, %v3571
      %v3577 = vrcp.pop %v3282
      %v3578 = vmul.f32 %v3282, %v3577
      %v3579 = vsub.f32 1.0, %v3578
      %v3580 = vmul.f32 %v3577, %v3579
      %v3581 = vadd.f32 %v3577, %v3580
      %vm3582 = vweird.f32 %v3282
      %vm3583 = vweird.f32 %v3577
      %vm3584 = vmor %vm3582, %vm3583
      %v3585 = vsel %vm3584, %v3577, %v3581
      %v3586 = vand.u32 2147483647, %v3282
      %vm3587 = vcmp.eq.f32.partialorder %v3586, 8.507059e+37
      %v3588 = vand.u32 %v3282, 2147483648
      %v3589 = vor.u32 1.1754944e-38, %v3588
      %v3590 = vsel %vm3587, %v3589, %v3585
      %v3591 = vrcp.pop %v3283
      %v3592 = vmul.f32 %v3283, %v3591
      %v3593 = vsub.f32 1.0, %v3592
      %v3594 = vmul.f32 %v3591, %v3593
      %v3595 = vadd.f32 %v3591, %v3594
      %vm3596 = vweird.f32 %v3283
      %vm3597 = vweird.f32 %v3591
      %vm3598 = vmor %vm3596, %vm3597
      %v3599 = vsel %vm3598, %v3591, %v3595
      %v3600 = vand.u32 2147483647, %v3283
      %vm3601 = vcmp.eq.f32.partialorder %v3600, 8.507059e+37
      %v3602 = vand.u32 %v3283, 2147483648
      %v3603 = vor.u32 1.1754944e-38, %v3602
      %v3604 = vsel %vm3601, %v3603, %v3599
      %v3605 = vrcp.pop %v3284
      %v3606 = vmul.f32 %v3284, %v3605
      %v3607 = vsub.f32 1.0, %v3606
      %v3608 = vmul.f32 %v3605, %v3607
      %v3609 = vadd.f32 %v3605, %v3608
      %vm3610 = vweird.f32 %v3284
      %vm3611 = vweird.f32 %v3605
      %vm3612 = vmor %vm3610, %vm3611
      %v3613 = vsel %vm3612, %v3605, %v3609
      %v3614 = vand.u32 2147483647, %v3284
      %vm3615 = vcmp.eq.f32.partialorder %v3614, 8.507059e+37
      %v3616 = vand.u32 %v3284, 2147483648
      %v3617 = vor.u32 1.1754944e-38, %v3616
      %v3618 = vsel %vm3615, %v3617, %v3613
      %v3619 = vrcp.pop %v3285
      %v3620 = vmul.f32 %v3285, %v3619
      %v3621 = vsub.f32 1.0, %v3620
      %v3622 = vmul.f32 %v3619, %v3621
      %v3623 = vadd.f32 %v3619, %v3622
      %vm3624 = vweird.f32 %v3285
      %vm3625 = vweird.f32 %v3619
      %vm3626 = vmor %vm3624, %vm3625
      %v3627 = vsel %vm3626, %v3619, %v3623
      %v3628 = vand.u32 2147483647, %v3285
      %vm3629 = vcmp.eq.f32.partialorder %v3628, 8.507059e+37
      %v3630 = vand.u32 %v3285, 2147483648
      %v3631 = vor.u32 1.1754944e-38, %v3630
      %v3632 = vsel %vm3629, %v3631, %v3627
      %v3633 = vrcp.pop %v3286
      %v3634 = vmul.f32 %v3286, %v3633
      %v3635 = vsub.f32 1.0, %v3634
      %v3636 = vmul.f32 %v3633, %v3635
      %v3637 = vadd.f32 %v3633, %v3636
      %vm3638 = vweird.f32 %v3286
      %vm3639 = vweird.f32 %v3633
      %vm3640 = vmor %vm3638, %vm3639
      %v3641 = vsel %vm3640, %v3633, %v3637
      %v3642 = vand.u32 2147483647, %v3286
      %vm3643 = vcmp.eq.f32.partialorder %v3642, 8.507059e+37
      %v3644 = vand.u32 %v3286, 2147483648
      %v3645 = vor.u32 1.1754944e-38, %v3644
      %v3646 = vsel %vm3643, %v3645, %v3641
      %v3647 = vrcp.pop %v3287
      %v3648 = vmul.f32 %v3287, %v3647
      %v3649 = vsub.f32 1.0, %v3648
      %v3650 = vmul.f32 %v3647, %v3649
      %v3651 = vadd.f32 %v3647, %v3650
      %vm3652 = vweird.f32 %v3287
      %vm3653 = vweird.f32 %v3647
      %vm3654 = vmor %vm3652, %vm3653
      %v3655 = vsel %vm3654, %v3647, %v3651
      %v3656 = vand.u32 2147483647, %v3287
      %vm3657 = vcmp.eq.f32.partialorder %v3656, 8.507059e+37
      %v3658 = vand.u32 %v3287, 2147483648
      %v3659 = vor.u32 1.1754944e-38, %v3658
      %v3660 = vsel %vm3657, %v3659, %v3655
      %v3661 = vrcp.pop %v3288
      %v3662 = vmul.f32 %v3288, %v3661
      %v3663 = vsub.f32 1.0, %v3662
      %v3664 = vmul.f32 %v3661, %v3663
      %v3665 = vadd.f32 %v3661, %v3664
      %vm3666 = vweird.f32 %v3288
      %vm3667 = vweird.f32 %v3661
      %vm3668 = vmor %vm3666, %vm3667
      %v3669 = vsel %vm3668, %v3661, %v3665
      %v3670 = vand.u32 2147483647, %v3288
      %vm3671 = vcmp.eq.f32.partialorder %v3670, 8.507059e+37
      %v3672 = vand.u32 %v3288, 2147483648
      %v3673 = vor.u32 1.1754944e-38, %v3672
      %v3674 = vsel %vm3671, %v3673, %v3669
      %v3675 = vrcp.pop %v3289
      %v3676 = vmul.f32 %v3289, %v3675
      %v3677 = vsub.f32 1.0, %v3676
      %v3678 = vmul.f32 %v3675, %v3677
      %v3679 = vadd.f32 %v3675, %v3678
      %vm3680 = vweird.f32 %v3289
      %vm3681 = vweird.f32 %v3675
      %vm3682 = vmor %vm3680, %vm3681
      %v3683 = vsel %vm3682, %v3675, %v3679
      %v3684 = vand.u32 2147483647, %v3289
      %vm3685 = vcmp.eq.f32.partialorder %v3684, 8.507059e+37
      %v3686 = vand.u32 %v3289, 2147483648
      %v3687 = vor.u32 1.1754944e-38, %v3686
      %v3688 = vsel %vm3685, %v3687, %v3683
      %v3689 = vrcp.pop %v3290
      %v3690 = vmul.f32 %v3290, %v3689
      %v3691 = vsub.f32 1.0, %v3690
      %v3692 = vmul.f32 %v3689, %v3691
      %v3693 = vadd.f32 %v3689, %v3692
      %vm3694 = vweird.f32 %v3290
      %vm3695 = vweird.f32 %v3689
      %vm3696 = vmor %vm3694, %vm3695
      %v3697 = vsel %vm3696, %v3689, %v3693
      %v3698 = vand.u32 2147483647, %v3290
      %vm3699 = vcmp.eq.f32.partialorder %v3698, 8.507059e+37
      %v3700 = vand.u32 %v3290, 2147483648
      %v3701 = vor.u32 1.1754944e-38, %v3700
      %v3702 = vsel %vm3699, %v3701, %v3697
      %v3703 = vrcp.pop %v3291
      %v3704 = vmul.f32 %v3291, %v3703
      %v3705 = vsub.f32 1.0, %v3704
      %v3706 = vmul.f32 %v3703, %v3705
      %v3707 = vadd.f32 %v3703, %v3706
      %vm3708 = vweird.f32 %v3291
      %vm3709 = vweird.f32 %v3703
      %vm3710 = vmor %vm3708, %vm3709
      %v3711 = vsel %vm3710, %v3703, %v3707
      %v3712 = vand.u32 2147483647, %v3291
      %vm3713 = vcmp.eq.f32.partialorder %v3712, 8.507059e+37
      %v3714 = vand.u32 %v3291, 2147483648
      %v3715 = vor.u32 1.1754944e-38, %v3714
      %v3716 = vsel %vm3713, %v3715, %v3711
      %v3717 = vrcp.pop %v3292
      %v3718 = vmul.f32 %v3292, %v3717
      %v3719 = vsub.f32 1.0, %v3718
      %v3720 = vmul.f32 %v3717, %v3719
      %v3721 = vadd.f32 %v3717, %v3720
      %vm3722 = vweird.f32 %v3292
      %vm3723 = vweird.f32 %v3717
      %vm3724 = vmor %vm3722, %vm3723
      %v3725 = vsel %vm3724, %v3717, %v3721
      %v3726 = vand.u32 2147483647, %v3292
      %vm3727 = vcmp.eq.f32.partialorder %v3726, 8.507059e+37
      %v3728 = vand.u32 %v3292, 2147483648
      %v3729 = vor.u32 1.1754944e-38, %v3728
      %v3730 = vsel %vm3727, %v3729, %v3725
      %v3731 = vrcp.pop %v3293
      %v3732 = vmul.f32 %v3293, %v3731
      %v3733 = vsub.f32 1.0, %v3732
      %v3734 = vmul.f32 %v3731, %v3733
      %v3735 = vadd.f32 %v3731, %v3734
      %vm3736 = vweird.f32 %v3293
      %vm3737 = vweird.f32 %v3731
      %vm3738 = vmor %vm3736, %vm3737
      %v3739 = vsel %vm3738, %v3731, %v3735
      %v3740 = vand.u32 2147483647, %v3293
      %vm3741 = vcmp.eq.f32.partialorder %v3740, 8.507059e+37
      %v3742 = vand.u32 %v3293, 2147483648
      %v3743 = vor.u32 1.1754944e-38, %v3742
      %v3744 = vsel %vm3741, %v3743, %v3739
      %v3745 = vrcp.pop %v3294
      %v3746 = vmul.f32 %v3294, %v3745
      %v3747 = vsub.f32 1.0, %v3746
      %v3748 = vmul.f32 %v3745, %v3747
      %v3749 = vadd.f32 %v3745, %v3748
      %vm3750 = vweird.f32 %v3294
      %vm3751 = vweird.f32 %v3745
      %vm3752 = vmor %vm3750, %vm3751
      %v3753 = vsel %vm3752, %v3745, %v3749
      %v3754 = vand.u32 2147483647, %v3294
      %vm3755 = vcmp.eq.f32.partialorder %v3754, 8.507059e+37
      %v3756 = vand.u32 %v3294, 2147483648
      %v3757 = vor.u32 1.1754944e-38, %v3756
      %v3758 = vsel %vm3755, %v3757, %v3753
      %v3759 = vrcp.pop %v3295
      %v3760 = vmul.f32 %v3295, %v3759
      %v3761 = vsub.f32 1.0, %v3760
      %v3762 = vmul.f32 %v3759, %v3761
      %v3763 = vadd.f32 %v3759, %v3762
      %vm3764 = vweird.f32 %v3295
      %vm3765 = vweird.f32 %v3759
      %vm3766 = vmor %vm3764, %vm3765
      %v3767 = vsel %vm3766, %v3759, %v3763
      %v3768 = vand.u32 2147483647, %v3295
      %vm3769 = vcmp.eq.f32.partialorder %v3768, 8.507059e+37
      %v3770 = vand.u32 %v3295, 2147483648
      %v3771 = vor.u32 1.1754944e-38, %v3770
      %v3772 = vsel %vm3769, %v3771, %v3767
      %v3773 = vrcp.pop %v3296
      %v3774 = vmul.f32 %v3296, %v3773
      %v3775 = vsub.f32 1.0, %v3774
      %v3776 = vmul.f32 %v3773, %v3775
      %v3777 = vadd.f32 %v3773, %v3776
      %vm3778 = vweird.f32 %v3296
      %vm3779 = vweird.f32 %v3773
      %vm3780 = vmor %vm3778, %vm3779
      %v3781 = vsel %vm3780, %v3773, %v3777
      %v3782 = vand.u32 2147483647, %v3296
      %vm3783 = vcmp.eq.f32.partialorder %v3782, 8.507059e+37
      %v3784 = vand.u32 %v3296, 2147483648
      %v3785 = vor.u32 1.1754944e-38, %v3784
      %v3786 = vsel %vm3783, %v3785, %v3781
      %v3787 = vrcp.pop %v3297
      %v3788 = vmul.f32 %v3297, %v3787
      %v3789 = vsub.f32 1.0, %v3788
      %v3790 = vmul.f32 %v3787, %v3789
      %v3791 = vadd.f32 %v3787, %v3790
      %vm3792 = vweird.f32 %v3297
      %vm3793 = vweird.f32 %v3787
      %vm3794 = vmor %vm3792, %vm3793
      %v3795 = vsel %vm3794, %v3787, %v3791
      %v3796 = vand.u32 2147483647, %v3297
      %vm3797 = vcmp.eq.f32.partialorder %v3796, 8.507059e+37
      %v3798 = vand.u32 %v3297, 2147483648
      %v3799 = vor.u32 1.1754944e-38, %v3798
      %v3800 = vsel %vm3797, %v3799, %v3795
      %v3801 = vrcp.pop %v3298
      %v3802 = vmul.f32 %v3298, %v3801
      %v3803 = vsub.f32 1.0, %v3802
      %v3804 = vmul.f32 %v3801, %v3803
      %v3805 = vadd.f32 %v3801, %v3804
      %vm3806 = vweird.f32 %v3298
      %vm3807 = vweird.f32 %v3801
      %vm3808 = vmor %vm3806, %vm3807
      %v3809 = vsel %vm3808, %v3801, %v3805
      %v3810 = vand.u32 2147483647, %v3298
      %vm3811 = vcmp.eq.f32.partialorder %v3810, 8.507059e+37
      %v3812 = vand.u32 %v3298, 2147483648
      %v3813 = vor.u32 1.1754944e-38, %v3812
      %v3814 = vsel %vm3811, %v3813, %v3809
      %v3815 = vrcp.pop %v3299
      %v3816 = vmul.f32 %v3299, %v3815
      %v3817 = vsub.f32 1.0, %v3816
      %v3818 = vmul.f32 %v3815, %v3817
      %v3819 = vadd.f32 %v3815, %v3818
      %vm3820 = vweird.f32 %v3299
      %vm3821 = vweird.f32 %v3815
      %vm3822 = vmor %vm3820, %vm3821
      %v3823 = vsel %vm3822, %v3815, %v3819
      %v3824 = vand.u32 2147483647, %v3299
      %vm3825 = vcmp.eq.f32.partialorder %v3824, 8.507059e+37
      %v3826 = vand.u32 %v3299, 2147483648
      %v3827 = vor.u32 1.1754944e-38, %v3826
      %v3828 = vsel %vm3825, %v3827, %v3823
      %v3829 = vrcp.pop %v3300
      %v3830 = vmul.f32 %v3300, %v3829
      %v3831 = vsub.f32 1.0, %v3830
      %v3832 = vmul.f32 %v3829, %v3831
      %v3833 = vadd.f32 %v3829, %v3832
      %vm3834 = vweird.f32 %v3300
      %vm3835 = vweird.f32 %v3829
      %vm3836 = vmor %vm3834, %vm3835
      %v3837 = vsel %vm3836, %v3829, %v3833
      %v3838 = vand.u32 2147483647, %v3300
      %vm3839 = vcmp.eq.f32.partialorder %v3838, 8.507059e+37
      %v3840 = vand.u32 %v3300, 2147483648
      %v3841 = vor.u32 1.1754944e-38, %v3840
      %v3842 = vsel %vm3839, %v3841, %v3837
      %v3843 = vrcp.pop %v3301
      %v3844 = vmul.f32 %v3301, %v3843
      %v3845 = vsub.f32 1.0, %v3844
      %v3846 = vmul.f32 %v3843, %v3845
      %v3847 = vadd.f32 %v3843, %v3846
      %vm3848 = vweird.f32 %v3301
      %vm3849 = vweird.f32 %v3843
      %vm3850 = vmor %vm3848, %vm3849
      %v3851 = vsel %vm3850, %v3843, %v3847
      %v3852 = vand.u32 2147483647, %v3301
      %vm3853 = vcmp.eq.f32.partialorder %v3852, 8.507059e+37
      %v3854 = vand.u32 %v3301, 2147483648
      %v3855 = vor.u32 1.1754944e-38, %v3854
      %v3856 = vsel %vm3853, %v3855, %v3851
      %v3857 = vrcp.pop %v3302
      %v3858 = vmul.f32 %v3302, %v3857
      %v3859 = vsub.f32 1.0, %v3858
      %v3860 = vmul.f32 %v3857, %v3859
      %v3861 = vadd.f32 %v3857, %v3860
      %vm3862 = vweird.f32 %v3302
      %vm3863 = vweird.f32 %v3857
      %vm3864 = vmor %vm3862, %vm3863
      %v3865 = vsel %vm3864, %v3857, %v3861
      %v3866 = vand.u32 2147483647, %v3302
      %vm3867 = vcmp.eq.f32.partialorder %v3866, 8.507059e+37
      %v3868 = vand.u32 %v3302, 2147483648
      %v3869 = vor.u32 1.1754944e-38, %v3868
      %v3870 = vsel %vm3867, %v3869, %v3865
      %v3871 = vrcp.pop %v3303
      %v3872 = vmul.f32 %v3303, %v3871
      %v3873 = vsub.f32 1.0, %v3872
      %v3874 = vmul.f32 %v3871, %v3873
      %v3875 = vadd.f32 %v3871, %v3874
      %vm3876 = vweird.f32 %v3303
      %vm3877 = vweird.f32 %v3871
      %vm3878 = vmor %vm3876, %vm3877
      %v3879 = vsel %vm3878, %v3871, %v3875
      %v3880 = vand.u32 2147483647, %v3303
      %vm3881 = vcmp.eq.f32.partialorder %v3880, 8.507059e+37
      %v3882 = vand.u32 %v3303, 2147483648
      %v3883 = vor.u32 1.1754944e-38, %v3882
      %v3884 = vsel %vm3881, %v3883, %v3879
      %v3885 = vrcp.pop %v3304
      %v3886 = vmul.f32 %v3304, %v3885
      %v3887 = vsub.f32 1.0, %v3886
      %v3888 = vmul.f32 %v3885, %v3887
      %v3889 = vadd.f32 %v3885, %v3888
      %vm3890 = vweird.f32 %v3304
      %vm3891 = vweird.f32 %v3885
      %vm3892 = vmor %vm3890, %vm3891
      %v3893 = vsel %vm3892, %v3885, %v3889
      %v3894 = vand.u32 2147483647, %v3304
      %vm3895 = vcmp.eq.f32.partialorder %v3894, 8.507059e+37
      %v3896 = vand.u32 %v3304, 2147483648
      %v3897 = vor.u32 1.1754944e-38, %v3896
      %v3898 = vsel %vm3895, %v3897, %v3893
      %v3899 = vrcp.pop %v3305
      %v3900 = vmul.f32 %v3305, %v3899
      %v3901 = vsub.f32 1.0, %v3900
      %v3902 = vmul.f32 %v3899, %v3901
      %v3903 = vadd.f32 %v3899, %v3902
      %vm3904 = vweird.f32 %v3305
      %vm3905 = vweird.f32 %v3899
      %vm3906 = vmor %vm3904, %vm3905
      %v3907 = vsel %vm3906, %v3899, %v3903
      %v3908 = vand.u32 2147483647, %v3305
      %vm3909 = vcmp.eq.f32.partialorder %v3908, 8.507059e+37
      %v3910 = vand.u32 %v3305, 2147483648
      %v3911 = vor.u32 1.1754944e-38, %v3910
      %v3912 = vsel %vm3909, %v3911, %v3907
      %v3913 = vrcp.pop %v3306
      %v3914 = vmul.f32 %v3306, %v3913
      %v3915 = vsub.f32 1.0, %v3914
      %v3916 = vmul.f32 %v3913, %v3915
      %v3917 = vadd.f32 %v3913, %v3916
      %vm3918 = vweird.f32 %v3306
      %vm3919 = vweird.f32 %v3913
      %vm3920 = vmor %vm3918, %vm3919
      %v3921 = vsel %vm3920, %v3913, %v3917
      %v3922 = vand.u32 2147483647, %v3306
      %vm3923 = vcmp.eq.f32.partialorder %v3922, 8.507059e+37
      %v3924 = vand.u32 %v3306, 2147483648
      %v3925 = vor.u32 1.1754944e-38, %v3924
      %v3926 = vsel %vm3923, %v3925, %v3921
      %v3927 = vrcp.pop %v3307
      %v3928 = vmul.f32 %v3307, %v3927
      %v3929 = vsub.f32 1.0, %v3928
      %v3930 = vmul.f32 %v3927, %v3929
      %v3931 = vadd.f32 %v3927, %v3930
      %vm3932 = vweird.f32 %v3307
      %vm3933 = vweird.f32 %v3927
      %vm3934 = vmor %vm3932, %vm3933
      %v3935 = vsel %vm3934, %v3927, %v3931
      %v3936 = vand.u32 2147483647, %v3307
      %vm3937 = vcmp.eq.f32.partialorder %v3936, 8.507059e+37
      %v3938 = vand.u32 %v3307, 2147483648
      %v3939 = vor.u32 1.1754944e-38, %v3938
      %v3940 = vsel %vm3937, %v3939, %v3935
      %v3941 = vrcp.pop %v3308
      %v3942 = vmul.f32 %v3308, %v3941
      %v3943 = vsub.f32 1.0, %v3942
      %v3944 = vmul.f32 %v3941, %v3943
      %v3945 = vadd.f32 %v3941, %v3944
      %vm3946 = vweird.f32 %v3308
      %vm3947 = vweird.f32 %v3941
      %vm3948 = vmor %vm3946, %vm3947
      %v3949 = vsel %vm3948, %v3941, %v3945
      %v3950 = vand.u32 2147483647, %v3308
      %vm3951 = vcmp.eq.f32.partialorder %v3950, 8.507059e+37
      %v3952 = vand.u32 %v3308, 2147483648
      %v3953 = vor.u32 1.1754944e-38, %v3952
      %v3954 = vsel %vm3951, %v3953, %v3949
      %v3955 = vrcp.pop %v3309
      %v3956 = vmul.f32 %v3309, %v3955
      %v3957 = vsub.f32 1.0, %v3956
      %v3958 = vmul.f32 %v3955, %v3957
      %v3959 = vadd.f32 %v3955, %v3958
      %vm3960 = vweird.f32 %v3309
      %vm3961 = vweird.f32 %v3955
      %vm3962 = vmor %vm3960, %vm3961
      %v3963 = vsel %vm3962, %v3955, %v3959
      %v3964 = vand.u32 2147483647, %v3309
      %vm3965 = vcmp.eq.f32.partialorder %v3964, 8.507059e+37
      %v3966 = vand.u32 %v3309, 2147483648
      %v3967 = vor.u32 1.1754944e-38, %v3966
      %v3968 = vsel %vm3965, %v3967, %v3963
      %v3969 = vrcp.pop %v3310
      %v3970 = vmul.f32 %v3310, %v3969
      %v3971 = vsub.f32 1.0, %v3970
      %v3972 = vmul.f32 %v3969, %v3971
      %v3973 = vadd.f32 %v3969, %v3972
      %vm3974 = vweird.f32 %v3310
      %vm3975 = vweird.f32 %v3969
      %vm3976 = vmor %vm3974, %vm3975
      %v3977 = vsel %vm3976, %v3969, %v3973
      %v3978 = vand.u32 2147483647, %v3310
      %vm3979 = vcmp.eq.f32.partialorder %v3978, 8.507059e+37
      %v3980 = vand.u32 %v3310, 2147483648
      %v3981 = vor.u32 1.1754944e-38, %v3980
      %v3982 = vsel %vm3979, %v3981, %v3977
      %v3983 = vmul.f32 %v2756, %v3324
      %v3984 = vmul.f32 %v2759, %v3338
      %v3985 = vmul.f32 %v2762, %v3352
      %v3986 = vmul.f32 %v2765, %v3366
      %v3987 = vmul.f32 %v2785, %v3380
      %v3988 = vmul.f32 %v2788, %v3394
      %v3989 = vmul.f32 %v2791, %v3408
      %v3990 = vmul.f32 %v2794, %v3422
      %v3991 = vmul.f32 %v2814, %v3436
      %v3992 = vmul.f32 %v2817, %v3450
      %v3993 = vmul.f32 %v2820, %v3464
      %v3994 = vmul.f32 %v2823, %v3478
      %v3995 = vmul.f32 %v2843, %v3492
      %v3996 = vmul.f32 %v2846, %v3506
      %v3997 = vmul.f32 %v2849, %v3520
      %v3998 = vmul.f32 %v2852, %v3534
      %v3999 = vmul.f32 %v2872, %v3548
      %v4000 = vmul.f32 %v2875, %v3562
      %v4001 = vmul.f32 %v2878, %v3576
      %v4002 = vmul.f32 %v2881, %v3590
      %v4003 = vmul.f32 %v2901, %v3604
      %v4004 = vmul.f32 %v2904, %v3618
      %v4005 = vmul.f32 %v2907, %v3632
      %v4006 = vmul.f32 %v2910, %v3646
      %v4007 = vmul.f32 %v2930, %v3660
      %v4008 = vmul.f32 %v2933, %v3674
      %v4009 = vmul.f32 %v2936, %v3688
      %v4010 = vmul.f32 %v2939, %v3702
      %v4011 = vmul.f32 %v2959, %v3716
      %v4012 = vmul.f32 %v2962, %v3730
      %v4013 = vmul.f32 %v2965, %v3744
      %v4014 = vmul.f32 %v2968, %v3758
      %v4015 = vmul.f32 %v2988, %v3772
      %v4016 = vmul.f32 %v2991, %v3786
      %v4017 = vmul.f32 %v2994, %v3800
      %v4018 = vmul.f32 %v2997, %v3814
      %v4019 = vmul.f32 %v3017, %v3828
      %v4020 = vmul.f32 %v3020, %v3842
      %v4021 = vmul.f32 %v3023, %v3856
      %v4022 = vmul.f32 %v3026, %v3870
      %v4023 = vmul.f32 %v3046, %v3884
      %v4024 = vmul.f32 %v3049, %v3898
      %v4025 = vmul.f32 %v3052, %v3912
      %v4026 = vmul.f32 %v3055, %v3926
      %v4027 = vmul.f32 %v3075, %v3940
      %v4028 = vmul.f32 %v3078, %v3954
      %v4029 = vmul.f32 %v3081, %v3968
      %v4030 = vmul.f32 %v3084, %v3982
      %v4031 = vld [vmem:[%s4] sm:$0xff]
      %v4032 = vld [vmem:[%s4 + $0x8] sm:$0xff]
      %v4033 = vld [vmem:[%s4 + $0x10] sm:$0xff]
      %v4034 = vld [vmem:[%s4 + $0x18] sm:$0xff]
      %v4035 = vld [vmem:[%s5] sm:$0x1]
      %v4037 = vperm.slane %v4035, 0
      %v4040 = vsel %vm393, %v3983, 0
      %v4043 = vsel %vm393, %v3984, 0
      %v4046 = vsel %vm393, %v3985, 0
      %v4049 = vsel %vm393, %v3986, 0
      %v4052 = vsel %vm393, %v3987, 0
      %v4055 = vsel %vm393, %v3988, 0
      %v4058 = vsel %vm393, %v3989, 0
      %v4061 = vsel %vm393, %v3990, 0
      %v4064 = vsel %vm393, %v3991, 0
      %v4067 = vsel %vm393, %v3992, 0
      %v4070 = vsel %vm393, %v3993, 0
      %v4073 = vsel %vm393, %v3994, 0
      %v4076 = vsel %vm393, %v3995, 0
      %v4079 = vsel %vm393, %v3996, 0
      %v4082 = vsel %vm393, %v3997, 0
      %v4085 = vsel %vm393, %v3998, 0
      %v4088 = vsel %vm393, %v3999, 0
      %v4091 = vsel %vm393, %v4000, 0
      %v4094 = vsel %vm393, %v4001, 0
      %v4097 = vsel %vm393, %v4002, 0
      %v4100 = vsel %vm393, %v4003, 0
      %v4103 = vsel %vm393, %v4004, 0
      %v4106 = vsel %vm393, %v4005, 0
      %v4109 = vsel %vm393, %v4006, 0
      %v4112 = vsel %vm393, %v4007, 0
      %v4115 = vsel %vm393, %v4008, 0
      %v4118 = vsel %vm393, %v4009, 0
      %v4121 = vsel %vm393, %v4010, 0
      %v4124 = vsel %vm393, %v4011, 0
      %v4127 = vsel %vm393, %v4012, 0
      %v4130 = vsel %vm393, %v4013, 0
      %v4133 = vsel %vm393, %v4014, 0
      %v4136 = vsel %vm393, %v4015, 0
      %v4139 = vsel %vm393, %v4016, 0
      %v4142 = vsel %vm393, %v4017, 0
      %v4145 = vsel %vm393, %v4018, 0
      %v4148 = vsel %vm393, %v4019, 0
      %v4151 = vsel %vm393, %v4020, 0
      %v4154 = vsel %vm393, %v4021, 0
      %v4157 = vsel %vm393, %v4022, 0
      %v4160 = vsel %vm393, %v4023, 0
      %v4163 = vsel %vm393, %v4024, 0
      %v4166 = vsel %vm393, %v4025, 0
      %v4169 = vsel %vm393, %v4026, 0
      %v4172 = vsel %vm393, %v4027, 0
      %v4175 = vsel %vm393, %v4028, 0
      %v4178 = vsel %vm393, %v4029, 0
      %v4181 = vsel %vm393, %v4030, 0
      %4183 = vmatpush.msra.mxu0 0.0
      %4184 = vmatpush.msra.mxu0 0.0
      %4185 = vmatpush.msra.mxu0 0.0
      %4186 = vmatpush.msra.mxu0 0.0
      %4187 = vmatpush.msra.mxu0 0.0
      %4188 = vmatpush.msra.mxu0 0.0
      %4189 = vmatpush.msra.mxu0 0.0
      %4190 = vmatpush.msra.mxu0 0.0
      %4191 = vmatpush.msra.mxu0 0.0
      %4192 = vmatpush.msra.mxu0 0.0
      %4193 = vmatpush.msra.mxu0 0.0
      %4194 = vmatpush.msra.mxu0 0.0
      %4195 = vmatpush.msra.mxu0 %v4034
      %4196 = vmatpush.msra.mxu0 %v4033
      %4197 = vmatpush.msra.mxu0 %v4032
      %4198 = vmatpush.msra.mxu0 %v4031
      %4199 = vmatmul.f32.gmra.mxu0 %v4040
      %v4200 = vpop.f32.mrf.mxu0
      %v4201 = vadd.f32 %v4037, %v4200
      %4202 = vmatmul.f32.gmra.mxu0 %v4043
      %v4203 = vpop.f32.mrf.mxu0
      %v4204 = vadd.f32 %v4037, %v4203
      %4205 = vmatmul.f32.gmra.mxu0 %v4046
      %v4206 = vpop.f32.mrf.mxu0
      %v4207 = vadd.f32 %v4037, %v4206
      %4208 = vmatmul.f32.gmra.mxu0 %v4049
      %v4209 = vpop.f32.mrf.mxu0
      %v4210 = vadd.f32 %v4037, %v4209
      %4211 = vmatmul.f32.gmra.mxu0 %v4052
      %v4212 = vpop.f32.mrf.mxu0
      %v4213 = vadd.f32 %v4037, %v4212
      %4214 = vmatmul.f32.gmra.mxu0 %v4055
      %v4215 = vpop.f32.mrf.mxu0
      %v4216 = vadd.f32 %v4037, %v4215
      %4217 = vmatmul.f32.gmra.mxu0 %v4058
      %v4218 = vpop.f32.mrf.mxu0
      %v4219 = vadd.f32 %v4037, %v4218
      %4220 = vmatmul.f32.gmra.mxu0 %v4061
      %v4221 = vpop.f32.mrf.mxu0
      %v4222 = vadd.f32 %v4037, %v4221
      %4223 = vmatmul.f32.gmra.mxu0 %v4064
      %v4224 = vpop.f32.mrf.mxu0
      %v4225 = vadd.f32 %v4037, %v4224
      %4226 = vmatmul.f32.gmra.mxu0 %v4067
      %v4227 = vpop.f32.mrf.mxu0
      %v4228 = vadd.f32 %v4037, %v4227
      %4229 = vmatmul.f32.gmra.mxu0 %v4070
      %v4230 = vpop.f32.mrf.mxu0
      %v4231 = vadd.f32 %v4037, %v4230
      %4232 = vmatmul.f32.gmra.mxu0 %v4073
      %v4233 = vpop.f32.mrf.mxu0
      %v4234 = vadd.f32 %v4037, %v4233
      %4235 = vmatmul.f32.gmra.mxu0 %v4076
      %v4236 = vpop.f32.mrf.mxu0
      %v4237 = vadd.f32 %v4037, %v4236
      %4238 = vmatmul.f32.gmra.mxu0 %v4079
      %v4239 = vpop.f32.mrf.mxu0
      %v4240 = vadd.f32 %v4037, %v4239
      %4241 = vmatmul.f32.gmra.mxu0 %v4082
      %v4242 = vpop.f32.mrf.mxu0
      %v4243 = vadd.f32 %v4037, %v4242
      %4244 = vmatmul.f32.gmra.mxu0 %v4085
      %v4245 = vpop.f32.mrf.mxu0
      %v4246 = vadd.f32 %v4037, %v4245
      %4247 = vmatmul.f32.gmra.mxu0 %v4088
      %v4248 = vpop.f32.mrf.mxu0
      %v4249 = vadd.f32 %v4037, %v4248
      %4250 = vmatmul.f32.gmra.mxu0 %v4091
      %v4251 = vpop.f32.mrf.mxu0
      %v4252 = vadd.f32 %v4037, %v4251
      %4253 = vmatmul.f32.gmra.mxu0 %v4094
      %v4254 = vpop.f32.mrf.mxu0
      %v4255 = vadd.f32 %v4037, %v4254
      %4256 = vmatmul.f32.gmra.mxu0 %v4097
      %v4257 = vpop.f32.mrf.mxu0
      %v4258 = vadd.f32 %v4037, %v4257
      %4259 = vmatmul.f32.gmra.mxu0 %v4100
      %v4260 = vpop.f32.mrf.mxu0
      %v4261 = vadd.f32 %v4037, %v4260
      %4262 = vmatmul.f32.gmra.mxu0 %v4103
      %v4263 = vpop.f32.mrf.mxu0
      %v4264 = vadd.f32 %v4037, %v4263
      %4265 = vmatmul.f32.gmra.mxu0 %v4106
      %v4266 = vpop.f32.mrf.mxu0
      %v4267 = vadd.f32 %v4037, %v4266
      %4268 = vmatmul.f32.gmra.mxu0 %v4109
      %v4269 = vpop.f32.mrf.mxu0
      %v4270 = vadd.f32 %v4037, %v4269
      %4271 = vmatmul.f32.gmra.mxu0 %v4112
      %v4272 = vpop.f32.mrf.mxu0
      %v4273 = vadd.f32 %v4037, %v4272
      %4274 = vmatmul.f32.gmra.mxu0 %v4115
      %v4275 = vpop.f32.mrf.mxu0
      %v4276 = vadd.f32 %v4037, %v4275
      %4277 = vmatmul.f32.gmra.mxu0 %v4118
      %v4278 = vpop.f32.mrf.mxu0
      %v4279 = vadd.f32 %v4037, %v4278
      %4280 = vmatmul.f32.gmra.mxu0 %v4121
      %v4281 = vpop.f32.mrf.mxu0
      %v4282 = vadd.f32 %v4037, %v4281
      %4283 = vmatmul.f32.gmra.mxu0 %v4124
      %v4284 = vpop.f32.mrf.mxu0
      %v4285 = vadd.f32 %v4037, %v4284
      %4286 = vmatmul.f32.gmra.mxu0 %v4127
      %v4287 = vpop.f32.mrf.mxu0
      %v4288 = vadd.f32 %v4037, %v4287
      %4289 = vmatmul.f32.gmra.mxu0 %v4130
      %v4290 = vpop.f32.mrf.mxu0
      %v4291 = vadd.f32 %v4037, %v4290
      %4292 = vmatmul.f32.gmra.mxu0 %v4133
      %v4293 = vpop.f32.mrf.mxu0
      %v4294 = vadd.f32 %v4037, %v4293
      %4295 = vmatmul.f32.gmra.mxu0 %v4136
      %v4296 = vpop.f32.mrf.mxu0
      %v4297 = vadd.f32 %v4037, %v4296
      %4298 = vmatmul.f32.gmra.mxu0 %v4139
      %v4299 = vpop.f32.mrf.mxu0
      %v4300 = vadd.f32 %v4037, %v4299
      %4301 = vmatmul.f32.gmra.mxu0 %v4142
      %v4302 = vpop.f32.mrf.mxu0
      %v4303 = vadd.f32 %v4037, %v4302
      %4304 = vmatmul.f32.gmra.mxu0 %v4145
      %v4305 = vpop.f32.mrf.mxu0
      %v4306 = vadd.f32 %v4037, %v4305
      %4307 = vmatmul.f32.gmra.mxu0 %v4148
      %v4308 = vpop.f32.mrf.mxu0
      %v4309 = vadd.f32 %v4037, %v4308
      %4310 = vmatmul.f32.gmra.mxu0 %v4151
      %v4311 = vpop.f32.mrf.mxu0
      %v4312 = vadd.f32 %v4037, %v4311
      %4313 = vmatmul.f32.gmra.mxu0 %v4154
      %v4314 = vpop.f32.mrf.mxu0
      %v4315 = vadd.f32 %v4037, %v4314
      %4316 = vmatmul.f32.gmra.mxu0 %v4157
      %v4317 = vpop.f32.mrf.mxu0
      %v4318 = vadd.f32 %v4037, %v4317
      %4319 = vmatmul.f32.gmra.mxu0 %v4160
      %v4320 = vpop.f32.mrf.mxu0
      %v4321 = vadd.f32 %v4037, %v4320
      %4322 = vmatmul.f32.gmra.mxu0 %v4163
      %v4323 = vpop.f32.mrf.mxu0
      %v4324 = vadd.f32 %v4037, %v4323
      %4325 = vmatmul.f32.gmra.mxu0 %v4166
      %v4326 = vpop.f32.mrf.mxu0
      %v4327 = vadd.f32 %v4037, %v4326
      %4328 = vmatmul.f32.gmra.mxu0 %v4169
      %v4329 = vpop.f32.mrf.mxu0
      %v4330 = vadd.f32 %v4037, %v4329
      %4331 = vmatmul.f32.gmra.mxu0 %v4172
      %v4332 = vpop.f32.mrf.mxu0
      %v4333 = vadd.f32 %v4037, %v4332
      %4334 = vmatmul.f32.gmra.mxu0 %v4175
      %v4335 = vpop.f32.mrf.mxu0
      %v4336 = vadd.f32 %v4037, %v4335
      %4337 = vmatmul.f32.gmra.mxu0 %v4178
      %v4338 = vpop.f32.mrf.mxu0
      %v4339 = vadd.f32 %v4037, %v4338
      %4340 = vmatmul.f32.gmra.mxu0 %v4181
      %v4341 = vpop.f32.mrf.mxu0
      %v4342 = vadd.f32 %v4037, %v4341
      %4343 = vdwg.mxu0
      %4344 = vst.msk [vmem:[%s339] sm:$0xff] %vm393, %v4201
      %4345 = vst.msk [vmem:[%s339 + $0x8] sm:$0xff] %vm393, %v4204
      %4346 = vst.msk [vmem:[%s339 + $0x10] sm:$0xff] %vm393, %v4207
      %4347 = vst.msk [vmem:[%s339 + $0x18] sm:$0xff] %vm393, %v4210
      %4348 = vst.msk [vmem:[%s339 + $0x20] sm:$0xff] %vm393, %v4213
      %4349 = vst.msk [vmem:[%s339 + $0x28] sm:$0xff] %vm393, %v4216
      %4350 = vst.msk [vmem:[%s339 + $0x30] sm:$0xff] %vm393, %v4219
      %4351 = vst.msk [vmem:[%s339 + $0x38] sm:$0xff] %vm393, %v4222
      %4352 = vst.msk [vmem:[%s339 + $0x40] sm:$0xff] %vm393, %v4225
      %4353 = vst.msk [vmem:[%s339 + $0x48] sm:$0xff] %vm393, %v4228
      %4354 = vst.msk [vmem:[%s339 + $0x50] sm:$0xff] %vm393, %v4231
      %4355 = vst.msk [vmem:[%s339 + $0x58] sm:$0xff] %vm393, %v4234
      %4356 = vst.msk [vmem:[%s339 + $0x60] sm:$0xff] %vm393, %v4237
      %4357 = vst.msk [vmem:[%s339 + $0x68] sm:$0xff] %vm393, %v4240
      %4358 = vst.msk [vmem:[%s339 + $0x70] sm:$0xff] %vm393, %v4243
      %4359 = vst.msk [vmem:[%s339 + $0x78] sm:$0xff] %vm393, %v4246
      %4360 = vst.msk [vmem:[%s339 + $0x80] sm:$0xff] %vm393, %v4249
      %4361 = vst.msk [vmem:[%s339 + $0x88] sm:$0xff] %vm393, %v4252
      %4362 = vst.msk [vmem:[%s339 + $0x90] sm:$0xff] %vm393, %v4255
      %4363 = vst.msk [vmem:[%s339 + $0x98] sm:$0xff] %vm393, %v4258
      %4364 = vst.msk [vmem:[%s339 + $0xa0] sm:$0xff] %vm393, %v4261
      %4365 = vst.msk [vmem:[%s339 + $0xa8] sm:$0xff] %vm393, %v4264
      %4366 = vst.msk [vmem:[%s339 + $0xb0] sm:$0xff] %vm393, %v4267
      %4367 = vst.msk [vmem:[%s339 + $0xb8] sm:$0xff] %vm393, %v4270
      %4368 = vst.msk [vmem:[%s339 + $0xc0] sm:$0xff] %vm393, %v4273
      %4369 = vst.msk [vmem:[%s339 + $0xc8] sm:$0xff] %vm393, %v4276
      %4370 = vst.msk [vmem:[%s339 + $0xd0] sm:$0xff] %vm393, %v4279
      %4371 = vst.msk [vmem:[%s339 + $0xd8] sm:$0xff] %vm393, %v4282
      %4372 = vst.msk [vmem:[%s339 + $0xe0] sm:$0xff] %vm393, %v4285
      %4373 = vst.msk [vmem:[%s339 + $0xe8] sm:$0xff] %vm393, %v4288
      %4374 = vst.msk [vmem:[%s339 + $0xf0] sm:$0xff] %vm393, %v4291
      %4375 = vst.msk [vmem:[%s339 + $0xf8] sm:$0xff] %vm393, %v4294
      %4376 = vst.msk [vmem:[%s339 + $0x100] sm:$0xff] %vm393, %v4297
      %4377 = vst.msk [vmem:[%s339 + $0x108] sm:$0xff] %vm393, %v4300
      %4378 = vst.msk [vmem:[%s339 + $0x110] sm:$0xff] %vm393, %v4303
      %4379 = vst.msk [vmem:[%s339 + $0x118] sm:$0xff] %vm393, %v4306
      %4380 = vst.msk [vmem:[%s339 + $0x120] sm:$0xff] %vm393, %v4309
      %4381 = vst.msk [vmem:[%s339 + $0x128] sm:$0xff] %vm393, %v4312
      %4382 = vst.msk [vmem:[%s339 + $0x130] sm:$0xff] %vm393, %v4315
      %4383 = vst.msk [vmem:[%s339 + $0x138] sm:$0xff] %vm393, %v4318
      %4384 = vst.msk [vmem:[%s339 + $0x140] sm:$0xff] %vm393, %v4321
      %4385 = vst.msk [vmem:[%s339 + $0x148] sm:$0xff] %vm393, %v4324
      %4386 = vst.msk [vmem:[%s339 + $0x150] sm:$0xff] %vm393, %v4327
      %4387 = vst.msk [vmem:[%s339 + $0x158] sm:$0xff] %vm393, %v4330
      %4388 = vst.msk [vmem:[%s339 + $0x160] sm:$0xff] %vm393, %v4333
      %4389 = vst.msk [vmem:[%s339 + $0x168] sm:$0xff] %vm393, %v4336
      %4390 = vst.msk [vmem:[%s339 + $0x170] sm:$0xff] %vm393, %v4339
      %4391 = vst.msk [vmem:[%s339 + $0x178] sm:$0xff] %vm393, %v4342
      %s4392 = smul.u32 12, %s20
      %p4393 = scmp.lt.s32.totalorder %s4392, 47
      %s4394 = scalar_select %p4393, %s4392, 47
      %s4395 = smul.addr %s4394, 4
      %s4396 = smul.addr %s4395, 8
      %s4397 = scalar_lea.vmem %s9, %s4396
      // Predicated region
      $region57: #{tpu_custom_call.1} parent=55 // pred_check
        %p4398 = pneg %p232
      $region58: #{tpu_custom_call.1} parent=55 // pred_check_branch
        %4400 = sbr.rel (%p4398) target = $region60
      $region59: #{tpu_custom_call.1} parent=55 // pred_region
        %s4401 = smul.u32 12, %s20
      $region60: #{tpu_custom_call.1} parent=55 // pred_fallthru
        _
    $region56: #{tpu_custom_call.1} parent=5 // pred_fallthru
      _
    %p4402 = scmp.le.s32.totalorder 2, %s15
    // Predicated region
    $region61: #{tpu_custom_call.1} parent=5 // pred_check
      %p4403 = pneg %p4402
    $region62: #{tpu_custom_call.1} parent=5 // pred_check_branch
      %4405 = sbr.rel (%p4403) target = $region64
    $region63: #{tpu_custom_call.1} parent=5 // pred_region
      %s4406 = ssub.s32 %s15, 2
      // Predicated region
      $region65: #{tpu_custom_call.1} parent=63 // pred_check
        %p4407 = pneg %p238
      $region66: #{tpu_custom_call.1} parent=63 // pred_check_branch
        %4409 = sbr.rel (%p4407) target = $region68
      $region67: #{tpu_custom_call.1} parent=63 // pred_region
        %s4410 = smul.u32 12, %s21
        %p4411 = scmp.lt.s32.totalorder %s4410, 47
        %s4412 = scalar_select %p4411, %s4410, 47
        %s4413 = smul.addr %s4412, 4
        %s4414 = smul.addr %s4413, 8
        %s4415 = scalar_lea.vmem %s9, %s4414
      $region68: #{tpu_custom_call.1} parent=63 // pred_fallthru
        _
    $region64: #{tpu_custom_call.1} parent=5 // pred_fallthru
      _
  $region6: #{tpu_custom_call.1} parent=0 // loop_footer
    %s19 = sadd.s32 1, %s15
  $region7: #{tpu_custom_call.1} parent=0 // loop_footer_branch
    %14 = sbr.rel target = $region3
  $region8: #{tpu_custom_call.1} parent=0 // loop_exit
    _

</llo_original>
